<compile_context>
chip_gen: v7x
topology: tpu7x:2x2x1
jax: 0.10.0
libtpu: 0.0.40
codegen_flags: <defaults>
</compile_context>

<pallas_src>
import jax
import jax.numpy as jnp
from jax import lax
from jax.experimental import pallas as pl
from jax.experimental.pallas import tpu as pltpu


# ----------------------------------------------------------------------------
# Small helpers
# ----------------------------------------------------------------------------
def _round_up(x, m):
    return ((x + m - 1) // m) * m


def _pad_gate_cols(w, H, Hp):
    """(rows, 4H) -> (rows, 4Hp): zero-pad each i|f|g|o gate block to Hp."""
    rows = w.shape[0]
    w4 = w.reshape(rows, 4, H)
    w4 = jnp.pad(w4, ((0, 0), (0, 0), (0, Hp - H)))
    return w4.reshape(rows, 4 * Hp)


def _tpu_vmem_capacity_bytes():
    """Per-core VMEM capacity; conservative fallback = v7x (64 MiB)."""
    try:
        info = pltpu.get_tpu_info()
        cap = getattr(info, "vmem_capacity_bytes", None)
        if cap:
            return int(cap)
    except Exception:
        pass
    return 64 * 1024 * 1024


def _choose_kt(T, Bp, D, Hp, budget_bytes):
    """Timesteps per grid step, derived from a VMEM budget (review item #3).

    Per-step VMEM: x block (f32, double-buffered) + hs block (f32,
    double-buffered) scale with Kt; weights (bf16, single-buffered),
    resident outputs and h/c scratch are fixed.  Kt must divide T and be a
    multiple of 8 (or equal T) to satisfy the (8,128) block constraint.
    """
    whh_b = Hp * 4 * Hp * 2
    wih_b = D * 4 * Hp * 2
    fixed = whh_b + wih_b + (4 * Hp + Hp + 2) * 4          # weights + biases/fc
    fixed += 2 * Bp * Hp * 4                                # h/c scratch
    fixed += (2 * Bp * Hp + Bp) * 4                         # hn/cn/sig resident
    per_kt = 2 * Bp * (D * 4 + Hp * 4)                      # x in + hs out, 2 bufs
    kt_max = max(1, (budget_bytes - fixed) // per_kt)
    kt_max = int(min(kt_max, 32, T))                        # cap static unroll
    for k in range(kt_max, 0, -1):
        if T % k == 0 and (k == T or k % 8 == 0):
            return k
    return T                                                # always-valid fallback


# ----------------------------------------------------------------------------
# Fused per-layer LSTM kernel
# ----------------------------------------------------------------------------
def lstm_layer_kernel(x_ref, wih_ref, whh_ref, b_ref, fcw_ref, fcb_ref,
                      hs_ref, hn_ref, cn_ref, sig_ref, h_scr, c_scr):
    """One LSTM layer over a block of Kt timesteps; h/c carried in VMEM.

    x_ref  : (Bp, Kt, D)   input slab, batch-major (native embedding layout)
    wih_ref: (D, 4Hp)      bf16 input weights   (constant, single-buffered)
    whh_ref: (Hp, 4Hp)     bf16 recurrent weights (constant, single-buffered)
    b_ref  : (1, 4Hp)      f32 summed bias
    fcw_ref: (Hp, O), fcb_ref: (1, O)   fc head (used on the last grid step)
    hs_ref : (Bp, Kt, Hp)  hidden sequence output (feeds the next layer)
    hn_ref / cn_ref : (Bp, Hp) final h / c (resident; written on last step)
    sig_ref: (Bp, O)       sigmoid(fc(h_last)) (resident; written on last step)
    """
    tb = pl.program_id(0)
    Bp, Kt, Hp = hs_ref.shape

    @pl.when(tb == 0)
    def _init():
        h_scr[...] = jnp.zeros_like(h_scr)
        c_scr[...] = jnp.zeros_like(c_scr)

    h = h_scr[...]
    c = c_scr[...]
    bias = b_ref[...]

    # Statically unrolled time loop inside the block (Kt is small/budgeted).
    for kk in range(Kt):
        # x_t @ W_ih is independent of h -> MXU filler that overlaps the
        # serial h @ W_hh chain.  bf16 operands, f32 accumulation.
        x_t = x_ref[:, kk, :].astype(jnp.bfloat16)
        gates = (jnp.dot(x_t, wih_ref[...],
                         preferred_element_type=jnp.float32)
                 + jnp.dot(h.astype(jnp.bfloat16), whh_ref[...],
                           preferred_element_type=jnp.float32)
                 + bias)
        # Lane-aligned gate slices (Hp is a multiple of 128). Order: i,f,g,o.
        i_g = jax.nn.sigmoid(gates[:, 0 * Hp:1 * Hp])
        f_g = jax.nn.sigmoid(gates[:, 1 * Hp:2 * Hp])
        g_g = jnp.tanh(gates[:, 2 * Hp:3 * Hp])
        o_g = jax.nn.sigmoid(gates[:, 3 * Hp:4 * Hp])
        c = f_g * c + i_g * g_g
        h = o_g * jnp.tanh(c)
        hs_ref[:, kk, :] = h

    h_scr[...] = h
    c_scr[...] = c

    @pl.when(tb == pl.num_programs(0) - 1)
    def _final():
        hn_ref[...] = h
        cn_ref[...] = c
        # Fused fc + sigmoid on the final hidden state (the module only
        # consumes sigmoid_out[:, -1], i.e. the last timestep).
        sig_ref[...] = jax.nn.sigmoid(
            jnp.dot(h, fcw_ref[...], preferred_element_type=jnp.float32)
            + fcb_ref[...])


def run_lstm_layer(x, wih_bf16, whh_bf16, b, fcw, fcb, Kt, vmem_limit_bytes):
    """x: (Bp, T, D) batch-major -> (hs (Bp,T,Hp), h_n, c_n, sig)."""
    Bp, T, D = x.shape
    G4 = wih_bf16.shape[1]
    Hp = whh_bf16.shape[0]
    O = fcw.shape[1]
    single = pl.Buffered(1)   # constant-index blocks: no double-buffering

    return pl.pallas_call(
        lstm_layer_kernel,
        out_shape=(jax.ShapeDtypeStruct((Bp, T, Hp), jnp.float32),
                   jax.ShapeDtypeStruct((Bp, Hp), jnp.float32),
                   jax.ShapeDtypeStruct((Bp, Hp), jnp.float32),
                   jax.ShapeDtypeStruct((Bp, O), jnp.float32)),
        grid_spec=pltpu.PrefetchScalarGridSpec(
            num_scalar_prefetch=0,
            grid=(T // Kt,),
            in_specs=[
                pl.BlockSpec((Bp, Kt, D), lambda tb: (0, tb, 0)),
                pl.BlockSpec((D, G4), lambda tb: (0, 0), pipeline_mode=single),
                pl.BlockSpec((Hp, G4), lambda tb: (0, 0), pipeline_mode=single),
                pl.BlockSpec((1, G4), lambda tb: (0, 0), pipeline_mode=single),
                pl.BlockSpec((Hp, O), lambda tb: (0, 0), pipeline_mode=single),
                pl.BlockSpec((1, O), lambda tb: (0, 0), pipeline_mode=single),
            ],
            out_specs=[
                pl.BlockSpec((Bp, Kt, Hp), lambda tb: (0, tb, 0)),
                pl.BlockSpec((Bp, Hp), lambda tb: (0, 0)),
                pl.BlockSpec((Bp, Hp), lambda tb: (0, 0)),
                pl.BlockSpec((Bp, O), lambda tb: (0, 0)),
            ],
            scratch_shapes=[pltpu.VMEM((Bp, Hp), jnp.float32),
                            pltpu.VMEM((Bp, Hp), jnp.float32)],
        ),
        compiler_params=pltpu.CompilerParams(
            dimension_semantics=("arbitrary",),   # h/c carry across grid steps
            vmem_limit_bytes=vmem_limit_bytes),
    )(x, wih_bf16, whh_bf16, b, fcw, fcb)


# ----------------------------------------------------------------------------
# Full forward pass (mirrors SentimentLSTM.forward in eval mode)
# ----------------------------------------------------------------------------
def sentiment_lstm_forward(input_words, padded, n_layers, n_hidden):
    B, T = input_words.shape
    H = n_hidden
    Hp = _round_up(H, 128)                     # lane-aligned hidden size
    Bp = _round_up(B, 8)                       # sublane-aligned batch

    # Pad the int32 token ids (cheap) instead of padding the activation slab.
    toks = input_words
    if Bp != B:
        toks = jnp.pad(input_words, ((0, Bp - B), (0, 0)))
    # Embedding lookup (frozen table) -- plain-JAX gather glue.
    x = padded["embedding"][toks]              # (Bp, T, E) batch-major, f32

    vmem_cap = _tpu_vmem_capacity_bytes()
    vmem_limit = int(min(vmem_cap * 3 // 4, 96 * 1024 * 1024))

    h_list, c_list = [], []
    sig = None
    for layer in range(n_layers):
        D = x.shape[-1]
        Kt = _choose_kt(T, Bp, D, Hp, budget_bytes=int(vmem_limit * 0.8))
        hs, hn, cn, sig = run_lstm_layer(
            x, padded["wih_p"][layer], padded["whh_p"][layer],
            padded["b_p"][layer], padded["fc_w_p"], padded["fc_b"],
            Kt, vmem_limit)
        h_list.append(hn[:B, :H])
        c_list.append(cn[:B, :H])
        x = hs                                  # (Bp, T, Hp) feeds next layer

    # Only sigmoid_out[:, -1] is consumed; it was computed fused in the last
    # layer's kernel (sig of earlier layers is a negligible, ignored write).
    sigmoid_last = sig[:B, -1]
    h_n = jnp.stack(h_list, axis=0)             # (n_layers, B, H)
    c_n = jnp.stack(c_list, axis=0)
    return sigmoid_last, (h_n, c_n)


# ----------------------------------------------------------------------------
# Pure-JAX reference (unpadded, f32) for correctness check
# ----------------------------------------------------------------------------
def ref_forward(input_words, params, n_layers, n_hidden):
    B, T = input_words.shape
    H = n_hidden
    x = params["embedding"][input_words]        # (B, T, E)
    h_list, c_list = [], []
    for layer in range(n_layers):
        wih_t = params["wih_t"][layer]
        whh_t = params["whh_t"][layer]
        b = params["b"][layer][0]

        def step(carry, x_t, wih_t=wih_t, whh_t=whh_t, b=b):
            h, c = carry
            gates = x_t @ wih_t + h @ whh_t + b
            i = jax.nn.sigmoid(gates[:, :H])
            f = jax.nn.sigmoid(gates[:, H:2 * H])
            g = jnp.tanh(gates[:, 2 * H:3 * H])
            o = jax.nn.sigmoid(gates[:, 3 * H:])
            c = f * c + i * g
            h = o * jnp.tanh(c)
            return (h, c), h

        x_tbe = jnp.transpose(x, (1, 0, 2))
        (h, c), hs = lax.scan(step,
                              (jnp.zeros((B, H), jnp.float32),
                               jnp.zeros((B, H), jnp.float32)),
                              x_tbe)
        h_list.append(h)
        c_list.append(c)
        x = jnp.transpose(hs, (1, 0, 2))
    flat = x.reshape(B * T, H)
    sig = jax.nn.sigmoid(flat @ params["fc_w_t"] + params["fc_b"][0])
    sig = sig.reshape(B, -1)
    return sig[:, -1], (jnp.stack(h_list, 0), jnp.stack(c_list, 0))


# ----------------------------------------------------------------------------
# Parameter init (PyTorch-equivalent layout, pre-transposed) + padding
# ----------------------------------------------------------------------------
def init_params(key, n_vocab, n_embed, n_hidden, n_output, n_layers):
    keys = jax.random.split(key, 4 + 4 * n_layers)
    k = 1.0 / jnp.sqrt(n_hidden)
    params = {
        "embedding": jax.random.normal(keys[0], (n_vocab, n_embed),
                                       jnp.float32),
        "wih_t": [], "whh_t": [], "b": [],
        "fc_w_t": jax.random.uniform(keys[1], (n_hidden, n_output),
                                     jnp.float32, -k, k),
        "fc_b": jax.random.uniform(keys[2], (1, n_output),
                                   jnp.float32, -k, k),
    }
    for layer in range(n_layers):
        in_size = n_embed if layer == 0 else n_hidden
        k0, k1, k2, k3 = jax.random.split(keys[4 + layer], 4)
        # Stored pre-transposed: (in, 4H) and (H, 4H); biases summed.
        params["wih_t"].append(
            jax.random.uniform(k0, (in_size, 4 * n_hidden), jnp.float32, -k, k))
        params["whh_t"].append(
            jax.random.uniform(k1, (n_hidden, 4 * n_hidden), jnp.float32, -k, k))
        b_ih = jax.random.uniform(k2, (4 * n_hidden,), jnp.float32, -k, k)
        b_hh = jax.random.uniform(k3, (4 * n_hidden,), jnp.float32, -k, k)
        params["b"].append((b_ih + b_hh).reshape(1, 4 * n_hidden))
    return params


def pad_params(params, n_hidden):
    """Pad hidden dim to 128 lanes per gate; store matmul weights as bf16."""
    H = n_hidden
    Hp = _round_up(H, 128)
    padded = {
        "embedding": params["embedding"],
        "wih_p": [], "whh_p": [], "b_p": [],
        "fc_w_p": jnp.pad(params["fc_w_t"], ((0, Hp - H), (0, 0))),
        "fc_b": params["fc_b"],
    }
    for layer in range(len(params["wih_t"])):
        wih = params["wih_t"][layer]            # (in, 4H)
        whh = params["whh_t"][layer]            # (H, 4H)
        b = params["b"][layer]                  # (1, 4H)
        if layer > 0:                           # input of layers >=1 is H -> Hp
            wih = jnp.pad(wih, ((0, Hp - H), (0, 0)))
        padded["wih_p"].append(
            _pad_gate_cols(wih, H, Hp).astype(jnp.bfloat16))
        padded["whh_p"].append(
            _pad_gate_cols(jnp.pad(whh, ((0, Hp - H), (0, 0))), H, Hp)
            .astype(jnp.bfloat16))
        padded["b_p"].append(_pad_gate_cols(b, H, Hp))
    return padded


# ----------------------------------------------------------------------------
# Driver
# ----------------------------------------------------------------------------
if __name__ == "__main__":
    n_vocab, n_embed, n_hidden, n_output, n_layers = 50, 32, 32, 1, 2
    batch, seq = 2, 8

    key = jax.random.PRNGKey(0)
    k_tok, k_par = jax.random.split(key)
    input_words = jax.random.randint(k_tok, (batch, seq), 0, n_vocab,
                                     dtype=jnp.int32)
    params = init_params(k_par, n_vocab, n_embed, n_hidden, n_output, n_layers)
    padded = pad_params(params, n_hidden)

    sig_last, (h_n, c_n) = sentiment_lstm_forward(
        input_words, padded, n_layers, n_hidden)
    sig_last = jax.block_until_ready(sig_last)
    h_n = jax.block_until_ready(h_n)
    c_n = jax.block_until_ready(c_n)

    # Cross-check against a pure-JAX f32 reference.  Tolerance is loosened
    # because the kernel uses bf16 weights / matmul operands (f32 accumulate).
    ref_last, (ref_h, ref_c) = ref_forward(input_words, params,
                                           n_layers, n_hidden)
    assert sig_last.shape == (batch,)
    assert h_n.shape == (n_layers, batch, n_hidden)
    assert c_n.shape == (n_layers, batch, n_hidden)
    tol = 2e-2
    assert jnp.allclose(sig_last, ref_last, atol=tol), "sigmoid_last mismatch"
    assert jnp.allclose(h_n, ref_h, atol=tol), "h_n mismatch"
    assert jnp.allclose(c_n, ref_c, atol=tol), "c_n mismatch"

    print("KERNEL_OK")
</pallas_src>

<mosaic_0001>
module attributes {stable_mosaic.version = 11 : i64} {
  func.func @lstm_layer_kernel(%arg0: i32, %arg1: memref<8x8x32xf32, #tpu.memory_space<vmem>>, %arg2: memref<32x512xbf16, #tpu.memory_space<vmem>>, %arg3: memref<128x512xbf16, #tpu.memory_space<vmem>>, %arg4: memref<1x512xf32, #tpu.memory_space<vmem>>, %arg5: memref<128x1xf32, #tpu.memory_space<vmem>>, %arg6: memref<1x1xf32, #tpu.memory_space<vmem>>, %arg7: memref<8x8x128xf32, #tpu.memory_space<vmem>>, %arg8: memref<8x128xf32, #tpu.memory_space<vmem>>, %arg9: memref<8x128xf32, #tpu.memory_space<vmem>>, %arg10: memref<8x1xf32, #tpu.memory_space<vmem>>, %arg11: memref<8x128xf32, #tpu.memory_space<vmem>>, %arg12: memref<8x128xf32, #tpu.memory_space<vmem>>) attributes {dimension_semantics = [#tpu.dimension_semantics<arbitrary>], iteration_bounds = array<i64: 1>, scalar_prefetch = 0 : i64, scratch_operands = 2 : i64, tpu.core_type = #tpu.core_type<tc>, window_params = [{transform_indices = @transform_0, window_bounds = array<i64: 8, 8, 32>}, {pipeline_mode = #tpu.pipeline_mode<synchronous>, transform_indices = @transform_1, window_bounds = array<i64: 32, 512>}, {pipeline_mode = #tpu.pipeline_mode<synchronous>, transform_indices = @transform_2, window_bounds = array<i64: 128, 512>}, {pipeline_mode = #tpu.pipeline_mode<synchronous>, transform_indices = @transform_3, window_bounds = array<i64: 1, 512>}, {pipeline_mode = #tpu.pipeline_mode<synchronous>, transform_indices = @transform_4, window_bounds = array<i64: 128, 1>}, {pipeline_mode = #tpu.pipeline_mode<synchronous>, transform_indices = @transform_5, window_bounds = array<i64: 1, 1>}, {transform_indices = @transform_6, window_bounds = array<i64: 8, 8, 128>}, {pipeline_mode = #tpu.pipeline_mode<synchronous>, transform_indices = @transform_7, window_bounds = array<i64: 8, 128>}, {pipeline_mode = #tpu.pipeline_mode<synchronous>, transform_indices = @transform_8, window_bounds = array<i64: 8, 128>}, {pipeline_mode = #tpu.pipeline_mode<synchronous>, transform_indices = @transform_9, window_bounds = array<i64: 8, 1>}]} {
    %c0_i32 = arith.constant 0 : i32
    %0 = arith.cmpi eq, %arg0, %c0_i32 : i32
    %1 = arith.extui %0 : i1 to i32
    %c0_i32_0 = arith.constant 0 : i32
    %2 = arith.cmpi ne, %1, %c0_i32_0 : i32
    scf.if %2 {
      %cst_124 = arith.constant 0.000000e+00 : f32
      %323 = vector.broadcast %cst_124 : f32 to vector<8x128xf32>
      %c0_125 = arith.constant 0 : index
      %c0_126 = arith.constant 0 : index
      %324 = vector.load %arg11[%c0_125, %c0_126] : memref<8x128xf32, #tpu.memory_space<vmem>>, vector<8x128xf32>
      tpu.vector_store %arg11[%c0_125, %c0_126], %323 {strides = array<i32>} : memref<8x128xf32, #tpu.memory_space<vmem>>, vector<8x128xf32>,
      %cst_127 = arith.constant 0.000000e+00 : f32
      %325 = vector.broadcast %cst_127 : f32 to vector<8x128xf32>
      %c0_128 = arith.constant 0 : index
      %c0_129 = arith.constant 0 : index
      %326 = vector.load %arg12[%c0_128, %c0_129] : memref<8x128xf32, #tpu.memory_space<vmem>>, vector<8x128xf32>
      tpu.vector_store %arg12[%c0_128, %c0_129], %325 {strides = array<i32>} : memref<8x128xf32, #tpu.memory_space<vmem>>, vector<8x128xf32>,
    } else {
    }
    %c0 = arith.constant 0 : index
    %c0_1 = arith.constant 0 : index
    %3 = vector.load %arg11[%c0, %c0_1] : memref<8x128xf32, #tpu.memory_space<vmem>>, vector<8x128xf32>
    %c0_2 = arith.constant 0 : index
    %c0_3 = arith.constant 0 : index
    %4 = vector.load %arg12[%c0_2, %c0_3] : memref<8x128xf32, #tpu.memory_space<vmem>>, vector<8x128xf32>
    %c0_4 = arith.constant 0 : index
    %c0_5 = arith.constant 0 : index
    %5 = vector.load %arg4[%c0_4, %c0_5] : memref<1x512xf32, #tpu.memory_space<vmem>>, vector<1x512xf32>
    %c0_6 = arith.constant 0 : index
    %c0_7 = arith.constant 0 : index
    %c0_8 = arith.constant 0 : index
    %6 = vector.load %arg1[%c0_6, %c0_7, %c0_8] : memref<8x8x32xf32, #tpu.memory_space<vmem>>, vector<8x1x32xf32>
    %7 = vector.shape_cast %6 : vector<8x1x32xf32> to vector<8x32xf32>
    %8 = arith.truncf %7 : vector<8x32xf32> to vector<8x32xbf16>
    %c0_9 = arith.constant 0 : index
    %c0_10 = arith.constant 0 : index
    %9 = vector.load %arg2[%c0_9, %c0_10] : memref<32x512xbf16, #tpu.memory_space<vmem>>, vector<32x512xbf16>
    %cst = arith.constant dense<0.000000e+00> : vector<8x512xf32>
    %10 = tpu.matmul %8, %9, %cst {dimension_numbers = #tpu.dot_dimension_numbers<[1], [0], [0], [1], [0, 0, 1, 1], [], []>} : vector<8x32xbf16>, vector<32x512xbf16>, vector<8x512xf32> -> vector<8x512xf32>
    %11 = arith.truncf %3 : vector<8x128xf32> to vector<8x128xbf16>
    %c0_11 = arith.constant 0 : index
    %c0_12 = arith.constant 0 : index
    %12 = vector.load %arg3[%c0_11, %c0_12] : memref<128x512xbf16, #tpu.memory_space<vmem>>, vector<128x512xbf16>
    %cst_13 = arith.constant dense<0.000000e+00> : vector<8x512xf32>
    %13 = tpu.matmul %11, %12, %cst_13 {dimension_numbers = #tpu.dot_dimension_numbers<[1], [0], [0], [1], [0, 0, 1, 1], [], []>} : vector<8x128xbf16>, vector<128x512xbf16>, vector<8x512xf32> -> vector<8x512xf32>
    %14 = arith.addf %10, %13 : vector<8x512xf32>
    %15 = vector.broadcast %5 : vector<1x512xf32> to vector<8x512xf32>
    %16 = arith.addf %14, %15 : vector<8x512xf32>
    %17 = vector.extract_strided_slice %16 {offsets = [0, 0], sizes = [8, 128], strides = [1, 1]} : vector<8x512xf32> to vector<8x128xf32>
    %18 = arith.negf %17 : vector<8x128xf32>
    %19 = math.exp %18 : vector<8x128xf32>
    %cst_14 = arith.constant 1.000000e+00 : f32
    %20 = vector.broadcast %cst_14 : f32 to vector<8x128xf32>
    %21 = arith.addf %20, %19 : vector<8x128xf32>
    %22 = arith.divf %20, %21 : vector<8x128xf32>
    %23 = vector.extract_strided_slice %16 {offsets = [0, 128], sizes = [8, 128], strides = [1, 1]} : vector<8x512xf32> to vector<8x128xf32>
    %24 = arith.negf %23 : vector<8x128xf32>
    %25 = math.exp %24 : vector<8x128xf32>
    %cst_15 = arith.constant 1.000000e+00 : f32
    %26 = vector.broadcast %cst_15 : f32 to vector<8x128xf32>
    %27 = arith.addf %26, %25 : vector<8x128xf32>
    %28 = arith.divf %26, %27 : vector<8x128xf32>
    %29 = vector.extract_strided_slice %16 {offsets = [0, 256], sizes = [8, 128], strides = [1, 1]} : vector<8x512xf32> to vector<8x128xf32>
    %30 = math.tanh %29 : vector<8x128xf32>
    %31 = vector.extract_strided_slice %16 {offsets = [0, 384], sizes = [8, 128], strides = [1, 1]} : vector<8x512xf32> to vector<8x128xf32>
    %32 = arith.negf %31 : vector<8x128xf32>
    %33 = math.exp %32 : vector<8x128xf32>
    %cst_16 = arith.constant 1.000000e+00 : f32
    %34 = vector.broadcast %cst_16 : f32 to vector<8x128xf32>
    %35 = arith.addf %34, %33 : vector<8x128xf32>
    %36 = arith.divf %34, %35 : vector<8x128xf32>
    %37 = arith.mulf %28, %4 : vector<8x128xf32>
    %38 = arith.mulf %22, %30 : vector<8x128xf32>
    %39 = arith.addf %37, %38 : vector<8x128xf32>
    %40 = math.tanh %39 : vector<8x128xf32>
    %41 = arith.mulf %36, %40 : vector<8x128xf32>
    %c0_17 = arith.constant 0 : index
    %c0_18 = arith.constant 0 : index
    %c0_19 = arith.constant 0 : index
    %42 = vector.load %arg7[%c0_17, %c0_18, %c0_19] : memref<8x8x128xf32, #tpu.memory_space<vmem>>, vector<8x1x128xf32>
    %43 = vector.shape_cast %42 : vector<8x1x128xf32> to vector<8x128xf32>
    %44 = vector.shape_cast %41 : vector<8x128xf32> to vector<8x1x128xf32>
    tpu.vector_store %arg7[%c0_17, %c0_18, %c0_19], %44 {strides = array<i32>} : memref<8x8x128xf32, #tpu.memory_space<vmem>>, vector<8x1x128xf32>,
    %c0_20 = arith.constant 0 : index
    %c1 = arith.constant 1 : index
    %c0_21 = arith.constant 0 : index
    %45 = vector.load %arg1[%c0_20, %c1, %c0_21] : memref<8x8x32xf32, #tpu.memory_space<vmem>>, vector<8x1x32xf32>
    %46 = vector.shape_cast %45 : vector<8x1x32xf32> to vector<8x32xf32>
    %47 = arith.truncf %46 : vector<8x32xf32> to vector<8x32xbf16>
    %c0_22 = arith.constant 0 : index
    %c0_23 = arith.constant 0 : index
    %48 = vector.load %arg2[%c0_22, %c0_23] : memref<32x512xbf16, #tpu.memory_space<vmem>>, vector<32x512xbf16>
    %cst_24 = arith.constant dense<0.000000e+00> : vector<8x512xf32>
    %49 = tpu.matmul %47, %48, %cst_24 {dimension_numbers = #tpu.dot_dimension_numbers<[1], [0], [0], [1], [0, 0, 1, 1], [], []>} : vector<8x32xbf16>, vector<32x512xbf16>, vector<8x512xf32> -> vector<8x512xf32>
    %50 = arith.truncf %41 : vector<8x128xf32> to vector<8x128xbf16>
    %c0_25 = arith.constant 0 : index
    %c0_26 = arith.constant 0 : index
    %51 = vector.load %arg3[%c0_25, %c0_26] : memref<128x512xbf16, #tpu.memory_space<vmem>>, vector<128x512xbf16>
    %cst_27 = arith.constant dense<0.000000e+00> : vector<8x512xf32>
    %52 = tpu.matmul %50, %51, %cst_27 {dimension_numbers = #tpu.dot_dimension_numbers<[1], [0], [0], [1], [0, 0, 1, 1], [], []>} : vector<8x128xbf16>, vector<128x512xbf16>, vector<8x512xf32> -> vector<8x512xf32>
    %53 = arith.addf %49, %52 : vector<8x512xf32>
    %54 = vector.broadcast %5 : vector<1x512xf32> to vector<8x512xf32>
    %55 = arith.addf %53, %54 : vector<8x512xf32>
    %56 = vector.extract_strided_slice %55 {offsets = [0, 0], sizes = [8, 128], strides = [1, 1]} : vector<8x512xf32> to vector<8x128xf32>
    %57 = arith.negf %56 : vector<8x128xf32>
    %58 = math.exp %57 : vector<8x128xf32>
    %cst_28 = arith.constant 1.000000e+00 : f32
    %59 = vector.broadcast %cst_28 : f32 to vector<8x128xf32>
    %60 = arith.addf %59, %58 : vector<8x128xf32>
    %61 = arith.divf %59, %60 : vector<8x128xf32>
    %62 = vector.extract_strided_slice %55 {offsets = [0, 128], sizes = [8, 128], strides = [1, 1]} : vector<8x512xf32> to vector<8x128xf32>
    %63 = arith.negf %62 : vector<8x128xf32>
    %64 = math.exp %63 : vector<8x128xf32>
    %cst_29 = arith.constant 1.000000e+00 : f32
    %65 = vector.broadcast %cst_29 : f32 to vector<8x128xf32>
    %66 = arith.addf %65, %64 : vector<8x128xf32>
    %67 = arith.divf %65, %66 : vector<8x128xf32>
    %68 = vector.extract_strided_slice %55 {offsets = [0, 256], sizes = [8, 128], strides = [1, 1]} : vector<8x512xf32> to vector<8x128xf32>
    %69 = math.tanh %68 : vector<8x128xf32>
    %70 = vector.extract_strided_slice %55 {offsets = [0, 384], sizes = [8, 128], strides = [1, 1]} : vector<8x512xf32> to vector<8x128xf32>
    %71 = arith.negf %70 : vector<8x128xf32>
    %72 = math.exp %71 : vector<8x128xf32>
    %cst_30 = arith.constant 1.000000e+00 : f32
    %73 = vector.broadcast %cst_30 : f32 to vector<8x128xf32>
    %74 = arith.addf %73, %72 : vector<8x128xf32>
    %75 = arith.divf %73, %74 : vector<8x128xf32>
    %76 = arith.mulf %67, %39 : vector<8x128xf32>
    %77 = arith.mulf %61, %69 : vector<8x128xf32>
    %78 = arith.addf %76, %77 : vector<8x128xf32>
    %79 = math.tanh %78 : vector<8x128xf32>
    %80 = arith.mulf %75, %79 : vector<8x128xf32>
    %c0_31 = arith.constant 0 : index
    %c1_32 = arith.constant 1 : index
    %c0_33 = arith.constant 0 : index
    %81 = vector.load %arg7[%c0_31, %c1_32, %c0_33] : memref<8x8x128xf32, #tpu.memory_space<vmem>>, vector<8x1x128xf32>
    %82 = vector.shape_cast %81 : vector<8x1x128xf32> to vector<8x128xf32>
    %83 = vector.shape_cast %80 : vector<8x128xf32> to vector<8x1x128xf32>
    tpu.vector_store %arg7[%c0_31, %c1_32, %c0_33], %83 {strides = array<i32>} : memref<8x8x128xf32, #tpu.memory_space<vmem>>, vector<8x1x128xf32>,
    %c0_34 = arith.constant 0 : index
    %c2 = arith.constant 2 : index
    %c0_35 = arith.constant 0 : index
    %84 = vector.load %arg1[%c0_34, %c2, %c0_35] : memref<8x8x32xf32, #tpu.memory_space<vmem>>, vector<8x1x32xf32>
    %85 = vector.shape_cast %84 : vector<8x1x32xf32> to vector<8x32xf32>
    %86 = arith.truncf %85 : vector<8x32xf32> to vector<8x32xbf16>
    %c0_36 = arith.constant 0 : index
    %c0_37 = arith.constant 0 : index
    %87 = vector.load %arg2[%c0_36, %c0_37] : memref<32x512xbf16, #tpu.memory_space<vmem>>, vector<32x512xbf16>
    %cst_38 = arith.constant dense<0.000000e+00> : vector<8x512xf32>
    %88 = tpu.matmul %86, %87, %cst_38 {dimension_numbers = #tpu.dot_dimension_numbers<[1], [0], [0], [1], [0, 0, 1, 1], [], []>} : vector<8x32xbf16>, vector<32x512xbf16>, vector<8x512xf32> -> vector<8x512xf32>
    %89 = arith.truncf %80 : vector<8x128xf32> to vector<8x128xbf16>
    %c0_39 = arith.constant 0 : index
    %c0_40 = arith.constant 0 : index
    %90 = vector.load %arg3[%c0_39, %c0_40] : memref<128x512xbf16, #tpu.memory_space<vmem>>, vector<128x512xbf16>
    %cst_41 = arith.constant dense<0.000000e+00> : vector<8x512xf32>
    %91 = tpu.matmul %89, %90, %cst_41 {dimension_numbers = #tpu.dot_dimension_numbers<[1], [0], [0], [1], [0, 0, 1, 1], [], []>} : vector<8x128xbf16>, vector<128x512xbf16>, vector<8x512xf32> -> vector<8x512xf32>
    %92 = arith.addf %88, %91 : vector<8x512xf32>
    %93 = vector.broadcast %5 : vector<1x512xf32> to vector<8x512xf32>
    %94 = arith.addf %92, %93 : vector<8x512xf32>
    %95 = vector.extract_strided_slice %94 {offsets = [0, 0], sizes = [8, 128], strides = [1, 1]} : vector<8x512xf32> to vector<8x128xf32>
    %96 = arith.negf %95 : vector<8x128xf32>
    %97 = math.exp %96 : vector<8x128xf32>
    %cst_42 = arith.constant 1.000000e+00 : f32
    %98 = vector.broadcast %cst_42 : f32 to vector<8x128xf32>
    %99 = arith.addf %98, %97 : vector<8x128xf32>
    %100 = arith.divf %98, %99 : vector<8x128xf32>
    %101 = vector.extract_strided_slice %94 {offsets = [0, 128], sizes = [8, 128], strides = [1, 1]} : vector<8x512xf32> to vector<8x128xf32>
    %102 = arith.negf %101 : vector<8x128xf32>
    %103 = math.exp %102 : vector<8x128xf32>
    %cst_43 = arith.constant 1.000000e+00 : f32
    %104 = vector.broadcast %cst_43 : f32 to vector<8x128xf32>
    %105 = arith.addf %104, %103 : vector<8x128xf32>
    %106 = arith.divf %104, %105 : vector<8x128xf32>
    %107 = vector.extract_strided_slice %94 {offsets = [0, 256], sizes = [8, 128], strides = [1, 1]} : vector<8x512xf32> to vector<8x128xf32>
    %108 = math.tanh %107 : vector<8x128xf32>
    %109 = vector.extract_strided_slice %94 {offsets = [0, 384], sizes = [8, 128], strides = [1, 1]} : vector<8x512xf32> to vector<8x128xf32>
    %110 = arith.negf %109 : vector<8x128xf32>
    %111 = math.exp %110 : vector<8x128xf32>
    %cst_44 = arith.constant 1.000000e+00 : f32
    %112 = vector.broadcast %cst_44 : f32 to vector<8x128xf32>
    %113 = arith.addf %112, %111 : vector<8x128xf32>
    %114 = arith.divf %112, %113 : vector<8x128xf32>
    %115 = arith.mulf %106, %78 : vector<8x128xf32>
    %116 = arith.mulf %100, %108 : vector<8x128xf32>
    %117 = arith.addf %115, %116 : vector<8x128xf32>
    %118 = math.tanh %117 : vector<8x128xf32>
    %119 = arith.mulf %114, %118 : vector<8x128xf32>
    %c0_45 = arith.constant 0 : index
    %c2_46 = arith.constant 2 : index
    %c0_47 = arith.constant 0 : index
    %120 = vector.load %arg7[%c0_45, %c2_46, %c0_47] : memref<8x8x128xf32, #tpu.memory_space<vmem>>, vector<8x1x128xf32>
    %121 = vector.shape_cast %120 : vector<8x1x128xf32> to vector<8x128xf32>
    %122 = vector.shape_cast %119 : vector<8x128xf32> to vector<8x1x128xf32>
    tpu.vector_store %arg7[%c0_45, %c2_46, %c0_47], %122 {strides = array<i32>} : memref<8x8x128xf32, #tpu.memory_space<vmem>>, vector<8x1x128xf32>,
    %c0_48 = arith.constant 0 : index
    %c3 = arith.constant 3 : index
    %c0_49 = arith.constant 0 : index
    %123 = vector.load %arg1[%c0_48, %c3, %c0_49] : memref<8x8x32xf32, #tpu.memory_space<vmem>>, vector<8x1x32xf32>
    %124 = vector.shape_cast %123 : vector<8x1x32xf32> to vector<8x32xf32>
    %125 = arith.truncf %124 : vector<8x32xf32> to vector<8x32xbf16>
    %c0_50 = arith.constant 0 : index
    %c0_51 = arith.constant 0 : index
    %126 = vector.load %arg2[%c0_50, %c0_51] : memref<32x512xbf16, #tpu.memory_space<vmem>>, vector<32x512xbf16>
    %cst_52 = arith.constant dense<0.000000e+00> : vector<8x512xf32>
    %127 = tpu.matmul %125, %126, %cst_52 {dimension_numbers = #tpu.dot_dimension_numbers<[1], [0], [0], [1], [0, 0, 1, 1], [], []>} : vector<8x32xbf16>, vector<32x512xbf16>, vector<8x512xf32> -> vector<8x512xf32>
    %128 = arith.truncf %119 : vector<8x128xf32> to vector<8x128xbf16>
    %c0_53 = arith.constant 0 : index
    %c0_54 = arith.constant 0 : index
    %129 = vector.load %arg3[%c0_53, %c0_54] : memref<128x512xbf16, #tpu.memory_space<vmem>>, vector<128x512xbf16>
    %cst_55 = arith.constant dense<0.000000e+00> : vector<8x512xf32>
    %130 = tpu.matmul %128, %129, %cst_55 {dimension_numbers = #tpu.dot_dimension_numbers<[1], [0], [0], [1], [0, 0, 1, 1], [], []>} : vector<8x128xbf16>, vector<128x512xbf16>, vector<8x512xf32> -> vector<8x512xf32>
    %131 = arith.addf %127, %130 : vector<8x512xf32>
    %132 = vector.broadcast %5 : vector<1x512xf32> to vector<8x512xf32>
    %133 = arith.addf %131, %132 : vector<8x512xf32>
    %134 = vector.extract_strided_slice %133 {offsets = [0, 0], sizes = [8, 128], strides = [1, 1]} : vector<8x512xf32> to vector<8x128xf32>
    %135 = arith.negf %134 : vector<8x128xf32>
    %136 = math.exp %135 : vector<8x128xf32>
    %cst_56 = arith.constant 1.000000e+00 : f32
    %137 = vector.broadcast %cst_56 : f32 to vector<8x128xf32>
    %138 = arith.addf %137, %136 : vector<8x128xf32>
    %139 = arith.divf %137, %138 : vector<8x128xf32>
    %140 = vector.extract_strided_slice %133 {offsets = [0, 128], sizes = [8, 128], strides = [1, 1]} : vector<8x512xf32> to vector<8x128xf32>
    %141 = arith.negf %140 : vector<8x128xf32>
    %142 = math.exp %141 : vector<8x128xf32>
    %cst_57 = arith.constant 1.000000e+00 : f32
    %143 = vector.broadcast %cst_57 : f32 to vector<8x128xf32>
    %144 = arith.addf %143, %142 : vector<8x128xf32>
    %145 = arith.divf %143, %144 : vector<8x128xf32>
    %146 = vector.extract_strided_slice %133 {offsets = [0, 256], sizes = [8, 128], strides = [1, 1]} : vector<8x512xf32> to vector<8x128xf32>
    %147 = math.tanh %146 : vector<8x128xf32>
    %148 = vector.extract_strided_slice %133 {offsets = [0, 384], sizes = [8, 128], strides = [1, 1]} : vector<8x512xf32> to vector<8x128xf32>
    %149 = arith.negf %148 : vector<8x128xf32>
    %150 = math.exp %149 : vector<8x128xf32>
    %cst_58 = arith.constant 1.000000e+00 : f32
    %151 = vector.broadcast %cst_58 : f32 to vector<8x128xf32>
    %152 = arith.addf %151, %150 : vector<8x128xf32>
    %153 = arith.divf %151, %152 : vector<8x128xf32>
    %154 = arith.mulf %145, %117 : vector<8x128xf32>
    %155 = arith.mulf %139, %147 : vector<8x128xf32>
    %156 = arith.addf %154, %155 : vector<8x128xf32>
    %157 = math.tanh %156 : vector<8x128xf32>
    %158 = arith.mulf %153, %157 : vector<8x128xf32>
    %c0_59 = arith.constant 0 : index
    %c3_60 = arith.constant 3 : index
    %c0_61 = arith.constant 0 : index
    %159 = vector.load %arg7[%c0_59, %c3_60, %c0_61] : memref<8x8x128xf32, #tpu.memory_space<vmem>>, vector<8x1x128xf32>
    %160 = vector.shape_cast %159 : vector<8x1x128xf32> to vector<8x128xf32>
    %161 = vector.shape_cast %158 : vector<8x128xf32> to vector<8x1x128xf32>
    tpu.vector_store %arg7[%c0_59, %c3_60, %c0_61], %161 {strides = array<i32>} : memref<8x8x128xf32, #tpu.memory_space<vmem>>, vector<8x1x128xf32>,
    %c0_62 = arith.constant 0 : index
    %c4 = arith.constant 4 : index
    %c0_63 = arith.constant 0 : index
    %162 = vector.load %arg1[%c0_62, %c4, %c0_63] : memref<8x8x32xf32, #tpu.memory_space<vmem>>, vector<8x1x32xf32>
    %163 = vector.shape_cast %162 : vector<8x1x32xf32> to vector<8x32xf32>
    %164 = arith.truncf %163 : vector<8x32xf32> to vector<8x32xbf16>
    %c0_64 = arith.constant 0 : index
    %c0_65 = arith.constant 0 : index
    %165 = vector.load %arg2[%c0_64, %c0_65] : memref<32x512xbf16, #tpu.memory_space<vmem>>, vector<32x512xbf16>
    %cst_66 = arith.constant dense<0.000000e+00> : vector<8x512xf32>
    %166 = tpu.matmul %164, %165, %cst_66 {dimension_numbers = #tpu.dot_dimension_numbers<[1], [0], [0], [1], [0, 0, 1, 1], [], []>} : vector<8x32xbf16>, vector<32x512xbf16>, vector<8x512xf32> -> vector<8x512xf32>
    %167 = arith.truncf %158 : vector<8x128xf32> to vector<8x128xbf16>
    %c0_67 = arith.constant 0 : index
    %c0_68 = arith.constant 0 : index
    %168 = vector.load %arg3[%c0_67, %c0_68] : memref<128x512xbf16, #tpu.memory_space<vmem>>, vector<128x512xbf16>
    %cst_69 = arith.constant dense<0.000000e+00> : vector<8x512xf32>
    %169 = tpu.matmul %167, %168, %cst_69 {dimension_numbers = #tpu.dot_dimension_numbers<[1], [0], [0], [1], [0, 0, 1, 1], [], []>} : vector<8x128xbf16>, vector<128x512xbf16>, vector<8x512xf32> -> vector<8x512xf32>
    %170 = arith.addf %166, %169 : vector<8x512xf32>
    %171 = vector.broadcast %5 : vector<1x512xf32> to vector<8x512xf32>
    %172 = arith.addf %170, %171 : vector<8x512xf32>
    %173 = vector.extract_strided_slice %172 {offsets = [0, 0], sizes = [8, 128], strides = [1, 1]} : vector<8x512xf32> to vector<8x128xf32>
    %174 = arith.negf %173 : vector<8x128xf32>
    %175 = math.exp %174 : vector<8x128xf32>
    %cst_70 = arith.constant 1.000000e+00 : f32
    %176 = vector.broadcast %cst_70 : f32 to vector<8x128xf32>
    %177 = arith.addf %176, %175 : vector<8x128xf32>
    %178 = arith.divf %176, %177 : vector<8x128xf32>
    %179 = vector.extract_strided_slice %172 {offsets = [0, 128], sizes = [8, 128], strides = [1, 1]} : vector<8x512xf32> to vector<8x128xf32>
    %180 = arith.negf %179 : vector<8x128xf32>
    %181 = math.exp %180 : vector<8x128xf32>
    %cst_71 = arith.constant 1.000000e+00 : f32
    %182 = vector.broadcast %cst_71 : f32 to vector<8x128xf32>
    %183 = arith.addf %182, %181 : vector<8x128xf32>
    %184 = arith.divf %182, %183 : vector<8x128xf32>
    %185 = vector.extract_strided_slice %172 {offsets = [0, 256], sizes = [8, 128], strides = [1, 1]} : vector<8x512xf32> to vector<8x128xf32>
    %186 = math.tanh %185 : vector<8x128xf32>
    %187 = vector.extract_strided_slice %172 {offsets = [0, 384], sizes = [8, 128], strides = [1, 1]} : vector<8x512xf32> to vector<8x128xf32>
    %188 = arith.negf %187 : vector<8x128xf32>
    %189 = math.exp %188 : vector<8x128xf32>
    %cst_72 = arith.constant 1.000000e+00 : f32
    %190 = vector.broadcast %cst_72 : f32 to vector<8x128xf32>
    %191 = arith.addf %190, %189 : vector<8x128xf32>
    %192 = arith.divf %190, %191 : vector<8x128xf32>
    %193 = arith.mulf %184, %156 : vector<8x128xf32>
    %194 = arith.mulf %178, %186 : vector<8x128xf32>
    %195 = arith.addf %193, %194 : vector<8x128xf32>
    %196 = math.tanh %195 : vector<8x128xf32>
    %197 = arith.mulf %192, %196 : vector<8x128xf32>
    %c0_73 = arith.constant 0 : index
    %c4_74 = arith.constant 4 : index
    %c0_75 = arith.constant 0 : index
    %198 = vector.load %arg7[%c0_73, %c4_74, %c0_75] : memref<8x8x128xf32, #tpu.memory_space<vmem>>, vector<8x1x128xf32>
    %199 = vector.shape_cast %198 : vector<8x1x128xf32> to vector<8x128xf32>
    %200 = vector.shape_cast %197 : vector<8x128xf32> to vector<8x1x128xf32>
    tpu.vector_store %arg7[%c0_73, %c4_74, %c0_75], %200 {strides = array<i32>} : memref<8x8x128xf32, #tpu.memory_space<vmem>>, vector<8x1x128xf32>,
    %c0_76 = arith.constant 0 : index
    %c5 = arith.constant 5 : index
    %c0_77 = arith.constant 0 : index
    %201 = vector.load %arg1[%c0_76, %c5, %c0_77] : memref<8x8x32xf32, #tpu.memory_space<vmem>>, vector<8x1x32xf32>
    %202 = vector.shape_cast %201 : vector<8x1x32xf32> to vector<8x32xf32>
    %203 = arith.truncf %202 : vector<8x32xf32> to vector<8x32xbf16>
    %c0_78 = arith.constant 0 : index
    %c0_79 = arith.constant 0 : index
    %204 = vector.load %arg2[%c0_78, %c0_79] : memref<32x512xbf16, #tpu.memory_space<vmem>>, vector<32x512xbf16>
    %cst_80 = arith.constant dense<0.000000e+00> : vector<8x512xf32>
    %205 = tpu.matmul %203, %204, %cst_80 {dimension_numbers = #tpu.dot_dimension_numbers<[1], [0], [0], [1], [0, 0, 1, 1], [], []>} : vector<8x32xbf16>, vector<32x512xbf16>, vector<8x512xf32> -> vector<8x512xf32>
    %206 = arith.truncf %197 : vector<8x128xf32> to vector<8x128xbf16>
    %c0_81 = arith.constant 0 : index
    %c0_82 = arith.constant 0 : index
    %207 = vector.load %arg3[%c0_81, %c0_82] : memref<128x512xbf16, #tpu.memory_space<vmem>>, vector<128x512xbf16>
    %cst_83 = arith.constant dense<0.000000e+00> : vector<8x512xf32>
    %208 = tpu.matmul %206, %207, %cst_83 {dimension_numbers = #tpu.dot_dimension_numbers<[1], [0], [0], [1], [0, 0, 1, 1], [], []>} : vector<8x128xbf16>, vector<128x512xbf16>, vector<8x512xf32> -> vector<8x512xf32>
    %209 = arith.addf %205, %208 : vector<8x512xf32>
    %210 = vector.broadcast %5 : vector<1x512xf32> to vector<8x512xf32>
    %211 = arith.addf %209, %210 : vector<8x512xf32>
    %212 = vector.extract_strided_slice %211 {offsets = [0, 0], sizes = [8, 128], strides = [1, 1]} : vector<8x512xf32> to vector<8x128xf32>
    %213 = arith.negf %212 : vector<8x128xf32>
    %214 = math.exp %213 : vector<8x128xf32>
    %cst_84 = arith.constant 1.000000e+00 : f32
    %215 = vector.broadcast %cst_84 : f32 to vector<8x128xf32>
    %216 = arith.addf %215, %214 : vector<8x128xf32>
    %217 = arith.divf %215, %216 : vector<8x128xf32>
    %218 = vector.extract_strided_slice %211 {offsets = [0, 128], sizes = [8, 128], strides = [1, 1]} : vector<8x512xf32> to vector<8x128xf32>
    %219 = arith.negf %218 : vector<8x128xf32>
    %220 = math.exp %219 : vector<8x128xf32>
    %cst_85 = arith.constant 1.000000e+00 : f32
    %221 = vector.broadcast %cst_85 : f32 to vector<8x128xf32>
    %222 = arith.addf %221, %220 : vector<8x128xf32>
    %223 = arith.divf %221, %222 : vector<8x128xf32>
    %224 = vector.extract_strided_slice %211 {offsets = [0, 256], sizes = [8, 128], strides = [1, 1]} : vector<8x512xf32> to vector<8x128xf32>
    %225 = math.tanh %224 : vector<8x128xf32>
    %226 = vector.extract_strided_slice %211 {offsets = [0, 384], sizes = [8, 128], strides = [1, 1]} : vector<8x512xf32> to vector<8x128xf32>
    %227 = arith.negf %226 : vector<8x128xf32>
    %228 = math.exp %227 : vector<8x128xf32>
    %cst_86 = arith.constant 1.000000e+00 : f32
    %229 = vector.broadcast %cst_86 : f32 to vector<8x128xf32>
    %230 = arith.addf %229, %228 : vector<8x128xf32>
    %231 = arith.divf %229, %230 : vector<8x128xf32>
    %232 = arith.mulf %223, %195 : vector<8x128xf32>
    %233 = arith.mulf %217, %225 : vector<8x128xf32>
    %234 = arith.addf %232, %233 : vector<8x128xf32>
    %235 = math.tanh %234 : vector<8x128xf32>
    %236 = arith.mulf %231, %235 : vector<8x128xf32>
    %c0_87 = arith.constant 0 : index
    %c5_88 = arith.constant 5 : index
    %c0_89 = arith.constant 0 : index
    %237 = vector.load %arg7[%c0_87, %c5_88, %c0_89] : memref<8x8x128xf32, #tpu.memory_space<vmem>>, vector<8x1x128xf32>
    %238 = vector.shape_cast %237 : vector<8x1x128xf32> to vector<8x128xf32>
    %239 = vector.shape_cast %236 : vector<8x128xf32> to vector<8x1x128xf32>
    tpu.vector_store %arg7[%c0_87, %c5_88, %c0_89], %239 {strides = array<i32>} : memref<8x8x128xf32, #tpu.memory_space<vmem>>, vector<8x1x128xf32>,
    %c0_90 = arith.constant 0 : index
    %c6 = arith.constant 6 : index
    %c0_91 = arith.constant 0 : index
    %240 = vector.load %arg1[%c0_90, %c6, %c0_91] : memref<8x8x32xf32, #tpu.memory_space<vmem>>, vector<8x1x32xf32>
    %241 = vector.shape_cast %240 : vector<8x1x32xf32> to vector<8x32xf32>
    %242 = arith.truncf %241 : vector<8x32xf32> to vector<8x32xbf16>
    %c0_92 = arith.constant 0 : index
    %c0_93 = arith.constant 0 : index
    %243 = vector.load %arg2[%c0_92, %c0_93] : memref<32x512xbf16, #tpu.memory_space<vmem>>, vector<32x512xbf16>
    %cst_94 = arith.constant dense<0.000000e+00> : vector<8x512xf32>
    %244 = tpu.matmul %242, %243, %cst_94 {dimension_numbers = #tpu.dot_dimension_numbers<[1], [0], [0], [1], [0, 0, 1, 1], [], []>} : vector<8x32xbf16>, vector<32x512xbf16>, vector<8x512xf32> -> vector<8x512xf32>
    %245 = arith.truncf %236 : vector<8x128xf32> to vector<8x128xbf16>
    %c0_95 = arith.constant 0 : index
    %c0_96 = arith.constant 0 : index
    %246 = vector.load %arg3[%c0_95, %c0_96] : memref<128x512xbf16, #tpu.memory_space<vmem>>, vector<128x512xbf16>
    %cst_97 = arith.constant dense<0.000000e+00> : vector<8x512xf32>
    %247 = tpu.matmul %245, %246, %cst_97 {dimension_numbers = #tpu.dot_dimension_numbers<[1], [0], [0], [1], [0, 0, 1, 1], [], []>} : vector<8x128xbf16>, vector<128x512xbf16>, vector<8x512xf32> -> vector<8x512xf32>
    %248 = arith.addf %244, %247 : vector<8x512xf32>
    %249 = vector.broadcast %5 : vector<1x512xf32> to vector<8x512xf32>
    %250 = arith.addf %248, %249 : vector<8x512xf32>
    %251 = vector.extract_strided_slice %250 {offsets = [0, 0], sizes = [8, 128], strides = [1, 1]} : vector<8x512xf32> to vector<8x128xf32>
    %252 = arith.negf %251 : vector<8x128xf32>
    %253 = math.exp %252 : vector<8x128xf32>
    %cst_98 = arith.constant 1.000000e+00 : f32
    %254 = vector.broadcast %cst_98 : f32 to vector<8x128xf32>
    %255 = arith.addf %254, %253 : vector<8x128xf32>
    %256 = arith.divf %254, %255 : vector<8x128xf32>
    %257 = vector.extract_strided_slice %250 {offsets = [0, 128], sizes = [8, 128], strides = [1, 1]} : vector<8x512xf32> to vector<8x128xf32>
    %258 = arith.negf %257 : vector<8x128xf32>
    %259 = math.exp %258 : vector<8x128xf32>
    %cst_99 = arith.constant 1.000000e+00 : f32
    %260 = vector.broadcast %cst_99 : f32 to vector<8x128xf32>
    %261 = arith.addf %260, %259 : vector<8x128xf32>
    %262 = arith.divf %260, %261 : vector<8x128xf32>
    %263 = vector.extract_strided_slice %250 {offsets = [0, 256], sizes = [8, 128], strides = [1, 1]} : vector<8x512xf32> to vector<8x128xf32>
    %264 = math.tanh %263 : vector<8x128xf32>
    %265 = vector.extract_strided_slice %250 {offsets = [0, 384], sizes = [8, 128], strides = [1, 1]} : vector<8x512xf32> to vector<8x128xf32>
    %266 = arith.negf %265 : vector<8x128xf32>
    %267 = math.exp %266 : vector<8x128xf32>
    %cst_100 = arith.constant 1.000000e+00 : f32
    %268 = vector.broadcast %cst_100 : f32 to vector<8x128xf32>
    %269 = arith.addf %268, %267 : vector<8x128xf32>
    %270 = arith.divf %268, %269 : vector<8x128xf32>
    %271 = arith.mulf %262, %234 : vector<8x128xf32>
    %272 = arith.mulf %256, %264 : vector<8x128xf32>
    %273 = arith.addf %271, %272 : vector<8x128xf32>
    %274 = math.tanh %273 : vector<8x128xf32>
    %275 = arith.mulf %270, %274 : vector<8x128xf32>
    %c0_101 = arith.constant 0 : index
    %c6_102 = arith.constant 6 : index
    %c0_103 = arith.constant 0 : index
    %276 = vector.load %arg7[%c0_101, %c6_102, %c0_103] : memref<8x8x128xf32, #tpu.memory_space<vmem>>, vector<8x1x128xf32>
    %277 = vector.shape_cast %276 : vector<8x1x128xf32> to vector<8x128xf32>
    %278 = vector.shape_cast %275 : vector<8x128xf32> to vector<8x1x128xf32>
    tpu.vector_store %arg7[%c0_101, %c6_102, %c0_103], %278 {strides = array<i32>} : memref<8x8x128xf32, #tpu.memory_space<vmem>>, vector<8x1x128xf32>,
    %c0_104 = arith.constant 0 : index
    %c7 = arith.constant 7 : index
    %c0_105 = arith.constant 0 : index
    %279 = vector.load %arg1[%c0_104, %c7, %c0_105] : memref<8x8x32xf32, #tpu.memory_space<vmem>>, vector<8x1x32xf32>
    %280 = vector.shape_cast %279 : vector<8x1x32xf32> to vector<8x32xf32>
    %281 = arith.truncf %280 : vector<8x32xf32> to vector<8x32xbf16>
    %c0_106 = arith.constant 0 : index
    %c0_107 = arith.constant 0 : index
    %282 = vector.load %arg2[%c0_106, %c0_107] : memref<32x512xbf16, #tpu.memory_space<vmem>>, vector<32x512xbf16>
    %cst_108 = arith.constant dense<0.000000e+00> : vector<8x512xf32>
    %283 = tpu.matmul %281, %282, %cst_108 {dimension_numbers = #tpu.dot_dimension_numbers<[1], [0], [0], [1], [0, 0, 1, 1], [], []>} : vector<8x32xbf16>, vector<32x512xbf16>, vector<8x512xf32> -> vector<8x512xf32>
    %284 = arith.truncf %275 : vector<8x128xf32> to vector<8x128xbf16>
    %c0_109 = arith.constant 0 : index
    %c0_110 = arith.constant 0 : index
    %285 = vector.load %arg3[%c0_109, %c0_110] : memref<128x512xbf16, #tpu.memory_space<vmem>>, vector<128x512xbf16>
    %cst_111 = arith.constant dense<0.000000e+00> : vector<8x512xf32>
    %286 = tpu.matmul %284, %285, %cst_111 {dimension_numbers = #tpu.dot_dimension_numbers<[1], [0], [0], [1], [0, 0, 1, 1], [], []>} : vector<8x128xbf16>, vector<128x512xbf16>, vector<8x512xf32> -> vector<8x512xf32>
    %287 = arith.addf %283, %286 : vector<8x512xf32>
    %288 = vector.broadcast %5 : vector<1x512xf32> to vector<8x512xf32>
    %289 = arith.addf %287, %288 : vector<8x512xf32>
    %290 = vector.extract_strided_slice %289 {offsets = [0, 0], sizes = [8, 128], strides = [1, 1]} : vector<8x512xf32> to vector<8x128xf32>
    %291 = arith.negf %290 : vector<8x128xf32>
    %292 = math.exp %291 : vector<8x128xf32>
    %cst_112 = arith.constant 1.000000e+00 : f32
    %293 = vector.broadcast %cst_112 : f32 to vector<8x128xf32>
    %294 = arith.addf %293, %292 : vector<8x128xf32>
    %295 = arith.divf %293, %294 : vector<8x128xf32>
    %296 = vector.extract_strided_slice %289 {offsets = [0, 128], sizes = [8, 128], strides = [1, 1]} : vector<8x512xf32> to vector<8x128xf32>
    %297 = arith.negf %296 : vector<8x128xf32>
    %298 = math.exp %297 : vector<8x128xf32>
    %cst_113 = arith.constant 1.000000e+00 : f32
    %299 = vector.broadcast %cst_113 : f32 to vector<8x128xf32>
    %300 = arith.addf %299, %298 : vector<8x128xf32>
    %301 = arith.divf %299, %300 : vector<8x128xf32>
    %302 = vector.extract_strided_slice %289 {offsets = [0, 256], sizes = [8, 128], strides = [1, 1]} : vector<8x512xf32> to vector<8x128xf32>
    %303 = math.tanh %302 : vector<8x128xf32>
    %304 = vector.extract_strided_slice %289 {offsets = [0, 384], sizes = [8, 128], strides = [1, 1]} : vector<8x512xf32> to vector<8x128xf32>
    %305 = arith.negf %304 : vector<8x128xf32>
    %306 = math.exp %305 : vector<8x128xf32>
    %cst_114 = arith.constant 1.000000e+00 : f32
    %307 = vector.broadcast %cst_114 : f32 to vector<8x128xf32>
    %308 = arith.addf %307, %306 : vector<8x128xf32>
    %309 = arith.divf %307, %308 : vector<8x128xf32>
    %310 = arith.mulf %301, %273 : vector<8x128xf32>
    %311 = arith.mulf %295, %303 : vector<8x128xf32>
    %312 = arith.addf %310, %311 : vector<8x128xf32>
    %313 = math.tanh %312 : vector<8x128xf32>
    %314 = arith.mulf %309, %313 : vector<8x128xf32>
    %c0_115 = arith.constant 0 : index
    %c7_116 = arith.constant 7 : index
    %c0_117 = arith.constant 0 : index
    %315 = vector.load %arg7[%c0_115, %c7_116, %c0_117] : memref<8x8x128xf32, #tpu.memory_space<vmem>>, vector<8x1x128xf32>
    %316 = vector.shape_cast %315 : vector<8x1x128xf32> to vector<8x128xf32>
    %317 = vector.shape_cast %314 : vector<8x128xf32> to vector<8x1x128xf32>
    tpu.vector_store %arg7[%c0_115, %c7_116, %c0_117], %317 {strides = array<i32>} : memref<8x8x128xf32, #tpu.memory_space<vmem>>, vector<8x1x128xf32>,
    %c0_118 = arith.constant 0 : index
    %c0_119 = arith.constant 0 : index
    %318 = vector.load %arg11[%c0_118, %c0_119] : memref<8x128xf32, #tpu.memory_space<vmem>>, vector<8x128xf32>
    tpu.vector_store %arg11[%c0_118, %c0_119], %314 {strides = array<i32>} : memref<8x128xf32, #tpu.memory_space<vmem>>, vector<8x128xf32>,
    %c0_120 = arith.constant 0 : index
    %c0_121 = arith.constant 0 : index
    %319 = vector.load %arg12[%c0_120, %c0_121] : memref<8x128xf32, #tpu.memory_space<vmem>>, vector<8x128xf32>
    tpu.vector_store %arg12[%c0_120, %c0_121], %312 {strides = array<i32>} : memref<8x128xf32, #tpu.memory_space<vmem>>, vector<8x128xf32>,
    %c0_i32_122 = arith.constant 0 : i32
    %320 = arith.cmpi eq, %arg0, %c0_i32_122 : i32
    %321 = arith.extui %320 : i1 to i32
    %c0_i32_123 = arith.constant 0 : i32
    %322 = arith.cmpi ne, %321, %c0_i32_123 : i32
    scf.if %322 {
      %c0_124 = arith.constant 0 : index
      %c0_125 = arith.constant 0 : index
      %323 = vector.load %arg8[%c0_124, %c0_125] : memref<8x128xf32, #tpu.memory_space<vmem>>, vector<8x128xf32>
      tpu.vector_store %arg8[%c0_124, %c0_125], %314 {strides = array<i32>} : memref<8x128xf32, #tpu.memory_space<vmem>>, vector<8x128xf32>,
      %c0_126 = arith.constant 0 : index
      %c0_127 = arith.constant 0 : index
      %324 = vector.load %arg9[%c0_126, %c0_127] : memref<8x128xf32, #tpu.memory_space<vmem>>, vector<8x128xf32>
      tpu.vector_store %arg9[%c0_126, %c0_127], %312 {strides = array<i32>} : memref<8x128xf32, #tpu.memory_space<vmem>>, vector<8x128xf32>,
      %c0_128 = arith.constant 0 : index
      %c0_129 = arith.constant 0 : index
      %325 = vector.load %arg5[%c0_128, %c0_129] : memref<128x1xf32, #tpu.memory_space<vmem>>, vector<128x1xf32>
      %cst_130 = arith.constant dense<0.000000e+00> : vector<8x1xf32>
      %326 = tpu.matmul %314, %325, %cst_130 {dimension_numbers = #tpu.dot_dimension_numbers<[1], [0], [0], [1], [0, 0, 1, 1], [], []>} : vector<8x128xf32>, vector<128x1xf32>, vector<8x1xf32> -> vector<8x1xf32>
      %c0_131 = arith.constant 0 : index
      %c0_132 = arith.constant 0 : index
      %327 = vector.load %arg6[%c0_131, %c0_132] : memref<1x1xf32, #tpu.memory_space<vmem>>, vector<1x1xf32>
      %328 = vector.broadcast %327 : vector<1x1xf32> to vector<8x1xf32>
      %329 = arith.addf %326, %328 : vector<8x1xf32>
      %330 = arith.negf %329 : vector<8x1xf32>
      %331 = math.exp %330 : vector<8x1xf32>
      %cst_133 = arith.constant 1.000000e+00 : f32
      %332 = vector.broadcast %cst_133 : f32 to vector<8x1xf32>
      %333 = arith.addf %332, %331 : vector<8x1xf32>
      %334 = arith.divf %332, %333 : vector<8x1xf32>
      %c0_134 = arith.constant 0 : index
      %c0_135 = arith.constant 0 : index
      %335 = vector.load %arg10[%c0_134, %c0_135] : memref<8x1xf32, #tpu.memory_space<vmem>>, vector<8x1xf32>
      tpu.vector_store %arg10[%c0_134, %c0_135], %334 {strides = array<i32>} : memref<8x1xf32, #tpu.memory_space<vmem>>, vector<8x1xf32>,
    } else {
    }
    return
  }
  func.func @transform_0(%arg0: i32) -> (i32, i32, i32) {
    %c0_i32 = arith.constant 0 : i32
    %c0_i32_0 = arith.constant 0 : i32
    %c0_i32_1 = arith.constant 0 : i32
    return %c0_i32, %arg0, %c0_i32_0 : i32, i32, i32
  }
  func.func @transform_1(%arg0: i32) -> (i32, i32) {
    %c0_i32 = arith.constant 0 : i32
    %c0_i32_0 = arith.constant 0 : i32
    %c0_i32_1 = arith.constant 0 : i32
    return %c0_i32, %c0_i32_0 : i32, i32
  }
  func.func @transform_2(%arg0: i32) -> (i32, i32) {
    %c0_i32 = arith.constant 0 : i32
    %c0_i32_0 = arith.constant 0 : i32
    %c0_i32_1 = arith.constant 0 : i32
    return %c0_i32, %c0_i32_0 : i32, i32
  }
  func.func @transform_3(%arg0: i32) -> (i32, i32) {
    %c0_i32 = arith.constant 0 : i32
    %c0_i32_0 = arith.constant 0 : i32
    %c0_i32_1 = arith.constant 0 : i32
    return %c0_i32, %c0_i32_0 : i32, i32
  }
  func.func @transform_4(%arg0: i32) -> (i32, i32) {
    %c0_i32 = arith.constant 0 : i32
    %c0_i32_0 = arith.constant 0 : i32
    %c0_i32_1 = arith.constant 0 : i32
    return %c0_i32, %c0_i32_0 : i32, i32
  }
  func.func @transform_5(%arg0: i32) -> (i32, i32) {
    %c0_i32 = arith.constant 0 : i32
    %c0_i32_0 = arith.constant 0 : i32
    %c0_i32_1 = arith.constant 0 : i32
    return %c0_i32, %c0_i32_0 : i32, i32
  }
  func.func @transform_6(%arg0: i32) -> (i32, i32, i32) {
    %c0_i32 = arith.constant 0 : i32
    %c0_i32_0 = arith.constant 0 : i32
    %c0_i32_1 = arith.constant 0 : i32
    return %c0_i32, %arg0, %c0_i32_0 : i32, i32, i32
  }
  func.func @transform_7(%arg0: i32) -> (i32, i32) {
    %c0_i32 = arith.constant 0 : i32
    %c0_i32_0 = arith.constant 0 : i32
    %c0_i32_1 = arith.constant 0 : i32
    return %c0_i32, %c0_i32_0 : i32, i32
  }
  func.func @transform_8(%arg0: i32) -> (i32, i32) {
    %c0_i32 = arith.constant 0 : i32
    %c0_i32_0 = arith.constant 0 : i32
    %c0_i32_1 = arith.constant 0 : i32
    return %c0_i32, %c0_i32_0 : i32, i32
  }
  func.func @transform_9(%arg0: i32) -> (i32, i32) {
    %c0_i32 = arith.constant 0 : i32
    %c0_i32_0 = arith.constant 0 : i32
    %c0_i32_1 = arith.constant 0 : i32
    return %c0_i32, %c0_i32_0 : i32, i32
  }
}

</mosaic_0001>

<llo_original>
// kernel: tpu_custom_call.1
$region0: #{tpu_custom_call.1}
  #allocation0 [shape = 'u32[]', space=smem, size = 0x4, offset = 0x4, fixed_abs, tag = 'smem constant byte address 0x4 - core index']
  #allocation1 [shape = 'u32[144,128]{1,0:T(1,128)}', space=vmem, size = 0x12000, scoped, tag = 'internal scratch']
  #allocation2 [shape = 'f32[8,128]{1,0:T(8,128)}', space=vmem, size = 0x1000, scoped, tag = 'scratch operand']
  #allocation3 [shape = 'f32[8,128]{1,0:T(8,128)}', space=vmem, size = 0x1000, scoped, tag = 'scratch operand']
  #allocation4 [shape = 'f32[1,1]{1,0:T(1,128)S(1)}', space=vmem, size = 0x200, scoped, tag = 'scoped memory for tpu_custom_call.1']
  %s0 = inlined_call_operand.vmem [shape: f32[8,8,32], index: 0, kind: input, shape index: {}]
  %s1 = inlined_call_operand.vmem [shape: bf16[32,512], index: 1, kind: input, shape index: {}]
  %s2 = inlined_call_operand.hbm [shape: bf16[128,512], index: 2, kind: input, shape index: {}]
  %s3 = inlined_call_operand.vmem [shape: f32[1,512], index: 3, kind: input, shape index: {}]
  %s4 = inlined_call_operand.vmem [shape: f32[128,1], index: 4, kind: input, shape index: {}]
  %s5 = inlined_call_operand.<no memory space> [shape: f32[1,1], index: 5, kind: input, shape index: {}]
  %s6 = inlined_call_operand.hbm [shape: f32[8,8,128], index: 6, kind: output, shape index: {0}]
  %s7 = inlined_call_operand.hbm [shape: f32[8,128], index: 7, kind: output, shape index: {1}]
  %s8 = inlined_call_operand.hbm [shape: f32[8,128], index: 8, kind: output, shape index: {2}]
  %s9 = inlined_call_operand.vmem [shape: f32[8,1], index: 9, kind: output, shape index: {3}]
  %10 = xla_tuple %s6, %s7, %s8, %s9
  %s11 = sld [smem:[#allocation0]]
  $region70: #{tpu_custom_call.1} parent=0
    _
  %s13 = ssub.s32 1, %s11
  %s14 = scalar_select 0, %s13, %s11
  %v15 = vstv %s5
  %16 = vst [vmem:[#allocation4] sm:$0x1] %v15
  $region1: #{tpu_custom_call.1} parent=0
    #allocation5 [shape = 'u8[131072]{0}', space=vmem, size = 0x20000, scoped, tag = 'input window, operand 2, single buffered']
    #allocation6 [shape = 's32[1]{0}', space=sflag, size = 0x4, scoped, tag = 'scoped memory for tpu_custom_call.1']
    #allocation7 [shape = 's32[1]{0}', space=sflag, size = 0x4, scoped, tag = 'scoped memory for tpu_custom_call.1']
    #allocation8 [shape = 'u8[32768]{0}', space=vmem, size = 0x8000, scoped, tag = 'output window, operand 0, single buffered']
    #allocation9 [shape = 'u8[4096]{0}', space=vmem, size = 0x1000, scoped, tag = 'output window, operand 1, single buffered']
    #allocation10 [shape = 's32[1]{0}', space=sflag, size = 0x4, scoped, tag = 'scoped memory for tpu_custom_call.1']
    #allocation11 [shape = 'u8[4096]{0}', space=vmem, size = 0x1000, scoped, tag = 'output window, operand 2, single buffered']
    %17 = vsyncpa [#allocation6], 0
    %18 = vsyncpa [#allocation7], 0
    %19 = vsyncpa [#allocation10], 0
    // Predicated region
    $region2: #{tpu_custom_call.1} parent=1 // pred_check
      _
    $region3: #{tpu_custom_call.1} parent=1 // pred_check_branch
      %21 = sbr.rel (0) target = $region5
    $region4: #{tpu_custom_call.1} parent=1 // pred_region
      _
    $region5: #{tpu_custom_call.1} parent=1 // pred_fallthru
      _
    // Predicated region
    $region6: #{tpu_custom_call.1} parent=1 // pred_check
      _
    $region7: #{tpu_custom_call.1} parent=1 // pred_check_branch
      %23 = sbr.rel (0) target = $region9
    $region8: #{tpu_custom_call.1} parent=1 // pred_region
      _
    $region9: #{tpu_custom_call.1} parent=1 // pred_fallthru
      _
    // Predicated region
    $region10: #{tpu_custom_call.1} parent=1 // pred_check
      _
    $region11: #{tpu_custom_call.1} parent=1 // pred_check_branch
      %25 = sbr.rel (0) target = $region13
    $region12: #{tpu_custom_call.1} parent=1 // pred_region
      %s27 = ssub.s32 4096, 4096
      %28 = vsyncadd [#allocation6], %s27
      %s29 = sshll.u32 [#allocation5], 4
      %s30 = int_to_ptr.vmem [resolvable:$true] %s29
      %35 = dma.hbm_to_vmem [thread:$0]  %s2, 4096, %s30, [#allocation6], 256, 256, 16
    $region13: #{tpu_custom_call.1} parent=1 // pred_fallthru
      _
    // Predicated region
    $region14: #{tpu_custom_call.1} parent=1 // pred_check
      _
    $region15: #{tpu_custom_call.1} parent=1 // pred_check_branch
      %37 = sbr.rel (0) target = $region17
    $region16: #{tpu_custom_call.1} parent=1 // pred_region
      _
    $region17: #{tpu_custom_call.1} parent=1 // pred_fallthru
      _
    // Predicated region
    $region18: #{tpu_custom_call.1} parent=1 // pred_check
      _
    $region19: #{tpu_custom_call.1} parent=1 // pred_check_branch
      %39 = sbr.rel (0) target = $region21
    $region20: #{tpu_custom_call.1} parent=1 // pred_region
      _
    $region21: #{tpu_custom_call.1} parent=1 // pred_fallthru
      _
    // Predicated region
    $region22: #{tpu_custom_call.1} parent=1 // pred_check
      _
    $region23: #{tpu_custom_call.1} parent=1 // pred_check_branch
      %41 = sbr.rel (0) target = $region25
    $region24: #{tpu_custom_call.1} parent=1 // pred_region
      _
    $region25: #{tpu_custom_call.1} parent=1 // pred_fallthru
      _
    // Predicated region
    $region26: #{tpu_custom_call.1} parent=1 // pred_check
      _
    $region27: #{tpu_custom_call.1} parent=1 // pred_check_branch
      %43 = sbr.rel (0) target = $region29
    $region28: #{tpu_custom_call.1} parent=1 // pred_region
      %44 = dma.done [#allocation6], 4096
    $region29: #{tpu_custom_call.1} parent=1 // pred_fallthru
      _
    %p46 = scmp.eq.s32.totalorder 0, 0
    // Predicated region
    $region30: #{tpu_custom_call.1} parent=1 // pred_check
      %p47 = pneg %p46
    $region31: #{tpu_custom_call.1} parent=1 // pred_check_branch
      %49 = sbr.rel (%p47) target = $region33
    $region32: #{tpu_custom_call.1} parent=1 // pred_region
      %50 = vst [vmem:[#allocation2] sm:$0xff] 0.0
      %51 = vst [vmem:[#allocation3] sm:$0xff] 0.0
    $region33: #{tpu_custom_call.1} parent=1 // pred_fallthru
      _
    %v52 = vld [vmem:[#allocation2] sm:$0xff]
    %v53 = vld [vmem:[#allocation3] sm:$0xff]
    %v54 = vld [vmem:[%s3] sm:$0xf]
    %v55 = vld [vmem:[%s0] sm:$0x1]
    %v56 = vld [vmem:[%s0 + $0x8] sm:$0x1]
    %v57 = vld [vmem:[%s0 + $0x10] sm:$0x1]
    %v58 = vld [vmem:[%s0 + $0x18] sm:$0x1]
    %v59 = vld [vmem:[%s0 + $0x20] sm:$0x1]
    %v60 = vld [vmem:[%s0 + $0x28] sm:$0x1]
    %v61 = vld [vmem:[%s0 + $0x30] sm:$0x1]
    %v62 = vld [vmem:[%s0 + $0x38] sm:$0x1]
    %v63 = vpack.c.bf16 %v55, %v55
    %v64 = vpack.c.bf16 %v56, %v56
    %v65 = vpack.c.bf16 %v57, %v57
    %v66 = vpack.c.bf16 %v58, %v58
    %v67 = vpack.c.bf16 %v59, %v59
    %v68 = vpack.c.bf16 %v60, %v60
    %v69 = vpack.c.bf16 %v61, %v61
    %v70 = vpack.c.bf16 %v62, %v62
    %v71 = vld [vmem:[%s1] sm:$0xff]
    %v72 = vld [vmem:[%s1 + $0x8] sm:$0xff]
    %v73 = vld [vmem:[%s1 + $0x10] sm:$0xff]
    %v74 = vld [vmem:[%s1 + $0x18] sm:$0xff]
    %v75 = vld [vmem:[%s1 + $0x20] sm:$0xff]
    %v76 = vld [vmem:[%s1 + $0x28] sm:$0xff]
    %v77 = vld [vmem:[%s1 + $0x30] sm:$0xff]
    %v78 = vld [vmem:[%s1 + $0x38] sm:$0xff]
    %v79 = vpack.c.bf16 %v52, %v52
    %v80 = vld [vmem:[#allocation5] sm:$0xff]
    %v81 = vld [vmem:[#allocation5 + $0x8] sm:$0xff]
    %v82 = vld [vmem:[#allocation5 + $0x10] sm:$0xff]
    %v83 = vld [vmem:[#allocation5 + $0x18] sm:$0xff]
    %v84 = vld [vmem:[#allocation5 + $0x20] sm:$0xff]
    %v85 = vld [vmem:[#allocation5 + $0x28] sm:$0xff]
    %v86 = vld [vmem:[#allocation5 + $0x30] sm:$0xff]
    %v87 = vld [vmem:[#allocation5 + $0x38] sm:$0xff]
    %v88 = vld [vmem:[#allocation5 + $0x40] sm:$0xff]
    %v89 = vld [vmem:[#allocation5 + $0x48] sm:$0xff]
    %v90 = vld [vmem:[#allocation5 + $0x50] sm:$0xff]
    %v91 = vld [vmem:[#allocation5 + $0x58] sm:$0xff]
    %v92 = vld [vmem:[#allocation5 + $0x60] sm:$0xff]
    %v93 = vld [vmem:[#allocation5 + $0x68] sm:$0xff]
    %v94 = vld [vmem:[#allocation5 + $0x70] sm:$0xff]
    %v95 = vld [vmem:[#allocation5 + $0x78] sm:$0xff]
    %v96 = vld [vmem:[#allocation5 + $0x80] sm:$0xff]
    %v97 = vld [vmem:[#allocation5 + $0x88] sm:$0xff]
    %v98 = vld [vmem:[#allocation5 + $0x90] sm:$0xff]
    %v99 = vld [vmem:[#allocation5 + $0x98] sm:$0xff]
    %v100 = vld [vmem:[#allocation5 + $0xa0] sm:$0xff]
    %v101 = vld [vmem:[#allocation5 + $0xa8] sm:$0xff]
    %v102 = vld [vmem:[#allocation5 + $0xb0] sm:$0xff]
    %v103 = vld [vmem:[#allocation5 + $0xb8] sm:$0xff]
    %v104 = vld [vmem:[#allocation5 + $0xc0] sm:$0xff]
    %v105 = vld [vmem:[#allocation5 + $0xc8] sm:$0xff]
    %v106 = vld [vmem:[#allocation5 + $0xd0] sm:$0xff]
    %v107 = vld [vmem:[#allocation5 + $0xd8] sm:$0xff]
    %v108 = vld [vmem:[#allocation5 + $0xe0] sm:$0xff]
    %v109 = vld [vmem:[#allocation5 + $0xe8] sm:$0xff]
    %v110 = vld [vmem:[#allocation5 + $0xf0] sm:$0xff]
    %v111 = vld [vmem:[#allocation5 + $0xf8] sm:$0xff]
    %v144 = vunpack.c.l.b16 %v80
    %v145 = vunpack.c.h.b16 %v80
    %v146 = vunpack.c.l.b16 %v81
    %v147 = vunpack.c.h.b16 %v81
    %v148 = vunpack.c.l.b16 %v82
    %v149 = vunpack.c.h.b16 %v82
    %v150 = vunpack.c.l.b16 %v83
    %v151 = vunpack.c.h.b16 %v83
    %v152 = vunpack.c.l.b16 %v84
    %v153 = vunpack.c.h.b16 %v84
    %v154 = vunpack.c.l.b16 %v85
    %v155 = vunpack.c.h.b16 %v85
    %v156 = vunpack.c.l.b16 %v86
    %v157 = vunpack.c.h.b16 %v86
    %v158 = vunpack.c.l.b16 %v87
    %v159 = vunpack.c.h.b16 %v87
    %v160 = vunpack.c.l.b16 %v88
    %v161 = vunpack.c.h.b16 %v88
    %v162 = vunpack.c.l.b16 %v89
    %v163 = vunpack.c.h.b16 %v89
    %v164 = vunpack.c.l.b16 %v90
    %v165 = vunpack.c.h.b16 %v90
    %v166 = vunpack.c.l.b16 %v91
    %v167 = vunpack.c.h.b16 %v91
    %v168 = vunpack.c.l.b16 %v92
    %v169 = vunpack.c.h.b16 %v92
    %v170 = vunpack.c.l.b16 %v93
    %v171 = vunpack.c.h.b16 %v93
    %v172 = vunpack.c.l.b16 %v94
    %v173 = vunpack.c.h.b16 %v94
    %v174 = vunpack.c.l.b16 %v95
    %v175 = vunpack.c.h.b16 %v95
    %v176 = vunpack.c.l.b16 %v96
    %v177 = vunpack.c.h.b16 %v96
    %v178 = vunpack.c.l.b16 %v97
    %v179 = vunpack.c.h.b16 %v97
    %v180 = vunpack.c.l.b16 %v98
    %v181 = vunpack.c.h.b16 %v98
    %v182 = vunpack.c.l.b16 %v99
    %v183 = vunpack.c.h.b16 %v99
    %v184 = vunpack.c.l.b16 %v100
    %v185 = vunpack.c.h.b16 %v100
    %v186 = vunpack.c.l.b16 %v101
    %v187 = vunpack.c.h.b16 %v101
    %v188 = vunpack.c.l.b16 %v102
    %v189 = vunpack.c.h.b16 %v102
    %v190 = vunpack.c.l.b16 %v103
    %v191 = vunpack.c.h.b16 %v103
    %v192 = vunpack.c.l.b16 %v104
    %v193 = vunpack.c.h.b16 %v104
    %v194 = vunpack.c.l.b16 %v105
    %v195 = vunpack.c.h.b16 %v105
    %v196 = vunpack.c.l.b16 %v106
    %v197 = vunpack.c.h.b16 %v106
    %v198 = vunpack.c.l.b16 %v107
    %v199 = vunpack.c.h.b16 %v107
    %v200 = vunpack.c.l.b16 %v108
    %v201 = vunpack.c.h.b16 %v108
    %v202 = vunpack.c.l.b16 %v109
    %v203 = vunpack.c.h.b16 %v109
    %v204 = vunpack.c.l.b16 %v110
    %v205 = vunpack.c.h.b16 %v110
    %v206 = vunpack.c.l.b16 %v111
    %v207 = vunpack.c.h.b16 %v111
    %v208 = vpack.c.b16 %v148, %v144
    %v209 = vpack.c.b16 %v149, %v145
    %v210 = vpack.c.b16 %v150, %v146
    %v211 = vpack.c.b16 %v151, %v147
    %v212 = vpack.c.b16 %v156, %v152
    %v213 = vpack.c.b16 %v157, %v153
    %v214 = vpack.c.b16 %v158, %v154
    %v215 = vpack.c.b16 %v159, %v155
    %v216 = vpack.c.b16 %v164, %v160
    %v217 = vpack.c.b16 %v165, %v161
    %v218 = vpack.c.b16 %v166, %v162
    %v219 = vpack.c.b16 %v167, %v163
    %v220 = vpack.c.b16 %v172, %v168
    %v221 = vpack.c.b16 %v173, %v169
    %v222 = vpack.c.b16 %v174, %v170
    %v223 = vpack.c.b16 %v175, %v171
    %v224 = vpack.c.b16 %v180, %v176
    %v225 = vpack.c.b16 %v181, %v177
    %v226 = vpack.c.b16 %v182, %v178
    %v227 = vpack.c.b16 %v183, %v179
    %v228 = vpack.c.b16 %v188, %v184
    %v229 = vpack.c.b16 %v189, %v185
    %v230 = vpack.c.b16 %v190, %v186
    %v231 = vpack.c.b16 %v191, %v187
    %v232 = vpack.c.b16 %v196, %v192
    %v233 = vpack.c.b16 %v197, %v193
    %v234 = vpack.c.b16 %v198, %v194
    %v235 = vpack.c.b16 %v199, %v195
    %v236 = vpack.c.b16 %v204, %v200
    %v237 = vpack.c.b16 %v205, %v201
    %v238 = vpack.c.b16 %v206, %v202
    %v239 = vpack.c.b16 %v207, %v203
    %272 = vmatprep.subr.bf16.mxu0 %v209
    %273 = vmatpush1.bf16.msra.mxu0 %v208
    %274 = vmatprep.subr.bf16.mxu0 %v213
    %275 = vmatpush1.bf16.msra.mxu0 %v212
    %276 = vmatprep.subr.bf16.mxu0 %v217
    %277 = vmatpush1.bf16.msra.mxu0 %v216
    %278 = vmatprep.subr.bf16.mxu0 %v221
    %279 = vmatpush1.bf16.msra.mxu0 %v220
    %280 = vmatprep.subr.bf16.mxu0 %v225
    %281 = vmatpush1.bf16.msra.mxu0 %v224
    %282 = vmatprep.subr.bf16.mxu0 %v229
    %283 = vmatpush1.bf16.msra.mxu0 %v228
    %284 = vmatprep.subr.bf16.mxu0 %v233
    %285 = vmatpush1.bf16.msra.mxu0 %v232
    %286 = vmatprep.subr.bf16.mxu0 %v237
    %287 = vmatpush1.bf16.msra.mxu0 %v236
    %288 = vmatprep.subr.bf16.mxu0 0
    %289 = vmatpush1.bf16.msra.mxu0 0
    %290 = vmatprep.subr.bf16.mxu0 0
    %291 = vmatpush1.bf16.msra.mxu0 0
    %292 = vmatprep.subr.bf16.mxu0 0
    %293 = vmatpush1.bf16.msra.mxu0 0
    %294 = vmatprep.subr.bf16.mxu0 0
    %295 = vmatpush1.bf16.msra.mxu0 0
    %296 = vmatprep.subr.bf16.mxu0 0
    %297 = vmatpush1.bf16.msra.mxu0 0
    %298 = vmatprep.subr.bf16.mxu0 0
    %299 = vmatpush1.bf16.msra.mxu0 0
    %300 = vmatprep.subr.bf16.mxu0 0
    %301 = vmatpush1.bf16.msra.mxu0 0
    %302 = vmatprep.subr.bf16.mxu0 0
    %303 = vmatpush1.bf16.msra.mxu0 0
    %304 = vmatprep.mubr.bf16.mxu0 0
    %305 = vmatmul.mubr.bf16.gmra.mrb[0].mxu0 %v79
    %v306 = vpop.f32.mrb[0].mxu0
    %v307 = vadd.f32 0.0, %v306
    %v308 = vpop.f32.mrb[0].mxu0
    %v309 = vadd.f32 0.0, %v308
    %v310 = vpop.f32.mrb[0].mxu0
    %v311 = vpop.f32.mrb[0].mxu0
    %312 = vdwg.mxu0
    %313 = vmatprep.subr.bf16.mxu0 %v211
    %314 = vmatpush1.bf16.msra.mxu0 %v210
    %315 = vmatprep.subr.bf16.mxu0 %v215
    %316 = vmatpush1.bf16.msra.mxu0 %v214
    %317 = vmatprep.subr.bf16.mxu0 %v219
    %318 = vmatpush1.bf16.msra.mxu0 %v218
    %319 = vmatprep.subr.bf16.mxu0 %v223
    %320 = vmatpush1.bf16.msra.mxu0 %v222
    %321 = vmatprep.subr.bf16.mxu0 %v227
    %322 = vmatpush1.bf16.msra.mxu0 %v226
    %323 = vmatprep.subr.bf16.mxu0 %v231
    %324 = vmatpush1.bf16.msra.mxu0 %v230
    %325 = vmatprep.subr.bf16.mxu0 %v235
    %326 = vmatpush1.bf16.msra.mxu0 %v234
    %327 = vmatprep.subr.bf16.mxu0 %v239
    %328 = vmatpush1.bf16.msra.mxu0 %v238
    %329 = vmatprep.subr.bf16.mxu0 0
    %330 = vmatpush1.bf16.msra.mxu0 0
    %331 = vmatprep.subr.bf16.mxu0 0
    %332 = vmatpush1.bf16.msra.mxu0 0
    %333 = vmatprep.subr.bf16.mxu0 0
    %334 = vmatpush1.bf16.msra.mxu0 0
    %335 = vmatprep.subr.bf16.mxu0 0
    %336 = vmatpush1.bf16.msra.mxu0 0
    %337 = vmatprep.subr.bf16.mxu0 0
    %338 = vmatpush1.bf16.msra.mxu0 0
    %339 = vmatprep.subr.bf16.mxu0 0
    %340 = vmatpush1.bf16.msra.mxu0 0
    %341 = vmatprep.subr.bf16.mxu0 0
    %342 = vmatpush1.bf16.msra.mxu0 0
    %343 = vmatprep.subr.bf16.mxu0 0
    %344 = vmatpush1.bf16.msra.mxu0 0
    %345 = vmatprep.mubr.bf16.mxu0 0
    %346 = vmatmul.mubr.bf16.gmra.mrb[0].mxu0 %v79
    %v347 = vpop.f32.mrb[0].mxu0
    %v348 = vadd.f32 0.0, %v347
    %v349 = vpop.f32.mrb[0].mxu0
    %v350 = vadd.f32 0.0, %v349
    %v351 = vpop.f32.mrb[0].mxu0
    %v352 = vpop.f32.mrb[0].mxu0
    %353 = vdwg.mxu0
    %v362 = vunpack.c.l.b16 %v63
    %v363 = vunpack.c.l.b16 %v64
    %v364 = vunpack.c.l.b16 %v65
    %v365 = vunpack.c.l.b16 %v66
    %v366 = vunpack.c.l.b16 %v67
    %v367 = vunpack.c.l.b16 %v68
    %v368 = vunpack.c.l.b16 %v69
    %v369 = vunpack.c.l.b16 %v70
    %v370 = vrot.slane %v363, 7
    %vm371 = vcmask 1041409
    %v372 = vsel %vm371, %v370, %v362
    %v373 = vrot.slane %v364, 6
    %vm374 = vcmask 1042434
    %v375 = vsel %vm374, %v373, %v372
    %v376 = vrot.slane %v365, 5
    %vm377 = vcmask 1043459
    %v378 = vsel %vm377, %v376, %v375
    %v379 = vrot.slane %v366, 4
    %vm380 = vcmask 1044484
    %v381 = vsel %vm380, %v379, %v378
    %v382 = vrot.slane %v367, 3
    %vm383 = vcmask 1045509
    %v384 = vsel %vm383, %v382, %v381
    %v385 = vrot.slane %v368, 2
    %vm386 = vcmask 1046534
    %v387 = vsel %vm386, %v385, %v384
    %v388 = vrot.slane %v369, 1
    %vm389 = vcmask 1047559
    %v390 = vsel %vm389, %v388, %v387
    %v391 = vpack.c.b16 %v390, %v390
    %v400 = vunpack.c.l.b16 %v71
    %v401 = vunpack.c.h.b16 %v71
    %v402 = vunpack.c.l.b16 %v72
    %v403 = vunpack.c.h.b16 %v72
    %v404 = vunpack.c.l.b16 %v73
    %v405 = vunpack.c.h.b16 %v73
    %v406 = vunpack.c.l.b16 %v74
    %v407 = vunpack.c.h.b16 %v74
    %v408 = vunpack.c.l.b16 %v75
    %v409 = vunpack.c.h.b16 %v75
    %v410 = vunpack.c.l.b16 %v76
    %v411 = vunpack.c.h.b16 %v76
    %v412 = vunpack.c.l.b16 %v77
    %v413 = vunpack.c.h.b16 %v77
    %v414 = vunpack.c.l.b16 %v78
    %v415 = vunpack.c.h.b16 %v78
    %v416 = vpack.c.b16 %v404, %v400
    %v417 = vpack.c.b16 %v405, %v401
    %v418 = vpack.c.b16 %v406, %v402
    %v419 = vpack.c.b16 %v407, %v403
    %v420 = vpack.c.b16 %v412, %v408
    %v421 = vpack.c.b16 %v413, %v409
    %v422 = vpack.c.b16 %v414, %v410
    %v423 = vpack.c.b16 %v415, %v411
    %vm432 = vcmask 261120
    %v434 = vsel %vm432, %v391, 0
    %436 = vmatprep.subr.bf16.mxu0 %v417
    %437 = vmatpush1.bf16.msra.mxu0 %v416
    %438 = vmatprep.subr.bf16.mxu0 %v421
    %439 = vmatpush1.bf16.msra.mxu0 %v420
    %440 = vmatprep.subr.bf16.mxu0 0
    %441 = vmatpush1.bf16.msra.mxu0 0
    %442 = vmatprep.subr.bf16.mxu0 0
    %443 = vmatpush1.bf16.msra.mxu0 0
    %444 = vmatprep.subr.bf16.mxu0 0
    %445 = vmatpush1.bf16.msra.mxu0 0
    %446 = vmatprep.subr.bf16.mxu0 0
    %447 = vmatpush1.bf16.msra.mxu0 0
    %448 = vmatprep.subr.bf16.mxu0 0
    %449 = vmatpush1.bf16.msra.mxu0 0
    %450 = vmatprep.subr.bf16.mxu0 0
    %451 = vmatpush1.bf16.msra.mxu0 0
    %452 = vmatprep.subr.bf16.mxu0 0
    %453 = vmatpush1.bf16.msra.mxu0 0
    %454 = vmatprep.subr.bf16.mxu0 0
    %455 = vmatpush1.bf16.msra.mxu0 0
    %456 = vmatprep.subr.bf16.mxu0 0
    %457 = vmatpush1.bf16.msra.mxu0 0
    %458 = vmatprep.subr.bf16.mxu0 0
    %459 = vmatpush1.bf16.msra.mxu0 0
    %460 = vmatprep.subr.bf16.mxu0 0
    %461 = vmatpush1.bf16.msra.mxu0 0
    %462 = vmatprep.subr.bf16.mxu0 0
    %463 = vmatpush1.bf16.msra.mxu0 0
    %464 = vmatprep.subr.bf16.mxu0 0
    %465 = vmatpush1.bf16.msra.mxu0 0
    %466 = vmatprep.subr.bf16.mxu0 0
    %467 = vmatpush1.bf16.msra.mxu0 0
    %468 = vmatprep.mubr.bf16.mxu0 0
    %469 = vmatmul.mubr.bf16.gmra.mrb[0].mxu0 %v434
    %v470 = vpop.f32.mrb[0].mxu0
    %v471 = vadd.f32 %v307, %v470
    %v472 = vpop.f32.mrb[0].mxu0
    %v473 = vadd.f32 %v309, %v472
    %v474 = vpop.f32.mrb[0].mxu0
    %v475 = vpop.f32.mrb[0].mxu0
    %476 = vdwg.mxu0
    %477 = vmatprep.subr.bf16.mxu0 %v419
    %478 = vmatpush1.bf16.msra.mxu0 %v418
    %479 = vmatprep.subr.bf16.mxu0 %v423
    %480 = vmatpush1.bf16.msra.mxu0 %v422
    %481 = vmatprep.subr.bf16.mxu0 0
    %482 = vmatpush1.bf16.msra.mxu0 0
    %483 = vmatprep.subr.bf16.mxu0 0
    %484 = vmatpush1.bf16.msra.mxu0 0
    %485 = vmatprep.subr.bf16.mxu0 0
    %486 = vmatpush1.bf16.msra.mxu0 0
    %487 = vmatprep.subr.bf16.mxu0 0
    %488 = vmatpush1.bf16.msra.mxu0 0
    %489 = vmatprep.subr.bf16.mxu0 0
    %490 = vmatpush1.bf16.msra.mxu0 0
    %491 = vmatprep.subr.bf16.mxu0 0
    %492 = vmatpush1.bf16.msra.mxu0 0
    %493 = vmatprep.subr.bf16.mxu0 0
    %494 = vmatpush1.bf16.msra.mxu0 0
    %495 = vmatprep.subr.bf16.mxu0 0
    %496 = vmatpush1.bf16.msra.mxu0 0
    %497 = vmatprep.subr.bf16.mxu0 0
    %498 = vmatpush1.bf16.msra.mxu0 0
    %499 = vmatprep.subr.bf16.mxu0 0
    %500 = vmatpush1.bf16.msra.mxu0 0
    %501 = vmatprep.subr.bf16.mxu0 0
    %502 = vmatpush1.bf16.msra.mxu0 0
    %503 = vmatprep.subr.bf16.mxu0 0
    %504 = vmatpush1.bf16.msra.mxu0 0
    %505 = vmatprep.subr.bf16.mxu0 0
    %506 = vmatpush1.bf16.msra.mxu0 0
    %507 = vmatprep.subr.bf16.mxu0 0
    %508 = vmatpush1.bf16.msra.mxu0 0
    %509 = vmatprep.mubr.bf16.mxu0 0
    %510 = vmatmul.mubr.bf16.gmra.mrb[0].mxu0 %v434
    %v511 = vpop.f32.mrb[0].mxu0
    %v512 = vadd.f32 %v348, %v511
    %v513 = vpop.f32.mrb[0].mxu0
    %v514 = vadd.f32 %v350, %v513
    %v515 = vpop.f32.mrb[0].mxu0
    %v516 = vpop.f32.mrb[0].mxu0
    %517 = vdwg.mxu0
    %v519 = vlaneseq
    %v520 = vshrl.u32 %v519, 7
    %v521 = vsub.s32 0, %v520
    %v522 = vrot.slane %v54, %v521
    %v523 = vlaneseq
    %v524 = vshrl.u32 %v523, 7
    %v525 = vsub.s32 1, %v524
    %v526 = vrot.slane %v54, %v525
    %v527 = vlaneseq
    %v528 = vshrl.u32 %v527, 7
    %v529 = vsub.s32 2, %v528
    %v530 = vrot.slane %v54, %v529
    %v531 = vlaneseq
    %v532 = vshrl.u32 %v531, 7
    %v533 = vsub.s32 3, %v532
    %v534 = vrot.slane %v54, %v533
    %v539 = vadd.f32 %v471, %v522
    %v540 = vadd.f32 %v473, %v526
    %v541 = vadd.f32 %v512, %v530
    %v542 = vadd.f32 %v514, %v534
    %v543 = vxor.u32 %v539, 2147483648
    %v544 = vmul.f32 %v543, 1.442695
    %v545 = vpow.pop %v544
    %v546 = vadd.f32 %v545, 1.0
    %v547 = vrcp.pop %v546
    %v548 = vmul.f32 1.0, %v547
    %v549 = vxor.u32 %v540, 2147483648
    %v550 = vmul.f32 %v549, 1.442695
    %v551 = vpow.pop %v550
    %v552 = vadd.f32 %v551, 1.0
    %v553 = vrcp.pop %v552
    %v554 = vmul.f32 1.0, %v553
    %v555 = vtanh.pop %v541
    %v556 = vxor.u32 %v542, 2147483648
    %v557 = vmul.f32 %v556, 1.442695
    %v558 = vpow.pop %v557
    %v559 = vadd.f32 %v558, 1.0
    %v560 = vrcp.pop %v559
    %v561 = vmul.f32 1.0, %v560
    %v562 = vmul.f32 %v554, %v53
    %v563 = vmul.f32 %v548, %v555
    %v564 = vadd.f32 %v562, %v563
    %v565 = vtanh.pop %v564
    %v566 = vmul.f32 %v561, %v565
    %v568 = vcombine.high %v566, %v566
    %v570 = vunpack.c.l.s4 1966171168
    %v571 = vunpack.c.0.s8 %v570
    %v572 = vlaneseq
    %v573 = vshrl.u32 %v572, 7
    %v574 = vsub.s32 %v571, %v573
    %v575 = vrot.slane %v566, %v574
    %v577 = vunpack.c.l.s4 1966171168
    %v578 = vunpack.c.0.s8 %v577
    %v579 = vlaneseq
    %v580 = vshrl.u32 %v579, 7
    %v581 = vsub.s32 %v578, %v580
    %v582 = vrot.slane %v568, %v581
    %v583 = vcombine.high %v575, %v575
    %v584 = vcombine.high %v582, %v582
    %v586 = vunpack.c.l.s4 1966171168
    %v587 = vunpack.c.0.s8 %v586
    %v588 = vlaneseq
    %v589 = vshrl.u32 %v588, 7
    %v590 = vsub.s32 %v587, %v589
    %v591 = vrot.slane %v575, %v590
    %v593 = vunpack.c.l.s4 1966171168
    %v594 = vunpack.c.0.s8 %v593
    %v595 = vlaneseq
    %v596 = vshrl.u32 %v595, 7
    %v597 = vsub.s32 %v594, %v596
    %v598 = vrot.slane %v582, %v597
    %v600 = vunpack.c.l.s4 1966171168
    %v601 = vunpack.c.0.s8 %v600
    %v602 = vlaneseq
    %v603 = vshrl.u32 %v602, 7
    %v604 = vsub.s32 %v601, %v603
    %v605 = vrot.slane %v583, %v604
    %v607 = vunpack.c.l.s4 1966171168
    %v608 = vunpack.c.0.s8 %v607
    %v609 = vlaneseq
    %v610 = vshrl.u32 %v609, 7
    %v611 = vsub.s32 %v608, %v610
    %v612 = vrot.slane %v584, %v611
    %v613 = vcombine.high %v591, %v591
    %v614 = vcombine.high %v598, %v598
    %v615 = vcombine.high %v605, %v605
    %v616 = vcombine.high %v612, %v612
    %625 = vst [vmem:[#allocation8] sm:$0x1] %v591
    %626 = vst [vmem:[#allocation8 + $0x8] sm:$0x1] %v605
    %627 = vst [vmem:[#allocation8 + $0x10] sm:$0x1] %v613
    %628 = vst [vmem:[#allocation8 + $0x18] sm:$0x1] %v615
    %629 = vst [vmem:[#allocation8 + $0x20] sm:$0x1] %v598
    %630 = vst [vmem:[#allocation8 + $0x28] sm:$0x1] %v612
    %631 = vst [vmem:[#allocation8 + $0x30] sm:$0x1] %v614
    %632 = vst [vmem:[#allocation8 + $0x38] sm:$0x1] %v616
    %v633 = vld [vmem:[%s0 + $0x1] sm:$0x1]
    %v634 = vld [vmem:[%s0 + $0x9] sm:$0x1]
    %v635 = vld [vmem:[%s0 + $0x11] sm:$0x1]
    %v636 = vld [vmem:[%s0 + $0x19] sm:$0x1]
    %v637 = vld [vmem:[%s0 + $0x21] sm:$0x1]
    %v638 = vld [vmem:[%s0 + $0x29] sm:$0x1]
    %v639 = vld [vmem:[%s0 + $0x31] sm:$0x1]
    %v640 = vld [vmem:[%s0 + $0x39] sm:$0x1]
    %v641 = vpack.c.bf16 %v633, %v633
    %v642 = vpack.c.bf16 %v634, %v634
    %v643 = vpack.c.bf16 %v635, %v635
    %v644 = vpack.c.bf16 %v636, %v636
    %v645 = vpack.c.bf16 %v637, %v637
    %v646 = vpack.c.bf16 %v638, %v638
    %v647 = vpack.c.bf16 %v639, %v639
    %v648 = vpack.c.bf16 %v640, %v640
    %v649 = vld [vmem:[%s1] sm:$0xff]
    %v650 = vld [vmem:[%s1 + $0x8] sm:$0xff]
    %v651 = vld [vmem:[%s1 + $0x10] sm:$0xff]
    %v652 = vld [vmem:[%s1 + $0x18] sm:$0xff]
    %v653 = vld [vmem:[%s1 + $0x20] sm:$0xff]
    %v654 = vld [vmem:[%s1 + $0x28] sm:$0xff]
    %v655 = vld [vmem:[%s1 + $0x30] sm:$0xff]
    %v656 = vld [vmem:[%s1 + $0x38] sm:$0xff]
    %v657 = vpack.c.bf16 %v566, %v566
    %v658 = vld [vmem:[#allocation5] sm:$0xff]
    %v659 = vld [vmem:[#allocation5 + $0x8] sm:$0xff]
    %v660 = vld [vmem:[#allocation5 + $0x10] sm:$0xff]
    %v661 = vld [vmem:[#allocation5 + $0x18] sm:$0xff]
    %v662 = vld [vmem:[#allocation5 + $0x20] sm:$0xff]
    %v663 = vld [vmem:[#allocation5 + $0x28] sm:$0xff]
    %v664 = vld [vmem:[#allocation5 + $0x30] sm:$0xff]
    %v665 = vld [vmem:[#allocation5 + $0x38] sm:$0xff]
    %v666 = vld [vmem:[#allocation5 + $0x40] sm:$0xff]
    %v667 = vld [vmem:[#allocation5 + $0x48] sm:$0xff]
    %v668 = vld [vmem:[#allocation5 + $0x50] sm:$0xff]
    %v669 = vld [vmem:[#allocation5 + $0x58] sm:$0xff]
    %v670 = vld [vmem:[#allocation5 + $0x60] sm:$0xff]
    %v671 = vld [vmem:[#allocation5 + $0x68] sm:$0xff]
    %v672 = vld [vmem:[#allocation5 + $0x70] sm:$0xff]
    %v673 = vld [vmem:[#allocation5 + $0x78] sm:$0xff]
    %v674 = vld [vmem:[#allocation5 + $0x80] sm:$0xff]
    %v675 = vld [vmem:[#allocation5 + $0x88] sm:$0xff]
    %v676 = vld [vmem:[#allocation5 + $0x90] sm:$0xff]
    %v677 = vld [vmem:[#allocation5 + $0x98] sm:$0xff]
    %v678 = vld [vmem:[#allocation5 + $0xa0] sm:$0xff]
    %v679 = vld [vmem:[#allocation5 + $0xa8] sm:$0xff]
    %v680 = vld [vmem:[#allocation5 + $0xb0] sm:$0xff]
    %v681 = vld [vmem:[#allocation5 + $0xb8] sm:$0xff]
    %v682 = vld [vmem:[#allocation5 + $0xc0] sm:$0xff]
    %v683 = vld [vmem:[#allocation5 + $0xc8] sm:$0xff]
    %v684 = vld [vmem:[#allocation5 + $0xd0] sm:$0xff]
    %v685 = vld [vmem:[#allocation5 + $0xd8] sm:$0xff]
    %v686 = vld [vmem:[#allocation5 + $0xe0] sm:$0xff]
    %v687 = vld [vmem:[#allocation5 + $0xe8] sm:$0xff]
    %v688 = vld [vmem:[#allocation5 + $0xf0] sm:$0xff]
    %v689 = vld [vmem:[#allocation5 + $0xf8] sm:$0xff]
    %v722 = vunpack.c.l.b16 %v658
    %v723 = vunpack.c.h.b16 %v658
    %v724 = vunpack.c.l.b16 %v659
    %v725 = vunpack.c.h.b16 %v659
    %v726 = vunpack.c.l.b16 %v660
    %v727 = vunpack.c.h.b16 %v660
    %v728 = vunpack.c.l.b16 %v661
    %v729 = vunpack.c.h.b16 %v661
    %v730 = vunpack.c.l.b16 %v662
    %v731 = vunpack.c.h.b16 %v662
    %v732 = vunpack.c.l.b16 %v663
    %v733 = vunpack.c.h.b16 %v663
    %v734 = vunpack.c.l.b16 %v664
    %v735 = vunpack.c.h.b16 %v664
    %v736 = vunpack.c.l.b16 %v665
    %v737 = vunpack.c.h.b16 %v665
    %v738 = vunpack.c.l.b16 %v666
    %v739 = vunpack.c.h.b16 %v666
    %v740 = vunpack.c.l.b16 %v667
    %v741 = vunpack.c.h.b16 %v667
    %v742 = vunpack.c.l.b16 %v668
    %v743 = vunpack.c.h.b16 %v668
    %v744 = vunpack.c.l.b16 %v669
    %v745 = vunpack.c.h.b16 %v669
    %v746 = vunpack.c.l.b16 %v670
    %v747 = vunpack.c.h.b16 %v670
    %v748 = vunpack.c.l.b16 %v671
    %v749 = vunpack.c.h.b16 %v671
    %v750 = vunpack.c.l.b16 %v672
    %v751 = vunpack.c.h.b16 %v672
    %v752 = vunpack.c.l.b16 %v673
    %v753 = vunpack.c.h.b16 %v673
    %v754 = vunpack.c.l.b16 %v674
    %v755 = vunpack.c.h.b16 %v674
    %v756 = vunpack.c.l.b16 %v675
    %v757 = vunpack.c.h.b16 %v675
    %v758 = vunpack.c.l.b16 %v676
    %v759 = vunpack.c.h.b16 %v676
    %v760 = vunpack.c.l.b16 %v677
    %v761 = vunpack.c.h.b16 %v677
    %v762 = vunpack.c.l.b16 %v678
    %v763 = vunpack.c.h.b16 %v678
    %v764 = vunpack.c.l.b16 %v679
    %v765 = vunpack.c.h.b16 %v679
    %v766 = vunpack.c.l.b16 %v680
    %v767 = vunpack.c.h.b16 %v680
    %v768 = vunpack.c.l.b16 %v681
    %v769 = vunpack.c.h.b16 %v681
    %v770 = vunpack.c.l.b16 %v682
    %v771 = vunpack.c.h.b16 %v682
    %v772 = vunpack.c.l.b16 %v683
    %v773 = vunpack.c.h.b16 %v683
    %v774 = vunpack.c.l.b16 %v684
    %v775 = vunpack.c.h.b16 %v684
    %v776 = vunpack.c.l.b16 %v685
    %v777 = vunpack.c.h.b16 %v685
    %v778 = vunpack.c.l.b16 %v686
    %v779 = vunpack.c.h.b16 %v686
    %v780 = vunpack.c.l.b16 %v687
    %v781 = vunpack.c.h.b16 %v687
    %v782 = vunpack.c.l.b16 %v688
    %v783 = vunpack.c.h.b16 %v688
    %v784 = vunpack.c.l.b16 %v689
    %v785 = vunpack.c.h.b16 %v689
    %v786 = vpack.c.b16 %v726, %v722
    %v787 = vpack.c.b16 %v727, %v723
    %v788 = vpack.c.b16 %v728, %v724
    %v789 = vpack.c.b16 %v729, %v725
    %v790 = vpack.c.b16 %v734, %v730
    %v791 = vpack.c.b16 %v735, %v731
    %v792 = vpack.c.b16 %v736, %v732
    %v793 = vpack.c.b16 %v737, %v733
    %v794 = vpack.c.b16 %v742, %v738
    %v795 = vpack.c.b16 %v743, %v739
    %v796 = vpack.c.b16 %v744, %v740
    %v797 = vpack.c.b16 %v745, %v741
    %v798 = vpack.c.b16 %v750, %v746
    %v799 = vpack.c.b16 %v751, %v747
    %v800 = vpack.c.b16 %v752, %v748
    %v801 = vpack.c.b16 %v753, %v749
    %v802 = vpack.c.b16 %v758, %v754
    %v803 = vpack.c.b16 %v759, %v755
    %v804 = vpack.c.b16 %v760, %v756
    %v805 = vpack.c.b16 %v761, %v757
    %v806 = vpack.c.b16 %v766, %v762
    %v807 = vpack.c.b16 %v767, %v763
    %v808 = vpack.c.b16 %v768, %v764
    %v809 = vpack.c.b16 %v769, %v765
    %v810 = vpack.c.b16 %v774, %v770
    %v811 = vpack.c.b16 %v775, %v771
    %v812 = vpack.c.b16 %v776, %v772
    %v813 = vpack.c.b16 %v777, %v773
    %v814 = vpack.c.b16 %v782, %v778
    %v815 = vpack.c.b16 %v783, %v779
    %v816 = vpack.c.b16 %v784, %v780
    %v817 = vpack.c.b16 %v785, %v781
    %850 = vmatprep.subr.bf16.mxu0 %v787
    %851 = vmatpush1.bf16.msra.mxu0 %v786
    %852 = vmatprep.subr.bf16.mxu0 %v791
    %853 = vmatpush1.bf16.msra.mxu0 %v790
    %854 = vmatprep.subr.bf16.mxu0 %v795
    %855 = vmatpush1.bf16.msra.mxu0 %v794
    %856 = vmatprep.subr.bf16.mxu0 %v799
    %857 = vmatpush1.bf16.msra.mxu0 %v798
    %858 = vmatprep.subr.bf16.mxu0 %v803
    %859 = vmatpush1.bf16.msra.mxu0 %v802
    %860 = vmatprep.subr.bf16.mxu0 %v807
    %861 = vmatpush1.bf16.msra.mxu0 %v806
    %862 = vmatprep.subr.bf16.mxu0 %v811
    %863 = vmatpush1.bf16.msra.mxu0 %v810
    %864 = vmatprep.subr.bf16.mxu0 %v815
    %865 = vmatpush1.bf16.msra.mxu0 %v814
    %866 = vmatprep.subr.bf16.mxu0 0
    %867 = vmatpush1.bf16.msra.mxu0 0
    %868 = vmatprep.subr.bf16.mxu0 0
    %869 = vmatpush1.bf16.msra.mxu0 0
    %870 = vmatprep.subr.bf16.mxu0 0
    %871 = vmatpush1.bf16.msra.mxu0 0
    %872 = vmatprep.subr.bf16.mxu0 0
    %873 = vmatpush1.bf16.msra.mxu0 0
    %874 = vmatprep.subr.bf16.mxu0 0
    %875 = vmatpush1.bf16.msra.mxu0 0
    %876 = vmatprep.subr.bf16.mxu0 0
    %877 = vmatpush1.bf16.msra.mxu0 0
    %878 = vmatprep.subr.bf16.mxu0 0
    %879 = vmatpush1.bf16.msra.mxu0 0
    %880 = vmatprep.subr.bf16.mxu0 0
    %881 = vmatpush1.bf16.msra.mxu0 0
    %882 = vmatprep.mubr.bf16.mxu0 0
    %883 = vmatmul.mubr.bf16.gmra.mrb[0].mxu0 %v657
    %v884 = vpop.f32.mrb[0].mxu0
    %v885 = vadd.f32 0.0, %v884
    %v886 = vpop.f32.mrb[0].mxu0
    %v887 = vadd.f32 0.0, %v886
    %v888 = vpop.f32.mrb[0].mxu0
    %v889 = vpop.f32.mrb[0].mxu0
    %890 = vdwg.mxu0
    %891 = vmatprep.subr.bf16.mxu0 %v789
    %892 = vmatpush1.bf16.msra.mxu0 %v788
    %893 = vmatprep.subr.bf16.mxu0 %v793
    %894 = vmatpush1.bf16.msra.mxu0 %v792
    %895 = vmatprep.subr.bf16.mxu0 %v797
    %896 = vmatpush1.bf16.msra.mxu0 %v796
    %897 = vmatprep.subr.bf16.mxu0 %v801
    %898 = vmatpush1.bf16.msra.mxu0 %v800
    %899 = vmatprep.subr.bf16.mxu0 %v805
    %900 = vmatpush1.bf16.msra.mxu0 %v804
    %901 = vmatprep.subr.bf16.mxu0 %v809
    %902 = vmatpush1.bf16.msra.mxu0 %v808
    %903 = vmatprep.subr.bf16.mxu0 %v813
    %904 = vmatpush1.bf16.msra.mxu0 %v812
    %905 = vmatprep.subr.bf16.mxu0 %v817
    %906 = vmatpush1.bf16.msra.mxu0 %v816
    %907 = vmatprep.subr.bf16.mxu0 0
    %908 = vmatpush1.bf16.msra.mxu0 0
    %909 = vmatprep.subr.bf16.mxu0 0
    %910 = vmatpush1.bf16.msra.mxu0 0
    %911 = vmatprep.subr.bf16.mxu0 0
    %912 = vmatpush1.bf16.msra.mxu0 0
    %913 = vmatprep.subr.bf16.mxu0 0
    %914 = vmatpush1.bf16.msra.mxu0 0
    %915 = vmatprep.subr.bf16.mxu0 0
    %916 = vmatpush1.bf16.msra.mxu0 0
    %917 = vmatprep.subr.bf16.mxu0 0
    %918 = vmatpush1.bf16.msra.mxu0 0
    %919 = vmatprep.subr.bf16.mxu0 0
    %920 = vmatpush1.bf16.msra.mxu0 0
    %921 = vmatprep.subr.bf16.mxu0 0
    %922 = vmatpush1.bf16.msra.mxu0 0
    %923 = vmatprep.mubr.bf16.mxu0 0
    %924 = vmatmul.mubr.bf16.gmra.mrb[0].mxu0 %v657
    %v925 = vpop.f32.mrb[0].mxu0
    %v926 = vadd.f32 0.0, %v925
    %v927 = vpop.f32.mrb[0].mxu0
    %v928 = vadd.f32 0.0, %v927
    %v929 = vpop.f32.mrb[0].mxu0
    %v930 = vpop.f32.mrb[0].mxu0
    %931 = vdwg.mxu0
    %v940 = vunpack.c.l.b16 %v641
    %v941 = vunpack.c.l.b16 %v642
    %v942 = vunpack.c.l.b16 %v643
    %v943 = vunpack.c.l.b16 %v644
    %v944 = vunpack.c.l.b16 %v645
    %v945 = vunpack.c.l.b16 %v646
    %v946 = vunpack.c.l.b16 %v647
    %v947 = vunpack.c.l.b16 %v648
    %v948 = vrot.slane %v941, 7
    %v949 = vsel %vm371, %v948, %v940
    %v950 = vrot.slane %v942, 6
    %v951 = vsel %vm374, %v950, %v949
    %v952 = vrot.slane %v943, 5
    %v953 = vsel %vm377, %v952, %v951
    %v954 = vrot.slane %v944, 4
    %v955 = vsel %vm380, %v954, %v953
    %v956 = vrot.slane %v945, 3
    %v957 = vsel %vm383, %v956, %v955
    %v958 = vrot.slane %v946, 2
    %v959 = vsel %vm386, %v958, %v957
    %v960 = vrot.slane %v947, 1
    %v961 = vsel %vm389, %v960, %v959
    %v962 = vpack.c.b16 %v961, %v961
    %v971 = vunpack.c.l.b16 %v649
    %v972 = vunpack.c.h.b16 %v649
    %v973 = vunpack.c.l.b16 %v650
    %v974 = vunpack.c.h.b16 %v650
    %v975 = vunpack.c.l.b16 %v651
    %v976 = vunpack.c.h.b16 %v651
    %v977 = vunpack.c.l.b16 %v652
    %v978 = vunpack.c.h.b16 %v652
    %v979 = vunpack.c.l.b16 %v653
    %v980 = vunpack.c.h.b16 %v653
    %v981 = vunpack.c.l.b16 %v654
    %v982 = vunpack.c.h.b16 %v654
    %v983 = vunpack.c.l.b16 %v655
    %v984 = vunpack.c.h.b16 %v655
    %v985 = vunpack.c.l.b16 %v656
    %v986 = vunpack.c.h.b16 %v656
    %v987 = vpack.c.b16 %v975, %v971
    %v988 = vpack.c.b16 %v976, %v972
    %v989 = vpack.c.b16 %v977, %v973
    %v990 = vpack.c.b16 %v978, %v974
    %v991 = vpack.c.b16 %v983, %v979
    %v992 = vpack.c.b16 %v984, %v980
    %v993 = vpack.c.b16 %v985, %v981
    %v994 = vpack.c.b16 %v986, %v982
    %v1004 = vsel %vm432, %v962, 0
    %1006 = vmatprep.subr.bf16.mxu0 %v988
    %1007 = vmatpush1.bf16.msra.mxu0 %v987
    %1008 = vmatprep.subr.bf16.mxu0 %v992
    %1009 = vmatpush1.bf16.msra.mxu0 %v991
    %1010 = vmatprep.subr.bf16.mxu0 0
    %1011 = vmatpush1.bf16.msra.mxu0 0
    %1012 = vmatprep.subr.bf16.mxu0 0
    %1013 = vmatpush1.bf16.msra.mxu0 0
    %1014 = vmatprep.subr.bf16.mxu0 0
    %1015 = vmatpush1.bf16.msra.mxu0 0
    %1016 = vmatprep.subr.bf16.mxu0 0
    %1017 = vmatpush1.bf16.msra.mxu0 0
    %1018 = vmatprep.subr.bf16.mxu0 0
    %1019 = vmatpush1.bf16.msra.mxu0 0
    %1020 = vmatprep.subr.bf16.mxu0 0
    %1021 = vmatpush1.bf16.msra.mxu0 0
    %1022 = vmatprep.subr.bf16.mxu0 0
    %1023 = vmatpush1.bf16.msra.mxu0 0
    %1024 = vmatprep.subr.bf16.mxu0 0
    %1025 = vmatpush1.bf16.msra.mxu0 0
    %1026 = vmatprep.subr.bf16.mxu0 0
    %1027 = vmatpush1.bf16.msra.mxu0 0
    %1028 = vmatprep.subr.bf16.mxu0 0
    %1029 = vmatpush1.bf16.msra.mxu0 0
    %1030 = vmatprep.subr.bf16.mxu0 0
    %1031 = vmatpush1.bf16.msra.mxu0 0
    %1032 = vmatprep.subr.bf16.mxu0 0
    %1033 = vmatpush1.bf16.msra.mxu0 0
    %1034 = vmatprep.subr.bf16.mxu0 0
    %1035 = vmatpush1.bf16.msra.mxu0 0
    %1036 = vmatprep.subr.bf16.mxu0 0
    %1037 = vmatpush1.bf16.msra.mxu0 0
    %1038 = vmatprep.mubr.bf16.mxu0 0
    %1039 = vmatmul.mubr.bf16.gmra.mrb[0].mxu0 %v1004
    %v1040 = vpop.f32.mrb[0].mxu0
    %v1041 = vadd.f32 %v885, %v1040
    %v1042 = vpop.f32.mrb[0].mxu0
    %v1043 = vadd.f32 %v887, %v1042
    %v1044 = vpop.f32.mrb[0].mxu0
    %v1045 = vpop.f32.mrb[0].mxu0
    %1046 = vdwg.mxu0
    %1047 = vmatprep.subr.bf16.mxu0 %v990
    %1048 = vmatpush1.bf16.msra.mxu0 %v989
    %1049 = vmatprep.subr.bf16.mxu0 %v994
    %1050 = vmatpush1.bf16.msra.mxu0 %v993
    %1051 = vmatprep.subr.bf16.mxu0 0
    %1052 = vmatpush1.bf16.msra.mxu0 0
    %1053 = vmatprep.subr.bf16.mxu0 0
    %1054 = vmatpush1.bf16.msra.mxu0 0
    %1055 = vmatprep.subr.bf16.mxu0 0
    %1056 = vmatpush1.bf16.msra.mxu0 0
    %1057 = vmatprep.subr.bf16.mxu0 0
    %1058 = vmatpush1.bf16.msra.mxu0 0
    %1059 = vmatprep.subr.bf16.mxu0 0
    %1060 = vmatpush1.bf16.msra.mxu0 0
    %1061 = vmatprep.subr.bf16.mxu0 0
    %1062 = vmatpush1.bf16.msra.mxu0 0
    %1063 = vmatprep.subr.bf16.mxu0 0
    %1064 = vmatpush1.bf16.msra.mxu0 0
    %1065 = vmatprep.subr.bf16.mxu0 0
    %1066 = vmatpush1.bf16.msra.mxu0 0
    %1067 = vmatprep.subr.bf16.mxu0 0
    %1068 = vmatpush1.bf16.msra.mxu0 0
    %1069 = vmatprep.subr.bf16.mxu0 0
    %1070 = vmatpush1.bf16.msra.mxu0 0
    %1071 = vmatprep.subr.bf16.mxu0 0
    %1072 = vmatpush1.bf16.msra.mxu0 0
    %1073 = vmatprep.subr.bf16.mxu0 0
    %1074 = vmatpush1.bf16.msra.mxu0 0
    %1075 = vmatprep.subr.bf16.mxu0 0
    %1076 = vmatpush1.bf16.msra.mxu0 0
    %1077 = vmatprep.subr.bf16.mxu0 0
    %1078 = vmatpush1.bf16.msra.mxu0 0
    %1079 = vmatprep.mubr.bf16.mxu0 0
    %1080 = vmatmul.mubr.bf16.gmra.mrb[0].mxu0 %v1004
    %v1081 = vpop.f32.mrb[0].mxu0
    %v1082 = vadd.f32 %v926, %v1081
    %v1083 = vpop.f32.mrb[0].mxu0
    %v1084 = vadd.f32 %v928, %v1083
    %v1085 = vpop.f32.mrb[0].mxu0
    %v1086 = vpop.f32.mrb[0].mxu0
    %1087 = vdwg.mxu0
    %v1088 = vadd.f32 %v1041, %v522
    %v1089 = vadd.f32 %v1043, %v526
    %v1090 = vadd.f32 %v1082, %v530
    %v1091 = vadd.f32 %v1084, %v534
    %v1092 = vxor.u32 %v1088, 2147483648
    %v1093 = vmul.f32 %v1092, 1.442695
    %v1094 = vpow.pop %v1093
    %v1095 = vadd.f32 %v1094, 1.0
    %v1096 = vrcp.pop %v1095
    %v1097 = vmul.f32 1.0, %v1096
    %v1098 = vxor.u32 %v1089, 2147483648
    %v1099 = vmul.f32 %v1098, 1.442695
    %v1100 = vpow.pop %v1099
    %v1101 = vadd.f32 %v1100, 1.0
    %v1102 = vrcp.pop %v1101
    %v1103 = vmul.f32 1.0, %v1102
    %v1104 = vtanh.pop %v1090
    %v1105 = vxor.u32 %v1091, 2147483648
    %v1106 = vmul.f32 %v1105, 1.442695
    %v1107 = vpow.pop %v1106
    %v1108 = vadd.f32 %v1107, 1.0
    %v1109 = vrcp.pop %v1108
    %v1110 = vmul.f32 1.0, %v1109
    %v1111 = vmul.f32 %v1103, %v564
    %v1112 = vmul.f32 %v1097, %v1104
    %v1113 = vadd.f32 %v1111, %v1112
    %v1114 = vtanh.pop %v1113
    %v1115 = vmul.f32 %v1110, %v1114
    %v1117 = vcombine.high %v1115, %v1115
    %v1119 = vunpack.c.l.s4 1966171168
    %v1120 = vunpack.c.0.s8 %v1119
    %v1121 = vlaneseq
    %v1122 = vshrl.u32 %v1121, 7
    %v1123 = vsub.s32 %v1120, %v1122
    %v1124 = vrot.slane %v1115, %v1123
    %v1126 = vunpack.c.l.s4 1966171168
    %v1127 = vunpack.c.0.s8 %v1126
    %v1128 = vlaneseq
    %v1129 = vshrl.u32 %v1128, 7
    %v1130 = vsub.s32 %v1127, %v1129
    %v1131 = vrot.slane %v1117, %v1130
    %v1132 = vcombine.high %v1124, %v1124
    %v1133 = vcombine.high %v1131, %v1131
    %v1135 = vunpack.c.l.s4 1966171168
    %v1136 = vunpack.c.0.s8 %v1135
    %v1137 = vlaneseq
    %v1138 = vshrl.u32 %v1137, 7
    %v1139 = vsub.s32 %v1136, %v1138
    %v1140 = vrot.slane %v1124, %v1139
    %v1142 = vunpack.c.l.s4 1966171168
    %v1143 = vunpack.c.0.s8 %v1142
    %v1144 = vlaneseq
    %v1145 = vshrl.u32 %v1144, 7
    %v1146 = vsub.s32 %v1143, %v1145
    %v1147 = vrot.slane %v1131, %v1146
    %v1149 = vunpack.c.l.s4 1966171168
    %v1150 = vunpack.c.0.s8 %v1149
    %v1151 = vlaneseq
    %v1152 = vshrl.u32 %v1151, 7
    %v1153 = vsub.s32 %v1150, %v1152
    %v1154 = vrot.slane %v1132, %v1153
    %v1156 = vunpack.c.l.s4 1966171168
    %v1157 = vunpack.c.0.s8 %v1156
    %v1158 = vlaneseq
    %v1159 = vshrl.u32 %v1158, 7
    %v1160 = vsub.s32 %v1157, %v1159
    %v1161 = vrot.slane %v1133, %v1160
    %v1162 = vcombine.high %v1140, %v1140
    %v1163 = vcombine.high %v1147, %v1147
    %v1164 = vcombine.high %v1154, %v1154
    %v1165 = vcombine.high %v1161, %v1161
    %1174 = vst [vmem:[#allocation8 + $0x1] sm:$0x1] %v1140
    %1175 = vst [vmem:[#allocation8 + $0x9] sm:$0x1] %v1154
    %1176 = vst [vmem:[#allocation8 + $0x11] sm:$0x1] %v1162
    %1177 = vst [vmem:[#allocation8 + $0x19] sm:$0x1] %v1164
    %1178 = vst [vmem:[#allocation8 + $0x21] sm:$0x1] %v1147
    %1179 = vst [vmem:[#allocation8 + $0x29] sm:$0x1] %v1161
    %1180 = vst [vmem:[#allocation8 + $0x31] sm:$0x1] %v1163
    %1181 = vst [vmem:[#allocation8 + $0x39] sm:$0x1] %v1165
    %v1182 = vld [vmem:[%s0 + $0x2] sm:$0x1]
    %v1183 = vld [vmem:[%s0 + $0xa] sm:$0x1]
    %v1184 = vld [vmem:[%s0 + $0x12] sm:$0x1]
    %v1185 = vld [vmem:[%s0 + $0x1a] sm:$0x1]
    %v1186 = vld [vmem:[%s0 + $0x22] sm:$0x1]
    %v1187 = vld [vmem:[%s0 + $0x2a] sm:$0x1]
    %v1188 = vld [vmem:[%s0 + $0x32] sm:$0x1]
    %v1189 = vld [vmem:[%s0 + $0x3a] sm:$0x1]
    %v1190 = vpack.c.bf16 %v1182, %v1182
    %v1191 = vpack.c.bf16 %v1183, %v1183
    %v1192 = vpack.c.bf16 %v1184, %v1184
    %v1193 = vpack.c.bf16 %v1185, %v1185
    %v1194 = vpack.c.bf16 %v1186, %v1186
    %v1195 = vpack.c.bf16 %v1187, %v1187
    %v1196 = vpack.c.bf16 %v1188, %v1188
    %v1197 = vpack.c.bf16 %v1189, %v1189
    %v1198 = vld [vmem:[%s1] sm:$0xff]
    %v1199 = vld [vmem:[%s1 + $0x8] sm:$0xff]
    %v1200 = vld [vmem:[%s1 + $0x10] sm:$0xff]
    %v1201 = vld [vmem:[%s1 + $0x18] sm:$0xff]
    %v1202 = vld [vmem:[%s1 + $0x20] sm:$0xff]
    %v1203 = vld [vmem:[%s1 + $0x28] sm:$0xff]
    %v1204 = vld [vmem:[%s1 + $0x30] sm:$0xff]
    %v1205 = vld [vmem:[%s1 + $0x38] sm:$0xff]
    %v1206 = vpack.c.bf16 %v1115, %v1115
    %v1207 = vld [vmem:[#allocation5] sm:$0xff]
    %v1208 = vld [vmem:[#allocation5 + $0x8] sm:$0xff]
    %v1209 = vld [vmem:[#allocation5 + $0x10] sm:$0xff]
    %v1210 = vld [vmem:[#allocation5 + $0x18] sm:$0xff]
    %v1211 = vld [vmem:[#allocation5 + $0x20] sm:$0xff]
    %v1212 = vld [vmem:[#allocation5 + $0x28] sm:$0xff]
    %v1213 = vld [vmem:[#allocation5 + $0x30] sm:$0xff]
    %v1214 = vld [vmem:[#allocation5 + $0x38] sm:$0xff]
    %v1215 = vld [vmem:[#allocation5 + $0x40] sm:$0xff]
    %v1216 = vld [vmem:[#allocation5 + $0x48] sm:$0xff]
    %v1217 = vld [vmem:[#allocation5 + $0x50] sm:$0xff]
    %v1218 = vld [vmem:[#allocation5 + $0x58] sm:$0xff]
    %v1219 = vld [vmem:[#allocation5 + $0x60] sm:$0xff]
    %v1220 = vld [vmem:[#allocation5 + $0x68] sm:$0xff]
    %v1221 = vld [vmem:[#allocation5 + $0x70] sm:$0xff]
    %v1222 = vld [vmem:[#allocation5 + $0x78] sm:$0xff]
    %v1223 = vld [vmem:[#allocation5 + $0x80] sm:$0xff]
    %v1224 = vld [vmem:[#allocation5 + $0x88] sm:$0xff]
    %v1225 = vld [vmem:[#allocation5 + $0x90] sm:$0xff]
    %v1226 = vld [vmem:[#allocation5 + $0x98] sm:$0xff]
    %v1227 = vld [vmem:[#allocation5 + $0xa0] sm:$0xff]
    %v1228 = vld [vmem:[#allocation5 + $0xa8] sm:$0xff]
    %v1229 = vld [vmem:[#allocation5 + $0xb0] sm:$0xff]
    %v1230 = vld [vmem:[#allocation5 + $0xb8] sm:$0xff]
    %v1231 = vld [vmem:[#allocation5 + $0xc0] sm:$0xff]
    %v1232 = vld [vmem:[#allocation5 + $0xc8] sm:$0xff]
    %v1233 = vld [vmem:[#allocation5 + $0xd0] sm:$0xff]
    %v1234 = vld [vmem:[#allocation5 + $0xd8] sm:$0xff]
    %v1235 = vld [vmem:[#allocation5 + $0xe0] sm:$0xff]
    %v1236 = vld [vmem:[#allocation5 + $0xe8] sm:$0xff]
    %v1237 = vld [vmem:[#allocation5 + $0xf0] sm:$0xff]
    %v1238 = vld [vmem:[#allocation5 + $0xf8] sm:$0xff]
    %v1271 = vunpack.c.l.b16 %v1207
    %v1272 = vunpack.c.h.b16 %v1207
    %v1273 = vunpack.c.l.b16 %v1208
    %v1274 = vunpack.c.h.b16 %v1208
    %v1275 = vunpack.c.l.b16 %v1209
    %v1276 = vunpack.c.h.b16 %v1209
    %v1277 = vunpack.c.l.b16 %v1210
    %v1278 = vunpack.c.h.b16 %v1210
    %v1279 = vunpack.c.l.b16 %v1211
    %v1280 = vunpack.c.h.b16 %v1211
    %v1281 = vunpack.c.l.b16 %v1212
    %v1282 = vunpack.c.h.b16 %v1212
    %v1283 = vunpack.c.l.b16 %v1213
    %v1284 = vunpack.c.h.b16 %v1213
    %v1285 = vunpack.c.l.b16 %v1214
    %v1286 = vunpack.c.h.b16 %v1214
    %v1287 = vunpack.c.l.b16 %v1215
    %v1288 = vunpack.c.h.b16 %v1215
    %v1289 = vunpack.c.l.b16 %v1216
    %v1290 = vunpack.c.h.b16 %v1216
    %v1291 = vunpack.c.l.b16 %v1217
    %v1292 = vunpack.c.h.b16 %v1217
    %v1293 = vunpack.c.l.b16 %v1218
    %v1294 = vunpack.c.h.b16 %v1218
    %v1295 = vunpack.c.l.b16 %v1219
    %v1296 = vunpack.c.h.b16 %v1219
    %v1297 = vunpack.c.l.b16 %v1220
    %v1298 = vunpack.c.h.b16 %v1220
    %v1299 = vunpack.c.l.b16 %v1221
    %v1300 = vunpack.c.h.b16 %v1221
    %v1301 = vunpack.c.l.b16 %v1222
    %v1302 = vunpack.c.h.b16 %v1222
    %v1303 = vunpack.c.l.b16 %v1223
    %v1304 = vunpack.c.h.b16 %v1223
    %v1305 = vunpack.c.l.b16 %v1224
    %v1306 = vunpack.c.h.b16 %v1224
    %v1307 = vunpack.c.l.b16 %v1225
    %v1308 = vunpack.c.h.b16 %v1225
    %v1309 = vunpack.c.l.b16 %v1226
    %v1310 = vunpack.c.h.b16 %v1226
    %v1311 = vunpack.c.l.b16 %v1227
    %v1312 = vunpack.c.h.b16 %v1227
    %v1313 = vunpack.c.l.b16 %v1228
    %v1314 = vunpack.c.h.b16 %v1228
    %v1315 = vunpack.c.l.b16 %v1229
    %v1316 = vunpack.c.h.b16 %v1229
    %v1317 = vunpack.c.l.b16 %v1230
    %v1318 = vunpack.c.h.b16 %v1230
    %v1319 = vunpack.c.l.b16 %v1231
    %v1320 = vunpack.c.h.b16 %v1231
    %v1321 = vunpack.c.l.b16 %v1232
    %v1322 = vunpack.c.h.b16 %v1232
    %v1323 = vunpack.c.l.b16 %v1233
    %v1324 = vunpack.c.h.b16 %v1233
    %v1325 = vunpack.c.l.b16 %v1234
    %v1326 = vunpack.c.h.b16 %v1234
    %v1327 = vunpack.c.l.b16 %v1235
    %v1328 = vunpack.c.h.b16 %v1235
    %v1329 = vunpack.c.l.b16 %v1236
    %v1330 = vunpack.c.h.b16 %v1236
    %v1331 = vunpack.c.l.b16 %v1237
    %v1332 = vunpack.c.h.b16 %v1237
    %v1333 = vunpack.c.l.b16 %v1238
    %v1334 = vunpack.c.h.b16 %v1238
    %v1335 = vpack.c.b16 %v1275, %v1271
    %v1336 = vpack.c.b16 %v1276, %v1272
    %v1337 = vpack.c.b16 %v1277, %v1273
    %v1338 = vpack.c.b16 %v1278, %v1274
    %v1339 = vpack.c.b16 %v1283, %v1279
    %v1340 = vpack.c.b16 %v1284, %v1280
    %v1341 = vpack.c.b16 %v1285, %v1281
    %v1342 = vpack.c.b16 %v1286, %v1282
    %v1343 = vpack.c.b16 %v1291, %v1287
    %v1344 = vpack.c.b16 %v1292, %v1288
    %v1345 = vpack.c.b16 %v1293, %v1289
    %v1346 = vpack.c.b16 %v1294, %v1290
    %v1347 = vpack.c.b16 %v1299, %v1295
    %v1348 = vpack.c.b16 %v1300, %v1296
    %v1349 = vpack.c.b16 %v1301, %v1297
    %v1350 = vpack.c.b16 %v1302, %v1298
    %v1351 = vpack.c.b16 %v1307, %v1303
    %v1352 = vpack.c.b16 %v1308, %v1304
    %v1353 = vpack.c.b16 %v1309, %v1305
    %v1354 = vpack.c.b16 %v1310, %v1306
    %v1355 = vpack.c.b16 %v1315, %v1311
    %v1356 = vpack.c.b16 %v1316, %v1312
    %v1357 = vpack.c.b16 %v1317, %v1313
    %v1358 = vpack.c.b16 %v1318, %v1314
    %v1359 = vpack.c.b16 %v1323, %v1319
    %v1360 = vpack.c.b16 %v1324, %v1320
    %v1361 = vpack.c.b16 %v1325, %v1321
    %v1362 = vpack.c.b16 %v1326, %v1322
    %v1363 = vpack.c.b16 %v1331, %v1327
    %v1364 = vpack.c.b16 %v1332, %v1328
    %v1365 = vpack.c.b16 %v1333, %v1329
    %v1366 = vpack.c.b16 %v1334, %v1330
    %1399 = vmatprep.subr.bf16.mxu0 %v1336
    %1400 = vmatpush1.bf16.msra.mxu0 %v1335
    %1401 = vmatprep.subr.bf16.mxu0 %v1340
    %1402 = vmatpush1.bf16.msra.mxu0 %v1339
    %1403 = vmatprep.subr.bf16.mxu0 %v1344
    %1404 = vmatpush1.bf16.msra.mxu0 %v1343
    %1405 = vmatprep.subr.bf16.mxu0 %v1348
    %1406 = vmatpush1.bf16.msra.mxu0 %v1347
    %1407 = vmatprep.subr.bf16.mxu0 %v1352
    %1408 = vmatpush1.bf16.msra.mxu0 %v1351
    %1409 = vmatprep.subr.bf16.mxu0 %v1356
    %1410 = vmatpush1.bf16.msra.mxu0 %v1355
    %1411 = vmatprep.subr.bf16.mxu0 %v1360
    %1412 = vmatpush1.bf16.msra.mxu0 %v1359
    %1413 = vmatprep.subr.bf16.mxu0 %v1364
    %1414 = vmatpush1.bf16.msra.mxu0 %v1363
    %1415 = vmatprep.subr.bf16.mxu0 0
    %1416 = vmatpush1.bf16.msra.mxu0 0
    %1417 = vmatprep.subr.bf16.mxu0 0
    %1418 = vmatpush1.bf16.msra.mxu0 0
    %1419 = vmatprep.subr.bf16.mxu0 0
    %1420 = vmatpush1.bf16.msra.mxu0 0
    %1421 = vmatprep.subr.bf16.mxu0 0
    %1422 = vmatpush1.bf16.msra.mxu0 0
    %1423 = vmatprep.subr.bf16.mxu0 0
    %1424 = vmatpush1.bf16.msra.mxu0 0
    %1425 = vmatprep.subr.bf16.mxu0 0
    %1426 = vmatpush1.bf16.msra.mxu0 0
    %1427 = vmatprep.subr.bf16.mxu0 0
    %1428 = vmatpush1.bf16.msra.mxu0 0
    %1429 = vmatprep.subr.bf16.mxu0 0
    %1430 = vmatpush1.bf16.msra.mxu0 0
    %1431 = vmatprep.mubr.bf16.mxu0 0
    %1432 = vmatmul.mubr.bf16.gmra.mrb[0].mxu0 %v1206
    %v1433 = vpop.f32.mrb[0].mxu0
    %v1434 = vadd.f32 0.0, %v1433
    %v1435 = vpop.f32.mrb[0].mxu0
    %v1436 = vadd.f32 0.0, %v1435
    %v1437 = vpop.f32.mrb[0].mxu0
    %v1438 = vpop.f32.mrb[0].mxu0
    %1439 = vdwg.mxu0
    %1440 = vmatprep.subr.bf16.mxu0 %v1338
    %1441 = vmatpush1.bf16.msra.mxu0 %v1337
    %1442 = vmatprep.subr.bf16.mxu0 %v1342
    %1443 = vmatpush1.bf16.msra.mxu0 %v1341
    %1444 = vmatprep.subr.bf16.mxu0 %v1346
    %1445 = vmatpush1.bf16.msra.mxu0 %v1345
    %1446 = vmatprep.subr.bf16.mxu0 %v1350
    %1447 = vmatpush1.bf16.msra.mxu0 %v1349
    %1448 = vmatprep.subr.bf16.mxu0 %v1354
    %1449 = vmatpush1.bf16.msra.mxu0 %v1353
    %1450 = vmatprep.subr.bf16.mxu0 %v1358
    %1451 = vmatpush1.bf16.msra.mxu0 %v1357
    %1452 = vmatprep.subr.bf16.mxu0 %v1362
    %1453 = vmatpush1.bf16.msra.mxu0 %v1361
    %1454 = vmatprep.subr.bf16.mxu0 %v1366
    %1455 = vmatpush1.bf16.msra.mxu0 %v1365
    %1456 = vmatprep.subr.bf16.mxu0 0
    %1457 = vmatpush1.bf16.msra.mxu0 0
    %1458 = vmatprep.subr.bf16.mxu0 0
    %1459 = vmatpush1.bf16.msra.mxu0 0
    %1460 = vmatprep.subr.bf16.mxu0 0
    %1461 = vmatpush1.bf16.msra.mxu0 0
    %1462 = vmatprep.subr.bf16.mxu0 0
    %1463 = vmatpush1.bf16.msra.mxu0 0
    %1464 = vmatprep.subr.bf16.mxu0 0
    %1465 = vmatpush1.bf16.msra.mxu0 0
    %1466 = vmatprep.subr.bf16.mxu0 0
    %1467 = vmatpush1.bf16.msra.mxu0 0
    %1468 = vmatprep.subr.bf16.mxu0 0
    %1469 = vmatpush1.bf16.msra.mxu0 0
    %1470 = vmatprep.subr.bf16.mxu0 0
    %1471 = vmatpush1.bf16.msra.mxu0 0
    %1472 = vmatprep.mubr.bf16.mxu0 0
    %1473 = vmatmul.mubr.bf16.gmra.mrb[0].mxu0 %v1206
    %v1474 = vpop.f32.mrb[0].mxu0
    %v1475 = vadd.f32 0.0, %v1474
    %v1476 = vpop.f32.mrb[0].mxu0
    %v1477 = vadd.f32 0.0, %v1476
    %v1478 = vpop.f32.mrb[0].mxu0
    %v1479 = vpop.f32.mrb[0].mxu0
    %1480 = vdwg.mxu0
    %v1489 = vunpack.c.l.b16 %v1190
    %v1490 = vunpack.c.l.b16 %v1191
    %v1491 = vunpack.c.l.b16 %v1192
    %v1492 = vunpack.c.l.b16 %v1193
    %v1493 = vunpack.c.l.b16 %v1194
    %v1494 = vunpack.c.l.b16 %v1195
    %v1495 = vunpack.c.l.b16 %v1196
    %v1496 = vunpack.c.l.b16 %v1197
    %v1497 = vrot.slane %v1490, 7
    %v1498 = vsel %vm371, %v1497, %v1489
    %v1499 = vrot.slane %v1491, 6
    %v1500 = vsel %vm374, %v1499, %v1498
    %v1501 = vrot.slane %v1492, 5
    %v1502 = vsel %vm377, %v1501, %v1500
    %v1503 = vrot.slane %v1493, 4
    %v1504 = vsel %vm380, %v1503, %v1502
    %v1505 = vrot.slane %v1494, 3
    %v1506 = vsel %vm383, %v1505, %v1504
    %v1507 = vrot.slane %v1495, 2
    %v1508 = vsel %vm386, %v1507, %v1506
    %v1509 = vrot.slane %v1496, 1
    %v1510 = vsel %vm389, %v1509, %v1508
    %v1511 = vpack.c.b16 %v1510, %v1510
    %v1520 = vunpack.c.l.b16 %v1198
    %v1521 = vunpack.c.h.b16 %v1198
    %v1522 = vunpack.c.l.b16 %v1199
    %v1523 = vunpack.c.h.b16 %v1199
    %v1524 = vunpack.c.l.b16 %v1200
    %v1525 = vunpack.c.h.b16 %v1200
    %v1526 = vunpack.c.l.b16 %v1201
    %v1527 = vunpack.c.h.b16 %v1201
    %v1528 = vunpack.c.l.b16 %v1202
    %v1529 = vunpack.c.h.b16 %v1202
    %v1530 = vunpack.c.l.b16 %v1203
    %v1531 = vunpack.c.h.b16 %v1203
    %v1532 = vunpack.c.l.b16 %v1204
    %v1533 = vunpack.c.h.b16 %v1204
    %v1534 = vunpack.c.l.b16 %v1205
    %v1535 = vunpack.c.h.b16 %v1205
    %v1536 = vpack.c.b16 %v1524, %v1520
    %v1537 = vpack.c.b16 %v1525, %v1521
    %v1538 = vpack.c.b16 %v1526, %v1522
    %v1539 = vpack.c.b16 %v1527, %v1523
    %v1540 = vpack.c.b16 %v1532, %v1528
    %v1541 = vpack.c.b16 %v1533, %v1529
    %v1542 = vpack.c.b16 %v1534, %v1530
    %v1543 = vpack.c.b16 %v1535, %v1531
    %v1553 = vsel %vm432, %v1511, 0
    %1555 = vmatprep.subr.bf16.mxu0 %v1537
    %1556 = vmatpush1.bf16.msra.mxu0 %v1536
    %1557 = vmatprep.subr.bf16.mxu0 %v1541
    %1558 = vmatpush1.bf16.msra.mxu0 %v1540
    %1559 = vmatprep.subr.bf16.mxu0 0
    %1560 = vmatpush1.bf16.msra.mxu0 0
    %1561 = vmatprep.subr.bf16.mxu0 0
    %1562 = vmatpush1.bf16.msra.mxu0 0
    %1563 = vmatprep.subr.bf16.mxu0 0
    %1564 = vmatpush1.bf16.msra.mxu0 0
    %1565 = vmatprep.subr.bf16.mxu0 0
    %1566 = vmatpush1.bf16.msra.mxu0 0
    %1567 = vmatprep.subr.bf16.mxu0 0
    %1568 = vmatpush1.bf16.msra.mxu0 0
    %1569 = vmatprep.subr.bf16.mxu0 0
    %1570 = vmatpush1.bf16.msra.mxu0 0
    %1571 = vmatprep.subr.bf16.mxu0 0
    %1572 = vmatpush1.bf16.msra.mxu0 0
    %1573 = vmatprep.subr.bf16.mxu0 0
    %1574 = vmatpush1.bf16.msra.mxu0 0
    %1575 = vmatprep.subr.bf16.mxu0 0
    %1576 = vmatpush1.bf16.msra.mxu0 0
    %1577 = vmatprep.subr.bf16.mxu0 0
    %1578 = vmatpush1.bf16.msra.mxu0 0
    %1579 = vmatprep.subr.bf16.mxu0 0
    %1580 = vmatpush1.bf16.msra.mxu0 0
    %1581 = vmatprep.subr.bf16.mxu0 0
    %1582 = vmatpush1.bf16.msra.mxu0 0
    %1583 = vmatprep.subr.bf16.mxu0 0
    %1584 = vmatpush1.bf16.msra.mxu0 0
    %1585 = vmatprep.subr.bf16.mxu0 0
    %1586 = vmatpush1.bf16.msra.mxu0 0
    %1587 = vmatprep.mubr.bf16.mxu0 0
    %1588 = vmatmul.mubr.bf16.gmra.mrb[0].mxu0 %v1553
    %v1589 = vpop.f32.mrb[0].mxu0
    %v1590 = vadd.f32 %v1434, %v1589
    %v1591 = vpop.f32.mrb[0].mxu0
    %v1592 = vadd.f32 %v1436, %v1591
    %v1593 = vpop.f32.mrb[0].mxu0
    %v1594 = vpop.f32.mrb[0].mxu0
    %1595 = vdwg.mxu0
    %1596 = vmatprep.subr.bf16.mxu0 %v1539
    %1597 = vmatpush1.bf16.msra.mxu0 %v1538
    %1598 = vmatprep.subr.bf16.mxu0 %v1543
    %1599 = vmatpush1.bf16.msra.mxu0 %v1542
    %1600 = vmatprep.subr.bf16.mxu0 0
    %1601 = vmatpush1.bf16.msra.mxu0 0
    %1602 = vmatprep.subr.bf16.mxu0 0
    %1603 = vmatpush1.bf16.msra.mxu0 0
    %1604 = vmatprep.subr.bf16.mxu0 0
    %1605 = vmatpush1.bf16.msra.mxu0 0
    %1606 = vmatprep.subr.bf16.mxu0 0
    %1607 = vmatpush1.bf16.msra.mxu0 0
    %1608 = vmatprep.subr.bf16.mxu0 0
    %1609 = vmatpush1.bf16.msra.mxu0 0
    %1610 = vmatprep.subr.bf16.mxu0 0
    %1611 = vmatpush1.bf16.msra.mxu0 0
    %1612 = vmatprep.subr.bf16.mxu0 0
    %1613 = vmatpush1.bf16.msra.mxu0 0
    %1614 = vmatprep.subr.bf16.mxu0 0
    %1615 = vmatpush1.bf16.msra.mxu0 0
    %1616 = vmatprep.subr.bf16.mxu0 0
    %1617 = vmatpush1.bf16.msra.mxu0 0
    %1618 = vmatprep.subr.bf16.mxu0 0
    %1619 = vmatpush1.bf16.msra.mxu0 0
    %1620 = vmatprep.subr.bf16.mxu0 0
    %1621 = vmatpush1.bf16.msra.mxu0 0
    %1622 = vmatprep.subr.bf16.mxu0 0
    %1623 = vmatpush1.bf16.msra.mxu0 0
    %1624 = vmatprep.subr.bf16.mxu0 0
    %1625 = vmatpush1.bf16.msra.mxu0 0
    %1626 = vmatprep.subr.bf16.mxu0 0
    %1627 = vmatpush1.bf16.msra.mxu0 0
    %1628 = vmatprep.mubr.bf16.mxu0 0
    %1629 = vmatmul.mubr.bf16.gmra.mrb[0].mxu0 %v1553
    %v1630 = vpop.f32.mrb[0].mxu0
    %v1631 = vadd.f32 %v1475, %v1630
    %v1632 = vpop.f32.mrb[0].mxu0
    %v1633 = vadd.f32 %v1477, %v1632
    %v1634 = vpop.f32.mrb[0].mxu0
    %v1635 = vpop.f32.mrb[0].mxu0
    %1636 = vdwg.mxu0
    %v1637 = vadd.f32 %v1590, %v522
    %v1638 = vadd.f32 %v1592, %v526
    %v1639 = vadd.f32 %v1631, %v530
    %v1640 = vadd.f32 %v1633, %v534
    %v1641 = vxor.u32 %v1637, 2147483648
    %v1642 = vmul.f32 %v1641, 1.442695
    %v1643 = vpow.pop %v1642
    %v1644 = vadd.f32 %v1643, 1.0
    %v1645 = vrcp.pop %v1644
    %v1646 = vmul.f32 1.0, %v1645
    %v1647 = vxor.u32 %v1638, 2147483648
    %v1648 = vmul.f32 %v1647, 1.442695
    %v1649 = vpow.pop %v1648
    %v1650 = vadd.f32 %v1649, 1.0
    %v1651 = vrcp.pop %v1650
    %v1652 = vmul.f32 1.0, %v1651
    %v1653 = vtanh.pop %v1639
    %v1654 = vxor.u32 %v1640, 2147483648
    %v1655 = vmul.f32 %v1654, 1.442695
    %v1656 = vpow.pop %v1655
    %v1657 = vadd.f32 %v1656, 1.0
    %v1658 = vrcp.pop %v1657
    %v1659 = vmul.f32 1.0, %v1658
    %v1660 = vmul.f32 %v1652, %v1113
    %v1661 = vmul.f32 %v1646, %v1653
    %v1662 = vadd.f32 %v1660, %v1661
    %v1663 = vtanh.pop %v1662
    %v1664 = vmul.f32 %v1659, %v1663
    %v1666 = vcombine.high %v1664, %v1664
    %v1668 = vunpack.c.l.s4 1966171168
    %v1669 = vunpack.c.0.s8 %v1668
    %v1670 = vlaneseq
    %v1671 = vshrl.u32 %v1670, 7
    %v1672 = vsub.s32 %v1669, %v1671
    %v1673 = vrot.slane %v1664, %v1672
    %v1675 = vunpack.c.l.s4 1966171168
    %v1676 = vunpack.c.0.s8 %v1675
    %v1677 = vlaneseq
    %v1678 = vshrl.u32 %v1677, 7
    %v1679 = vsub.s32 %v1676, %v1678
    %v1680 = vrot.slane %v1666, %v1679
    %v1681 = vcombine.high %v1673, %v1673
    %v1682 = vcombine.high %v1680, %v1680
    %v1684 = vunpack.c.l.s4 1966171168
    %v1685 = vunpack.c.0.s8 %v1684
    %v1686 = vlaneseq
    %v1687 = vshrl.u32 %v1686, 7
    %v1688 = vsub.s32 %v1685, %v1687
    %v1689 = vrot.slane %v1673, %v1688
    %v1691 = vunpack.c.l.s4 1966171168
    %v1692 = vunpack.c.0.s8 %v1691
    %v1693 = vlaneseq
    %v1694 = vshrl.u32 %v1693, 7
    %v1695 = vsub.s32 %v1692, %v1694
    %v1696 = vrot.slane %v1680, %v1695
    %v1698 = vunpack.c.l.s4 1966171168
    %v1699 = vunpack.c.0.s8 %v1698
    %v1700 = vlaneseq
    %v1701 = vshrl.u32 %v1700, 7
    %v1702 = vsub.s32 %v1699, %v1701
    %v1703 = vrot.slane %v1681, %v1702
    %v1705 = vunpack.c.l.s4 1966171168
    %v1706 = vunpack.c.0.s8 %v1705
    %v1707 = vlaneseq
    %v1708 = vshrl.u32 %v1707, 7
    %v1709 = vsub.s32 %v1706, %v1708
    %v1710 = vrot.slane %v1682, %v1709
    %v1711 = vcombine.high %v1689, %v1689
    %v1712 = vcombine.high %v1696, %v1696
    %v1713 = vcombine.high %v1703, %v1703
    %v1714 = vcombine.high %v1710, %v1710
    %1723 = vst [vmem:[#allocation8 + $0x2] sm:$0x1] %v1689
    %1724 = vst [vmem:[#allocation8 + $0xa] sm:$0x1] %v1703
    %1725 = vst [vmem:[#allocation8 + $0x12] sm:$0x1] %v1711
    %1726 = vst [vmem:[#allocation8 + $0x1a] sm:$0x1] %v1713
    %1727 = vst [vmem:[#allocation8 + $0x22] sm:$0x1] %v1696
    %1728 = vst [vmem:[#allocation8 + $0x2a] sm:$0x1] %v1710
    %1729 = vst [vmem:[#allocation8 + $0x32] sm:$0x1] %v1712
    %1730 = vst [vmem:[#allocation8 + $0x3a] sm:$0x1] %v1714
    %v1731 = vld [vmem:[%s0 + $0x3] sm:$0x1]
    %v1732 = vld [vmem:[%s0 + $0xb] sm:$0x1]
    %v1733 = vld [vmem:[%s0 + $0x13] sm:$0x1]
    %v1734 = vld [vmem:[%s0 + $0x1b] sm:$0x1]
    %v1735 = vld [vmem:[%s0 + $0x23] sm:$0x1]
    %v1736 = vld [vmem:[%s0 + $0x2b] sm:$0x1]
    %v1737 = vld [vmem:[%s0 + $0x33] sm:$0x1]
    %v1738 = vld [vmem:[%s0 + $0x3b] sm:$0x1]
    %v1739 = vpack.c.bf16 %v1731, %v1731
    %v1740 = vpack.c.bf16 %v1732, %v1732
    %v1741 = vpack.c.bf16 %v1733, %v1733
    %v1742 = vpack.c.bf16 %v1734, %v1734
    %v1743 = vpack.c.bf16 %v1735, %v1735
    %v1744 = vpack.c.bf16 %v1736, %v1736
    %v1745 = vpack.c.bf16 %v1737, %v1737
    %v1746 = vpack.c.bf16 %v1738, %v1738
    %v1747 = vld [vmem:[%s1] sm:$0xff]
    %v1748 = vld [vmem:[%s1 + $0x8] sm:$0xff]
    %v1749 = vld [vmem:[%s1 + $0x10] sm:$0xff]
    %v1750 = vld [vmem:[%s1 + $0x18] sm:$0xff]
    %v1751 = vld [vmem:[%s1 + $0x20] sm:$0xff]
    %v1752 = vld [vmem:[%s1 + $0x28] sm:$0xff]
    %v1753 = vld [vmem:[%s1 + $0x30] sm:$0xff]
    %v1754 = vld [vmem:[%s1 + $0x38] sm:$0xff]
    %v1755 = vpack.c.bf16 %v1664, %v1664
    %v1756 = vld [vmem:[#allocation5] sm:$0xff]
    %v1757 = vld [vmem:[#allocation5 + $0x8] sm:$0xff]
    %v1758 = vld [vmem:[#allocation5 + $0x10] sm:$0xff]
    %v1759 = vld [vmem:[#allocation5 + $0x18] sm:$0xff]
    %v1760 = vld [vmem:[#allocation5 + $0x20] sm:$0xff]
    %v1761 = vld [vmem:[#allocation5 + $0x28] sm:$0xff]
    %v1762 = vld [vmem:[#allocation5 + $0x30] sm:$0xff]
    %v1763 = vld [vmem:[#allocation5 + $0x38] sm:$0xff]
    %v1764 = vld [vmem:[#allocation5 + $0x40] sm:$0xff]
    %v1765 = vld [vmem:[#allocation5 + $0x48] sm:$0xff]
    %v1766 = vld [vmem:[#allocation5 + $0x50] sm:$0xff]
    %v1767 = vld [vmem:[#allocation5 + $0x58] sm:$0xff]
    %v1768 = vld [vmem:[#allocation5 + $0x60] sm:$0xff]
    %v1769 = vld [vmem:[#allocation5 + $0x68] sm:$0xff]
    %v1770 = vld [vmem:[#allocation5 + $0x70] sm:$0xff]
    %v1771 = vld [vmem:[#allocation5 + $0x78] sm:$0xff]
    %v1772 = vld [vmem:[#allocation5 + $0x80] sm:$0xff]
    %v1773 = vld [vmem:[#allocation5 + $0x88] sm:$0xff]
    %v1774 = vld [vmem:[#allocation5 + $0x90] sm:$0xff]
    %v1775 = vld [vmem:[#allocation5 + $0x98] sm:$0xff]
    %v1776 = vld [vmem:[#allocation5 + $0xa0] sm:$0xff]
    %v1777 = vld [vmem:[#allocation5 + $0xa8] sm:$0xff]
    %v1778 = vld [vmem:[#allocation5 + $0xb0] sm:$0xff]
    %v1779 = vld [vmem:[#allocation5 + $0xb8] sm:$0xff]
    %v1780 = vld [vmem:[#allocation5 + $0xc0] sm:$0xff]
    %v1781 = vld [vmem:[#allocation5 + $0xc8] sm:$0xff]
    %v1782 = vld [vmem:[#allocation5 + $0xd0] sm:$0xff]
    %v1783 = vld [vmem:[#allocation5 + $0xd8] sm:$0xff]
    %v1784 = vld [vmem:[#allocation5 + $0xe0] sm:$0xff]
    %v1785 = vld [vmem:[#allocation5 + $0xe8] sm:$0xff]
    %v1786 = vld [vmem:[#allocation5 + $0xf0] sm:$0xff]
    %v1787 = vld [vmem:[#allocation5 + $0xf8] sm:$0xff]
    %v1820 = vunpack.c.l.b16 %v1756
    %v1821 = vunpack.c.h.b16 %v1756
    %v1822 = vunpack.c.l.b16 %v1757
    %v1823 = vunpack.c.h.b16 %v1757
    %v1824 = vunpack.c.l.b16 %v1758
    %v1825 = vunpack.c.h.b16 %v1758
    %v1826 = vunpack.c.l.b16 %v1759
    %v1827 = vunpack.c.h.b16 %v1759
    %v1828 = vunpack.c.l.b16 %v1760
    %v1829 = vunpack.c.h.b16 %v1760
    %v1830 = vunpack.c.l.b16 %v1761
    %v1831 = vunpack.c.h.b16 %v1761
    %v1832 = vunpack.c.l.b16 %v1762
    %v1833 = vunpack.c.h.b16 %v1762
    %v1834 = vunpack.c.l.b16 %v1763
    %v1835 = vunpack.c.h.b16 %v1763
    %v1836 = vunpack.c.l.b16 %v1764
    %v1837 = vunpack.c.h.b16 %v1764
    %v1838 = vunpack.c.l.b16 %v1765
    %v1839 = vunpack.c.h.b16 %v1765
    %v1840 = vunpack.c.l.b16 %v1766
    %v1841 = vunpack.c.h.b16 %v1766
    %v1842 = vunpack.c.l.b16 %v1767
    %v1843 = vunpack.c.h.b16 %v1767
    %v1844 = vunpack.c.l.b16 %v1768
    %v1845 = vunpack.c.h.b16 %v1768
    %v1846 = vunpack.c.l.b16 %v1769
    %v1847 = vunpack.c.h.b16 %v1769
    %v1848 = vunpack.c.l.b16 %v1770
    %v1849 = vunpack.c.h.b16 %v1770
    %v1850 = vunpack.c.l.b16 %v1771
    %v1851 = vunpack.c.h.b16 %v1771
    %v1852 = vunpack.c.l.b16 %v1772
    %v1853 = vunpack.c.h.b16 %v1772
    %v1854 = vunpack.c.l.b16 %v1773
    %v1855 = vunpack.c.h.b16 %v1773
    %v1856 = vunpack.c.l.b16 %v1774
    %v1857 = vunpack.c.h.b16 %v1774
    %v1858 = vunpack.c.l.b16 %v1775
    %v1859 = vunpack.c.h.b16 %v1775
    %v1860 = vunpack.c.l.b16 %v1776
    %v1861 = vunpack.c.h.b16 %v1776
    %v1862 = vunpack.c.l.b16 %v1777
    %v1863 = vunpack.c.h.b16 %v1777
    %v1864 = vunpack.c.l.b16 %v1778
    %v1865 = vunpack.c.h.b16 %v1778
    %v1866 = vunpack.c.l.b16 %v1779
    %v1867 = vunpack.c.h.b16 %v1779
    %v1868 = vunpack.c.l.b16 %v1780
    %v1869 = vunpack.c.h.b16 %v1780
    %v1870 = vunpack.c.l.b16 %v1781
    %v1871 = vunpack.c.h.b16 %v1781
    %v1872 = vunpack.c.l.b16 %v1782
    %v1873 = vunpack.c.h.b16 %v1782
    %v1874 = vunpack.c.l.b16 %v1783
    %v1875 = vunpack.c.h.b16 %v1783
    %v1876 = vunpack.c.l.b16 %v1784
    %v1877 = vunpack.c.h.b16 %v1784
    %v1878 = vunpack.c.l.b16 %v1785
    %v1879 = vunpack.c.h.b16 %v1785
    %v1880 = vunpack.c.l.b16 %v1786
    %v1881 = vunpack.c.h.b16 %v1786
    %v1882 = vunpack.c.l.b16 %v1787
    %v1883 = vunpack.c.h.b16 %v1787
    %v1884 = vpack.c.b16 %v1824, %v1820
    %v1885 = vpack.c.b16 %v1825, %v1821
    %v1886 = vpack.c.b16 %v1826, %v1822
    %v1887 = vpack.c.b16 %v1827, %v1823
    %v1888 = vpack.c.b16 %v1832, %v1828
    %v1889 = vpack.c.b16 %v1833, %v1829
    %v1890 = vpack.c.b16 %v1834, %v1830
    %v1891 = vpack.c.b16 %v1835, %v1831
    %v1892 = vpack.c.b16 %v1840, %v1836
    %v1893 = vpack.c.b16 %v1841, %v1837
    %v1894 = vpack.c.b16 %v1842, %v1838
    %v1895 = vpack.c.b16 %v1843, %v1839
    %v1896 = vpack.c.b16 %v1848, %v1844
    %v1897 = vpack.c.b16 %v1849, %v1845
    %v1898 = vpack.c.b16 %v1850, %v1846
    %v1899 = vpack.c.b16 %v1851, %v1847
    %v1900 = vpack.c.b16 %v1856, %v1852
    %v1901 = vpack.c.b16 %v1857, %v1853
    %v1902 = vpack.c.b16 %v1858, %v1854
    %v1903 = vpack.c.b16 %v1859, %v1855
    %v1904 = vpack.c.b16 %v1864, %v1860
    %v1905 = vpack.c.b16 %v1865, %v1861
    %v1906 = vpack.c.b16 %v1866, %v1862
    %v1907 = vpack.c.b16 %v1867, %v1863
    %v1908 = vpack.c.b16 %v1872, %v1868
    %v1909 = vpack.c.b16 %v1873, %v1869
    %v1910 = vpack.c.b16 %v1874, %v1870
    %v1911 = vpack.c.b16 %v1875, %v1871
    %v1912 = vpack.c.b16 %v1880, %v1876
    %v1913 = vpack.c.b16 %v1881, %v1877
    %v1914 = vpack.c.b16 %v1882, %v1878
    %v1915 = vpack.c.b16 %v1883, %v1879
    %1948 = vmatprep.subr.bf16.mxu0 %v1885
    %1949 = vmatpush1.bf16.msra.mxu0 %v1884
    %1950 = vmatprep.subr.bf16.mxu0 %v1889
    %1951 = vmatpush1.bf16.msra.mxu0 %v1888
    %1952 = vmatprep.subr.bf16.mxu0 %v1893
    %1953 = vmatpush1.bf16.msra.mxu0 %v1892
    %1954 = vmatprep.subr.bf16.mxu0 %v1897
    %1955 = vmatpush1.bf16.msra.mxu0 %v1896
    %1956 = vmatprep.subr.bf16.mxu0 %v1901
    %1957 = vmatpush1.bf16.msra.mxu0 %v1900
    %1958 = vmatprep.subr.bf16.mxu0 %v1905
    %1959 = vmatpush1.bf16.msra.mxu0 %v1904
    %1960 = vmatprep.subr.bf16.mxu0 %v1909
    %1961 = vmatpush1.bf16.msra.mxu0 %v1908
    %1962 = vmatprep.subr.bf16.mxu0 %v1913
    %1963 = vmatpush1.bf16.msra.mxu0 %v1912
    %1964 = vmatprep.subr.bf16.mxu0 0
    %1965 = vmatpush1.bf16.msra.mxu0 0
    %1966 = vmatprep.subr.bf16.mxu0 0
    %1967 = vmatpush1.bf16.msra.mxu0 0
    %1968 = vmatprep.subr.bf16.mxu0 0
    %1969 = vmatpush1.bf16.msra.mxu0 0
    %1970 = vmatprep.subr.bf16.mxu0 0
    %1971 = vmatpush1.bf16.msra.mxu0 0
    %1972 = vmatprep.subr.bf16.mxu0 0
    %1973 = vmatpush1.bf16.msra.mxu0 0
    %1974 = vmatprep.subr.bf16.mxu0 0
    %1975 = vmatpush1.bf16.msra.mxu0 0
    %1976 = vmatprep.subr.bf16.mxu0 0
    %1977 = vmatpush1.bf16.msra.mxu0 0
    %1978 = vmatprep.subr.bf16.mxu0 0
    %1979 = vmatpush1.bf16.msra.mxu0 0
    %1980 = vmatprep.mubr.bf16.mxu0 0
    %1981 = vmatmul.mubr.bf16.gmra.mrb[0].mxu0 %v1755
    %v1982 = vpop.f32.mrb[0].mxu0
    %v1983 = vadd.f32 0.0, %v1982
    %v1984 = vpop.f32.mrb[0].mxu0
    %v1985 = vadd.f32 0.0, %v1984
    %v1986 = vpop.f32.mrb[0].mxu0
    %v1987 = vpop.f32.mrb[0].mxu0
    %1988 = vdwg.mxu0
    %1989 = vmatprep.subr.bf16.mxu0 %v1887
    %1990 = vmatpush1.bf16.msra.mxu0 %v1886
    %1991 = vmatprep.subr.bf16.mxu0 %v1891
    %1992 = vmatpush1.bf16.msra.mxu0 %v1890
    %1993 = vmatprep.subr.bf16.mxu0 %v1895
    %1994 = vmatpush1.bf16.msra.mxu0 %v1894
    %1995 = vmatprep.subr.bf16.mxu0 %v1899
    %1996 = vmatpush1.bf16.msra.mxu0 %v1898
    %1997 = vmatprep.subr.bf16.mxu0 %v1903
    %1998 = vmatpush1.bf16.msra.mxu0 %v1902
    %1999 = vmatprep.subr.bf16.mxu0 %v1907
    %2000 = vmatpush1.bf16.msra.mxu0 %v1906
    %2001 = vmatprep.subr.bf16.mxu0 %v1911
    %2002 = vmatpush1.bf16.msra.mxu0 %v1910
    %2003 = vmatprep.subr.bf16.mxu0 %v1915
    %2004 = vmatpush1.bf16.msra.mxu0 %v1914
    %2005 = vmatprep.subr.bf16.mxu0 0
    %2006 = vmatpush1.bf16.msra.mxu0 0
    %2007 = vmatprep.subr.bf16.mxu0 0
    %2008 = vmatpush1.bf16.msra.mxu0 0
    %2009 = vmatprep.subr.bf16.mxu0 0
    %2010 = vmatpush1.bf16.msra.mxu0 0
    %2011 = vmatprep.subr.bf16.mxu0 0
    %2012 = vmatpush1.bf16.msra.mxu0 0
    %2013 = vmatprep.subr.bf16.mxu0 0
    %2014 = vmatpush1.bf16.msra.mxu0 0
    %2015 = vmatprep.subr.bf16.mxu0 0
    %2016 = vmatpush1.bf16.msra.mxu0 0
    %2017 = vmatprep.subr.bf16.mxu0 0
    %2018 = vmatpush1.bf16.msra.mxu0 0
    %2019 = vmatprep.subr.bf16.mxu0 0
    %2020 = vmatpush1.bf16.msra.mxu0 0
    %2021 = vmatprep.mubr.bf16.mxu0 0
    %2022 = vmatmul.mubr.bf16.gmra.mrb[0].mxu0 %v1755
    %v2023 = vpop.f32.mrb[0].mxu0
    %v2024 = vadd.f32 0.0, %v2023
    %v2025 = vpop.f32.mrb[0].mxu0
    %v2026 = vadd.f32 0.0, %v2025
    %v2027 = vpop.f32.mrb[0].mxu0
    %v2028 = vpop.f32.mrb[0].mxu0
    %2029 = vdwg.mxu0
    %v2038 = vunpack.c.l.b16 %v1739
    %v2039 = vunpack.c.l.b16 %v1740
    %v2040 = vunpack.c.l.b16 %v1741
    %v2041 = vunpack.c.l.b16 %v1742
    %v2042 = vunpack.c.l.b16 %v1743
    %v2043 = vunpack.c.l.b16 %v1744
    %v2044 = vunpack.c.l.b16 %v1745
    %v2045 = vunpack.c.l.b16 %v1746
    %v2046 = vrot.slane %v2039, 7
    %v2047 = vsel %vm371, %v2046, %v2038
    %v2048 = vrot.slane %v2040, 6
    %v2049 = vsel %vm374, %v2048, %v2047
    %v2050 = vrot.slane %v2041, 5
    %v2051 = vsel %vm377, %v2050, %v2049
    %v2052 = vrot.slane %v2042, 4
    %v2053 = vsel %vm380, %v2052, %v2051
    %v2054 = vrot.slane %v2043, 3
    %v2055 = vsel %vm383, %v2054, %v2053
    %v2056 = vrot.slane %v2044, 2
    %v2057 = vsel %vm386, %v2056, %v2055
    %v2058 = vrot.slane %v2045, 1
    %v2059 = vsel %vm389, %v2058, %v2057
    %v2060 = vpack.c.b16 %v2059, %v2059
    %v2069 = vunpack.c.l.b16 %v1747
    %v2070 = vunpack.c.h.b16 %v1747
    %v2071 = vunpack.c.l.b16 %v1748
    %v2072 = vunpack.c.h.b16 %v1748
    %v2073 = vunpack.c.l.b16 %v1749
    %v2074 = vunpack.c.h.b16 %v1749
    %v2075 = vunpack.c.l.b16 %v1750
    %v2076 = vunpack.c.h.b16 %v1750
    %v2077 = vunpack.c.l.b16 %v1751
    %v2078 = vunpack.c.h.b16 %v1751
    %v2079 = vunpack.c.l.b16 %v1752
    %v2080 = vunpack.c.h.b16 %v1752
    %v2081 = vunpack.c.l.b16 %v1753
    %v2082 = vunpack.c.h.b16 %v1753
    %v2083 = vunpack.c.l.b16 %v1754
    %v2084 = vunpack.c.h.b16 %v1754
    %v2085 = vpack.c.b16 %v2073, %v2069
    %v2086 = vpack.c.b16 %v2074, %v2070
    %v2087 = vpack.c.b16 %v2075, %v2071
    %v2088 = vpack.c.b16 %v2076, %v2072
    %v2089 = vpack.c.b16 %v2081, %v2077
    %v2090 = vpack.c.b16 %v2082, %v2078
    %v2091 = vpack.c.b16 %v2083, %v2079
    %v2092 = vpack.c.b16 %v2084, %v2080
    %v2102 = vsel %vm432, %v2060, 0
    %2104 = vmatprep.subr.bf16.mxu0 %v2086
    %2105 = vmatpush1.bf16.msra.mxu0 %v2085
    %2106 = vmatprep.subr.bf16.mxu0 %v2090
    %2107 = vmatpush1.bf16.msra.mxu0 %v2089
    %2108 = vmatprep.subr.bf16.mxu0 0
    %2109 = vmatpush1.bf16.msra.mxu0 0
    %2110 = vmatprep.subr.bf16.mxu0 0
    %2111 = vmatpush1.bf16.msra.mxu0 0
    %2112 = vmatprep.subr.bf16.mxu0 0
    %2113 = vmatpush1.bf16.msra.mxu0 0
    %2114 = vmatprep.subr.bf16.mxu0 0
    %2115 = vmatpush1.bf16.msra.mxu0 0
    %2116 = vmatprep.subr.bf16.mxu0 0
    %2117 = vmatpush1.bf16.msra.mxu0 0
    %2118 = vmatprep.subr.bf16.mxu0 0
    %2119 = vmatpush1.bf16.msra.mxu0 0
    %2120 = vmatprep.subr.bf16.mxu0 0
    %2121 = vmatpush1.bf16.msra.mxu0 0
    %2122 = vmatprep.subr.bf16.mxu0 0
    %2123 = vmatpush1.bf16.msra.mxu0 0
    %2124 = vmatprep.subr.bf16.mxu0 0
    %2125 = vmatpush1.bf16.msra.mxu0 0
    %2126 = vmatprep.subr.bf16.mxu0 0
    %2127 = vmatpush1.bf16.msra.mxu0 0
    %2128 = vmatprep.subr.bf16.mxu0 0
    %2129 = vmatpush1.bf16.msra.mxu0 0
    %2130 = vmatprep.subr.bf16.mxu0 0
    %2131 = vmatpush1.bf16.msra.mxu0 0
    %2132 = vmatprep.subr.bf16.mxu0 0
    %2133 = vmatpush1.bf16.msra.mxu0 0
    %2134 = vmatprep.subr.bf16.mxu0 0
    %2135 = vmatpush1.bf16.msra.mxu0 0
    %2136 = vmatprep.mubr.bf16.mxu0 0
    %2137 = vmatmul.mubr.bf16.gmra.mrb[0].mxu0 %v2102
    %v2138 = vpop.f32.mrb[0].mxu0
    %v2139 = vadd.f32 %v1983, %v2138
    %v2140 = vpop.f32.mrb[0].mxu0
    %v2141 = vadd.f32 %v1985, %v2140
    %v2142 = vpop.f32.mrb[0].mxu0
    %v2143 = vpop.f32.mrb[0].mxu0
    %2144 = vdwg.mxu0
    %2145 = vmatprep.subr.bf16.mxu0 %v2088
    %2146 = vmatpush1.bf16.msra.mxu0 %v2087
    %2147 = vmatprep.subr.bf16.mxu0 %v2092
    %2148 = vmatpush1.bf16.msra.mxu0 %v2091
    %2149 = vmatprep.subr.bf16.mxu0 0
    %2150 = vmatpush1.bf16.msra.mxu0 0
    %2151 = vmatprep.subr.bf16.mxu0 0
    %2152 = vmatpush1.bf16.msra.mxu0 0
    %2153 = vmatprep.subr.bf16.mxu0 0
    %2154 = vmatpush1.bf16.msra.mxu0 0
    %2155 = vmatprep.subr.bf16.mxu0 0
    %2156 = vmatpush1.bf16.msra.mxu0 0
    %2157 = vmatprep.subr.bf16.mxu0 0
    %2158 = vmatpush1.bf16.msra.mxu0 0
    %2159 = vmatprep.subr.bf16.mxu0 0
    %2160 = vmatpush1.bf16.msra.mxu0 0
    %2161 = vmatprep.subr.bf16.mxu0 0
    %2162 = vmatpush1.bf16.msra.mxu0 0
    %2163 = vmatprep.subr.bf16.mxu0 0
    %2164 = vmatpush1.bf16.msra.mxu0 0
    %2165 = vmatprep.subr.bf16.mxu0 0
    %2166 = vmatpush1.bf16.msra.mxu0 0
    %2167 = vmatprep.subr.bf16.mxu0 0
    %2168 = vmatpush1.bf16.msra.mxu0 0
    %2169 = vmatprep.subr.bf16.mxu0 0
    %2170 = vmatpush1.bf16.msra.mxu0 0
    %2171 = vmatprep.subr.bf16.mxu0 0
    %2172 = vmatpush1.bf16.msra.mxu0 0
    %2173 = vmatprep.subr.bf16.mxu0 0
    %2174 = vmatpush1.bf16.msra.mxu0 0
    %2175 = vmatprep.subr.bf16.mxu0 0
    %2176 = vmatpush1.bf16.msra.mxu0 0
    %2177 = vmatprep.mubr.bf16.mxu0 0
    %2178 = vmatmul.mubr.bf16.gmra.mrb[0].mxu0 %v2102
    %v2179 = vpop.f32.mrb[0].mxu0
    %v2180 = vadd.f32 %v2024, %v2179
    %v2181 = vpop.f32.mrb[0].mxu0
    %v2182 = vadd.f32 %v2026, %v2181
    %v2183 = vpop.f32.mrb[0].mxu0
    %v2184 = vpop.f32.mrb[0].mxu0
    %2185 = vdwg.mxu0
    %v2186 = vadd.f32 %v2139, %v522
    %v2187 = vadd.f32 %v2141, %v526
    %v2188 = vadd.f32 %v2180, %v530
    %v2189 = vadd.f32 %v2182, %v534
    %v2190 = vxor.u32 %v2186, 2147483648
    %v2191 = vmul.f32 %v2190, 1.442695
    %v2192 = vpow.pop %v2191
    %v2193 = vadd.f32 %v2192, 1.0
    %v2194 = vrcp.pop %v2193
    %v2195 = vmul.f32 1.0, %v2194
    %v2196 = vxor.u32 %v2187, 2147483648
    %v2197 = vmul.f32 %v2196, 1.442695
    %v2198 = vpow.pop %v2197
    %v2199 = vadd.f32 %v2198, 1.0
    %v2200 = vrcp.pop %v2199
    %v2201 = vmul.f32 1.0, %v2200
    %v2202 = vtanh.pop %v2188
    %v2203 = vxor.u32 %v2189, 2147483648
    %v2204 = vmul.f32 %v2203, 1.442695
    %v2205 = vpow.pop %v2204
    %v2206 = vadd.f32 %v2205, 1.0
    %v2207 = vrcp.pop %v2206
    %v2208 = vmul.f32 1.0, %v2207
    %v2209 = vmul.f32 %v2201, %v1662
    %v2210 = vmul.f32 %v2195, %v2202
    %v2211 = vadd.f32 %v2209, %v2210
    %v2212 = vtanh.pop %v2211
    %v2213 = vmul.f32 %v2208, %v2212
    %v2215 = vcombine.high %v2213, %v2213
    %v2217 = vunpack.c.l.s4 1966171168
    %v2218 = vunpack.c.0.s8 %v2217
    %v2219 = vlaneseq
    %v2220 = vshrl.u32 %v2219, 7
    %v2221 = vsub.s32 %v2218, %v2220
    %v2222 = vrot.slane %v2213, %v2221
    %v2224 = vunpack.c.l.s4 1966171168
    %v2225 = vunpack.c.0.s8 %v2224
    %v2226 = vlaneseq
    %v2227 = vshrl.u32 %v2226, 7
    %v2228 = vsub.s32 %v2225, %v2227
    %v2229 = vrot.slane %v2215, %v2228
    %v2230 = vcombine.high %v2222, %v2222
    %v2231 = vcombine.high %v2229, %v2229
    %v2233 = vunpack.c.l.s4 1966171168
    %v2234 = vunpack.c.0.s8 %v2233
    %v2235 = vlaneseq
    %v2236 = vshrl.u32 %v2235, 7
    %v2237 = vsub.s32 %v2234, %v2236
    %v2238 = vrot.slane %v2222, %v2237
    %v2240 = vunpack.c.l.s4 1966171168
    %v2241 = vunpack.c.0.s8 %v2240
    %v2242 = vlaneseq
    %v2243 = vshrl.u32 %v2242, 7
    %v2244 = vsub.s32 %v2241, %v2243
    %v2245 = vrot.slane %v2229, %v2244
    %v2247 = vunpack.c.l.s4 1966171168
    %v2248 = vunpack.c.0.s8 %v2247
    %v2249 = vlaneseq
    %v2250 = vshrl.u32 %v2249, 7
    %v2251 = vsub.s32 %v2248, %v2250
    %v2252 = vrot.slane %v2230, %v2251
    %v2254 = vunpack.c.l.s4 1966171168
    %v2255 = vunpack.c.0.s8 %v2254
    %v2256 = vlaneseq
    %v2257 = vshrl.u32 %v2256, 7
    %v2258 = vsub.s32 %v2255, %v2257
    %v2259 = vrot.slane %v2231, %v2258
    %v2260 = vcombine.high %v2238, %v2238
    %v2261 = vcombine.high %v2245, %v2245
    %v2262 = vcombine.high %v2252, %v2252
    %v2263 = vcombine.high %v2259, %v2259
    %2272 = vst [vmem:[#allocation8 + $0x3] sm:$0x1] %v2238
    %2273 = vst [vmem:[#allocation8 + $0xb] sm:$0x1] %v2252
    %2274 = vst [vmem:[#allocation8 + $0x13] sm:$0x1] %v2260
    %2275 = vst [vmem:[#allocation8 + $0x1b] sm:$0x1] %v2262
    %2276 = vst [vmem:[#allocation8 + $0x23] sm:$0x1] %v2245
    %2277 = vst [vmem:[#allocation8 + $0x2b] sm:$0x1] %v2259
    %2278 = vst [vmem:[#allocation8 + $0x33] sm:$0x1] %v2261
    %2279 = vst [vmem:[#allocation8 + $0x3b] sm:$0x1] %v2263
    %v2280 = vld [vmem:[%s0 + $0x4] sm:$0x1]
    %v2281 = vld [vmem:[%s0 + $0xc] sm:$0x1]
    %v2282 = vld [vmem:[%s0 + $0x14] sm:$0x1]
    %v2283 = vld [vmem:[%s0 + $0x1c] sm:$0x1]
    %v2284 = vld [vmem:[%s0 + $0x24] sm:$0x1]
    %v2285 = vld [vmem:[%s0 + $0x2c] sm:$0x1]
    %v2286 = vld [vmem:[%s0 + $0x34] sm:$0x1]
    %v2287 = vld [vmem:[%s0 + $0x3c] sm:$0x1]
    %v2288 = vpack.c.bf16 %v2280, %v2280
    %v2289 = vpack.c.bf16 %v2281, %v2281
    %v2290 = vpack.c.bf16 %v2282, %v2282
    %v2291 = vpack.c.bf16 %v2283, %v2283
    %v2292 = vpack.c.bf16 %v2284, %v2284
    %v2293 = vpack.c.bf16 %v2285, %v2285
    %v2294 = vpack.c.bf16 %v2286, %v2286
    %v2295 = vpack.c.bf16 %v2287, %v2287
    %v2296 = vld [vmem:[%s1] sm:$0xff]
    %v2297 = vld [vmem:[%s1 + $0x8] sm:$0xff]
    %v2298 = vld [vmem:[%s1 + $0x10] sm:$0xff]
    %v2299 = vld [vmem:[%s1 + $0x18] sm:$0xff]
    %v2300 = vld [vmem:[%s1 + $0x20] sm:$0xff]
    %v2301 = vld [vmem:[%s1 + $0x28] sm:$0xff]
    %v2302 = vld [vmem:[%s1 + $0x30] sm:$0xff]
    %v2303 = vld [vmem:[%s1 + $0x38] sm:$0xff]
    %v2304 = vpack.c.bf16 %v2213, %v2213
    %v2305 = vld [vmem:[#allocation5] sm:$0xff]
    %v2306 = vld [vmem:[#allocation5 + $0x8] sm:$0xff]
    %v2307 = vld [vmem:[#allocation5 + $0x10] sm:$0xff]
    %v2308 = vld [vmem:[#allocation5 + $0x18] sm:$0xff]
    %v2309 = vld [vmem:[#allocation5 + $0x20] sm:$0xff]
    %v2310 = vld [vmem:[#allocation5 + $0x28] sm:$0xff]
    %v2311 = vld [vmem:[#allocation5 + $0x30] sm:$0xff]
    %v2312 = vld [vmem:[#allocation5 + $0x38] sm:$0xff]
    %v2313 = vld [vmem:[#allocation5 + $0x40] sm:$0xff]
    %v2314 = vld [vmem:[#allocation5 + $0x48] sm:$0xff]
    %v2315 = vld [vmem:[#allocation5 + $0x50] sm:$0xff]
    %v2316 = vld [vmem:[#allocation5 + $0x58] sm:$0xff]
    %v2317 = vld [vmem:[#allocation5 + $0x60] sm:$0xff]
    %v2318 = vld [vmem:[#allocation5 + $0x68] sm:$0xff]
    %v2319 = vld [vmem:[#allocation5 + $0x70] sm:$0xff]
    %v2320 = vld [vmem:[#allocation5 + $0x78] sm:$0xff]
    %v2321 = vld [vmem:[#allocation5 + $0x80] sm:$0xff]
    %v2322 = vld [vmem:[#allocation5 + $0x88] sm:$0xff]
    %v2323 = vld [vmem:[#allocation5 + $0x90] sm:$0xff]
    %v2324 = vld [vmem:[#allocation5 + $0x98] sm:$0xff]
    %v2325 = vld [vmem:[#allocation5 + $0xa0] sm:$0xff]
    %v2326 = vld [vmem:[#allocation5 + $0xa8] sm:$0xff]
    %v2327 = vld [vmem:[#allocation5 + $0xb0] sm:$0xff]
    %v2328 = vld [vmem:[#allocation5 + $0xb8] sm:$0xff]
    %v2329 = vld [vmem:[#allocation5 + $0xc0] sm:$0xff]
    %v2330 = vld [vmem:[#allocation5 + $0xc8] sm:$0xff]
    %v2331 = vld [vmem:[#allocation5 + $0xd0] sm:$0xff]
    %v2332 = vld [vmem:[#allocation5 + $0xd8] sm:$0xff]
    %v2333 = vld [vmem:[#allocation5 + $0xe0] sm:$0xff]
    %v2334 = vld [vmem:[#allocation5 + $0xe8] sm:$0xff]
    %v2335 = vld [vmem:[#allocation5 + $0xf0] sm:$0xff]
    %v2336 = vld [vmem:[#allocation5 + $0xf8] sm:$0xff]
    %v2369 = vunpack.c.l.b16 %v2305
    %v2370 = vunpack.c.h.b16 %v2305
    %v2371 = vunpack.c.l.b16 %v2306
    %v2372 = vunpack.c.h.b16 %v2306
    %v2373 = vunpack.c.l.b16 %v2307
    %v2374 = vunpack.c.h.b16 %v2307
    %v2375 = vunpack.c.l.b16 %v2308
    %v2376 = vunpack.c.h.b16 %v2308
    %v2377 = vunpack.c.l.b16 %v2309
    %v2378 = vunpack.c.h.b16 %v2309
    %v2379 = vunpack.c.l.b16 %v2310
    %v2380 = vunpack.c.h.b16 %v2310
    %v2381 = vunpack.c.l.b16 %v2311
    %v2382 = vunpack.c.h.b16 %v2311
    %v2383 = vunpack.c.l.b16 %v2312
    %v2384 = vunpack.c.h.b16 %v2312
    %v2385 = vunpack.c.l.b16 %v2313
    %v2386 = vunpack.c.h.b16 %v2313
    %v2387 = vunpack.c.l.b16 %v2314
    %v2388 = vunpack.c.h.b16 %v2314
    %v2389 = vunpack.c.l.b16 %v2315
    %v2390 = vunpack.c.h.b16 %v2315
    %v2391 = vunpack.c.l.b16 %v2316
    %v2392 = vunpack.c.h.b16 %v2316
    %v2393 = vunpack.c.l.b16 %v2317
    %v2394 = vunpack.c.h.b16 %v2317
    %v2395 = vunpack.c.l.b16 %v2318
    %v2396 = vunpack.c.h.b16 %v2318
    %v2397 = vunpack.c.l.b16 %v2319
    %v2398 = vunpack.c.h.b16 %v2319
    %v2399 = vunpack.c.l.b16 %v2320
    %v2400 = vunpack.c.h.b16 %v2320
    %v2401 = vunpack.c.l.b16 %v2321
    %v2402 = vunpack.c.h.b16 %v2321
    %v2403 = vunpack.c.l.b16 %v2322
    %v2404 = vunpack.c.h.b16 %v2322
    %v2405 = vunpack.c.l.b16 %v2323
    %v2406 = vunpack.c.h.b16 %v2323
    %v2407 = vunpack.c.l.b16 %v2324
    %v2408 = vunpack.c.h.b16 %v2324
    %v2409 = vunpack.c.l.b16 %v2325
    %v2410 = vunpack.c.h.b16 %v2325
    %v2411 = vunpack.c.l.b16 %v2326
    %v2412 = vunpack.c.h.b16 %v2326
    %v2413 = vunpack.c.l.b16 %v2327
    %v2414 = vunpack.c.h.b16 %v2327
    %v2415 = vunpack.c.l.b16 %v2328
    %v2416 = vunpack.c.h.b16 %v2328
    %v2417 = vunpack.c.l.b16 %v2329
    %v2418 = vunpack.c.h.b16 %v2329
    %v2419 = vunpack.c.l.b16 %v2330
    %v2420 = vunpack.c.h.b16 %v2330
    %v2421 = vunpack.c.l.b16 %v2331
    %v2422 = vunpack.c.h.b16 %v2331
    %v2423 = vunpack.c.l.b16 %v2332
    %v2424 = vunpack.c.h.b16 %v2332
    %v2425 = vunpack.c.l.b16 %v2333
    %v2426 = vunpack.c.h.b16 %v2333
    %v2427 = vunpack.c.l.b16 %v2334
    %v2428 = vunpack.c.h.b16 %v2334
    %v2429 = vunpack.c.l.b16 %v2335
    %v2430 = vunpack.c.h.b16 %v2335
    %v2431 = vunpack.c.l.b16 %v2336
    %v2432 = vunpack.c.h.b16 %v2336
    %v2433 = vpack.c.b16 %v2373, %v2369
    %v2434 = vpack.c.b16 %v2374, %v2370
    %v2435 = vpack.c.b16 %v2375, %v2371
    %v2436 = vpack.c.b16 %v2376, %v2372
    %v2437 = vpack.c.b16 %v2381, %v2377
    %v2438 = vpack.c.b16 %v2382, %v2378
    %v2439 = vpack.c.b16 %v2383, %v2379
    %v2440 = vpack.c.b16 %v2384, %v2380
    %v2441 = vpack.c.b16 %v2389, %v2385
    %v2442 = vpack.c.b16 %v2390, %v2386
    %v2443 = vpack.c.b16 %v2391, %v2387
    %v2444 = vpack.c.b16 %v2392, %v2388
    %v2445 = vpack.c.b16 %v2397, %v2393
    %v2446 = vpack.c.b16 %v2398, %v2394
    %v2447 = vpack.c.b16 %v2399, %v2395
    %v2448 = vpack.c.b16 %v2400, %v2396
    %v2449 = vpack.c.b16 %v2405, %v2401
    %v2450 = vpack.c.b16 %v2406, %v2402
    %v2451 = vpack.c.b16 %v2407, %v2403
    %v2452 = vpack.c.b16 %v2408, %v2404
    %v2453 = vpack.c.b16 %v2413, %v2409
    %v2454 = vpack.c.b16 %v2414, %v2410
    %v2455 = vpack.c.b16 %v2415, %v2411
    %v2456 = vpack.c.b16 %v2416, %v2412
    %v2457 = vpack.c.b16 %v2421, %v2417
    %v2458 = vpack.c.b16 %v2422, %v2418
    %v2459 = vpack.c.b16 %v2423, %v2419
    %v2460 = vpack.c.b16 %v2424, %v2420
    %v2461 = vpack.c.b16 %v2429, %v2425
    %v2462 = vpack.c.b16 %v2430, %v2426
    %v2463 = vpack.c.b16 %v2431, %v2427
    %v2464 = vpack.c.b16 %v2432, %v2428
    %2497 = vmatprep.subr.bf16.mxu0 %v2434
    %2498 = vmatpush1.bf16.msra.mxu0 %v2433
    %2499 = vmatprep.subr.bf16.mxu0 %v2438
    %2500 = vmatpush1.bf16.msra.mxu0 %v2437
    %2501 = vmatprep.subr.bf16.mxu0 %v2442
    %2502 = vmatpush1.bf16.msra.mxu0 %v2441
    %2503 = vmatprep.subr.bf16.mxu0 %v2446
    %2504 = vmatpush1.bf16.msra.mxu0 %v2445
    %2505 = vmatprep.subr.bf16.mxu0 %v2450
    %2506 = vmatpush1.bf16.msra.mxu0 %v2449
    %2507 = vmatprep.subr.bf16.mxu0 %v2454
    %2508 = vmatpush1.bf16.msra.mxu0 %v2453
    %2509 = vmatprep.subr.bf16.mxu0 %v2458
    %2510 = vmatpush1.bf16.msra.mxu0 %v2457
    %2511 = vmatprep.subr.bf16.mxu0 %v2462
    %2512 = vmatpush1.bf16.msra.mxu0 %v2461
    %2513 = vmatprep.subr.bf16.mxu0 0
    %2514 = vmatpush1.bf16.msra.mxu0 0
    %2515 = vmatprep.subr.bf16.mxu0 0
    %2516 = vmatpush1.bf16.msra.mxu0 0
    %2517 = vmatprep.subr.bf16.mxu0 0
    %2518 = vmatpush1.bf16.msra.mxu0 0
    %2519 = vmatprep.subr.bf16.mxu0 0
    %2520 = vmatpush1.bf16.msra.mxu0 0
    %2521 = vmatprep.subr.bf16.mxu0 0
    %2522 = vmatpush1.bf16.msra.mxu0 0
    %2523 = vmatprep.subr.bf16.mxu0 0
    %2524 = vmatpush1.bf16.msra.mxu0 0
    %2525 = vmatprep.subr.bf16.mxu0 0
    %2526 = vmatpush1.bf16.msra.mxu0 0
    %2527 = vmatprep.subr.bf16.mxu0 0
    %2528 = vmatpush1.bf16.msra.mxu0 0
    %2529 = vmatprep.mubr.bf16.mxu0 0
    %2530 = vmatmul.mubr.bf16.gmra.mrb[0].mxu0 %v2304
    %v2531 = vpop.f32.mrb[0].mxu0
    %v2532 = vadd.f32 0.0, %v2531
    %v2533 = vpop.f32.mrb[0].mxu0
    %v2534 = vadd.f32 0.0, %v2533
    %v2535 = vpop.f32.mrb[0].mxu0
    %v2536 = vpop.f32.mrb[0].mxu0
    %2537 = vdwg.mxu0
    %2538 = vmatprep.subr.bf16.mxu0 %v2436
    %2539 = vmatpush1.bf16.msra.mxu0 %v2435
    %2540 = vmatprep.subr.bf16.mxu0 %v2440
    %2541 = vmatpush1.bf16.msra.mxu0 %v2439
    %2542 = vmatprep.subr.bf16.mxu0 %v2444
    %2543 = vmatpush1.bf16.msra.mxu0 %v2443
    %2544 = vmatprep.subr.bf16.mxu0 %v2448
    %2545 = vmatpush1.bf16.msra.mxu0 %v2447
    %2546 = vmatprep.subr.bf16.mxu0 %v2452
    %2547 = vmatpush1.bf16.msra.mxu0 %v2451
    %2548 = vmatprep.subr.bf16.mxu0 %v2456
    %2549 = vmatpush1.bf16.msra.mxu0 %v2455
    %2550 = vmatprep.subr.bf16.mxu0 %v2460
    %2551 = vmatpush1.bf16.msra.mxu0 %v2459
    %2552 = vmatprep.subr.bf16.mxu0 %v2464
    %2553 = vmatpush1.bf16.msra.mxu0 %v2463
    %2554 = vmatprep.subr.bf16.mxu0 0
    %2555 = vmatpush1.bf16.msra.mxu0 0
    %2556 = vmatprep.subr.bf16.mxu0 0
    %2557 = vmatpush1.bf16.msra.mxu0 0
    %2558 = vmatprep.subr.bf16.mxu0 0
    %2559 = vmatpush1.bf16.msra.mxu0 0
    %2560 = vmatprep.subr.bf16.mxu0 0
    %2561 = vmatpush1.bf16.msra.mxu0 0
    %2562 = vmatprep.subr.bf16.mxu0 0
    %2563 = vmatpush1.bf16.msra.mxu0 0
    %2564 = vmatprep.subr.bf16.mxu0 0
    %2565 = vmatpush1.bf16.msra.mxu0 0
    %2566 = vmatprep.subr.bf16.mxu0 0
    %2567 = vmatpush1.bf16.msra.mxu0 0
    %2568 = vmatprep.subr.bf16.mxu0 0
    %2569 = vmatpush1.bf16.msra.mxu0 0
    %2570 = vmatprep.mubr.bf16.mxu0 0
    %2571 = vmatmul.mubr.bf16.gmra.mrb[0].mxu0 %v2304
    %v2572 = vpop.f32.mrb[0].mxu0
    %v2573 = vadd.f32 0.0, %v2572
    %v2574 = vpop.f32.mrb[0].mxu0
    %v2575 = vadd.f32 0.0, %v2574
    %v2576 = vpop.f32.mrb[0].mxu0
    %v2577 = vpop.f32.mrb[0].mxu0
    %2578 = vdwg.mxu0
    %v2587 = vunpack.c.l.b16 %v2288
    %v2588 = vunpack.c.l.b16 %v2289
    %v2589 = vunpack.c.l.b16 %v2290
    %v2590 = vunpack.c.l.b16 %v2291
    %v2591 = vunpack.c.l.b16 %v2292
    %v2592 = vunpack.c.l.b16 %v2293
    %v2593 = vunpack.c.l.b16 %v2294
    %v2594 = vunpack.c.l.b16 %v2295
    %v2595 = vrot.slane %v2588, 7
    %v2596 = vsel %vm371, %v2595, %v2587
    %v2597 = vrot.slane %v2589, 6
    %v2598 = vsel %vm374, %v2597, %v2596
    %v2599 = vrot.slane %v2590, 5
    %v2600 = vsel %vm377, %v2599, %v2598
    %v2601 = vrot.slane %v2591, 4
    %v2602 = vsel %vm380, %v2601, %v2600
    %v2603 = vrot.slane %v2592, 3
    %v2604 = vsel %vm383, %v2603, %v2602
    %v2605 = vrot.slane %v2593, 2
    %v2606 = vsel %vm386, %v2605, %v2604
    %v2607 = vrot.slane %v2594, 1
    %v2608 = vsel %vm389, %v2607, %v2606
    %v2609 = vpack.c.b16 %v2608, %v2608
    %v2618 = vunpack.c.l.b16 %v2296
    %v2619 = vunpack.c.h.b16 %v2296
    %v2620 = vunpack.c.l.b16 %v2297
    %v2621 = vunpack.c.h.b16 %v2297
    %v2622 = vunpack.c.l.b16 %v2298
    %v2623 = vunpack.c.h.b16 %v2298
    %v2624 = vunpack.c.l.b16 %v2299
    %v2625 = vunpack.c.h.b16 %v2299
    %v2626 = vunpack.c.l.b16 %v2300
    %v2627 = vunpack.c.h.b16 %v2300
    %v2628 = vunpack.c.l.b16 %v2301
    %v2629 = vunpack.c.h.b16 %v2301
    %v2630 = vunpack.c.l.b16 %v2302
    %v2631 = vunpack.c.h.b16 %v2302
    %v2632 = vunpack.c.l.b16 %v2303
    %v2633 = vunpack.c.h.b16 %v2303
    %v2634 = vpack.c.b16 %v2622, %v2618
    %v2635 = vpack.c.b16 %v2623, %v2619
    %v2636 = vpack.c.b16 %v2624, %v2620
    %v2637 = vpack.c.b16 %v2625, %v2621
    %v2638 = vpack.c.b16 %v2630, %v2626
    %v2639 = vpack.c.b16 %v2631, %v2627
    %v2640 = vpack.c.b16 %v2632, %v2628
    %v2641 = vpack.c.b16 %v2633, %v2629
    %v2651 = vsel %vm432, %v2609, 0
    %2653 = vmatprep.subr.bf16.mxu0 %v2635
    %2654 = vmatpush1.bf16.msra.mxu0 %v2634
    %2655 = vmatprep.subr.bf16.mxu0 %v2639
    %2656 = vmatpush1.bf16.msra.mxu0 %v2638
    %2657 = vmatprep.subr.bf16.mxu0 0
    %2658 = vmatpush1.bf16.msra.mxu0 0
    %2659 = vmatprep.subr.bf16.mxu0 0
    %2660 = vmatpush1.bf16.msra.mxu0 0
    %2661 = vmatprep.subr.bf16.mxu0 0
    %2662 = vmatpush1.bf16.msra.mxu0 0
    %2663 = vmatprep.subr.bf16.mxu0 0
    %2664 = vmatpush1.bf16.msra.mxu0 0
    %2665 = vmatprep.subr.bf16.mxu0 0
    %2666 = vmatpush1.bf16.msra.mxu0 0
    %2667 = vmatprep.subr.bf16.mxu0 0
    %2668 = vmatpush1.bf16.msra.mxu0 0
    %2669 = vmatprep.subr.bf16.mxu0 0
    %2670 = vmatpush1.bf16.msra.mxu0 0
    %2671 = vmatprep.subr.bf16.mxu0 0
    %2672 = vmatpush1.bf16.msra.mxu0 0
    %2673 = vmatprep.subr.bf16.mxu0 0
    %2674 = vmatpush1.bf16.msra.mxu0 0
    %2675 = vmatprep.subr.bf16.mxu0 0
    %2676 = vmatpush1.bf16.msra.mxu0 0
    %2677 = vmatprep.subr.bf16.mxu0 0
    %2678 = vmatpush1.bf16.msra.mxu0 0
    %2679 = vmatprep.subr.bf16.mxu0 0
    %2680 = vmatpush1.bf16.msra.mxu0 0
    %2681 = vmatprep.subr.bf16.mxu0 0
    %2682 = vmatpush1.bf16.msra.mxu0 0
    %2683 = vmatprep.subr.bf16.mxu0 0
    %2684 = vmatpush1.bf16.msra.mxu0 0
    %2685 = vmatprep.mubr.bf16.mxu0 0
    %2686 = vmatmul.mubr.bf16.gmra.mrb[0].mxu0 %v2651
    %v2687 = vpop.f32.mrb[0].mxu0
    %v2688 = vadd.f32 %v2532, %v2687
    %v2689 = vpop.f32.mrb[0].mxu0
    %v2690 = vadd.f32 %v2534, %v2689
    %v2691 = vpop.f32.mrb[0].mxu0
    %v2692 = vpop.f32.mrb[0].mxu0
    %2693 = vdwg.mxu0
    %2694 = vmatprep.subr.bf16.mxu0 %v2637
    %2695 = vmatpush1.bf16.msra.mxu0 %v2636
    %2696 = vmatprep.subr.bf16.mxu0 %v2641
    %2697 = vmatpush1.bf16.msra.mxu0 %v2640
    %2698 = vmatprep.subr.bf16.mxu0 0
    %2699 = vmatpush1.bf16.msra.mxu0 0
    %2700 = vmatprep.subr.bf16.mxu0 0
    %2701 = vmatpush1.bf16.msra.mxu0 0
    %2702 = vmatprep.subr.bf16.mxu0 0
    %2703 = vmatpush1.bf16.msra.mxu0 0
    %2704 = vmatprep.subr.bf16.mxu0 0
    %2705 = vmatpush1.bf16.msra.mxu0 0
    %2706 = vmatprep.subr.bf16.mxu0 0
    %2707 = vmatpush1.bf16.msra.mxu0 0
    %2708 = vmatprep.subr.bf16.mxu0 0
    %2709 = vmatpush1.bf16.msra.mxu0 0
    %2710 = vmatprep.subr.bf16.mxu0 0
    %2711 = vmatpush1.bf16.msra.mxu0 0
    %2712 = vmatprep.subr.bf16.mxu0 0
    %2713 = vmatpush1.bf16.msra.mxu0 0
    %2714 = vmatprep.subr.bf16.mxu0 0
    %2715 = vmatpush1.bf16.msra.mxu0 0
    %2716 = vmatprep.subr.bf16.mxu0 0
    %2717 = vmatpush1.bf16.msra.mxu0 0
    %2718 = vmatprep.subr.bf16.mxu0 0
    %2719 = vmatpush1.bf16.msra.mxu0 0
    %2720 = vmatprep.subr.bf16.mxu0 0
    %2721 = vmatpush1.bf16.msra.mxu0 0
    %2722 = vmatprep.subr.bf16.mxu0 0
    %2723 = vmatpush1.bf16.msra.mxu0 0
    %2724 = vmatprep.subr.bf16.mxu0 0
    %2725 = vmatpush1.bf16.msra.mxu0 0
    %2726 = vmatprep.mubr.bf16.mxu0 0
    %2727 = vmatmul.mubr.bf16.gmra.mrb[0].mxu0 %v2651
    %v2728 = vpop.f32.mrb[0].mxu0
    %v2729 = vadd.f32 %v2573, %v2728
    %v2730 = vpop.f32.mrb[0].mxu0
    %v2731 = vadd.f32 %v2575, %v2730
    %v2732 = vpop.f32.mrb[0].mxu0
    %v2733 = vpop.f32.mrb[0].mxu0
    %2734 = vdwg.mxu0
    %v2735 = vadd.f32 %v2688, %v522
    %v2736 = vadd.f32 %v2690, %v526
    %v2737 = vadd.f32 %v2729, %v530
    %v2738 = vadd.f32 %v2731, %v534
    %v2739 = vxor.u32 %v2735, 2147483648
    %v2740 = vmul.f32 %v2739, 1.442695
    %v2741 = vpow.pop %v2740
    %v2742 = vadd.f32 %v2741, 1.0
    %v2743 = vrcp.pop %v2742
    %v2744 = vmul.f32 1.0, %v2743
    %v2745 = vxor.u32 %v2736, 2147483648
    %v2746 = vmul.f32 %v2745, 1.442695
    %v2747 = vpow.pop %v2746
    %v2748 = vadd.f32 %v2747, 1.0
    %v2749 = vrcp.pop %v2748
    %v2750 = vmul.f32 1.0, %v2749
    %v2751 = vtanh.pop %v2737
    %v2752 = vxor.u32 %v2738, 2147483648
    %v2753 = vmul.f32 %v2752, 1.442695
    %v2754 = vpow.pop %v2753
    %v2755 = vadd.f32 %v2754, 1.0
    %v2756 = vrcp.pop %v2755
    %v2757 = vmul.f32 1.0, %v2756
    %v2758 = vmul.f32 %v2750, %v2211
    %v2759 = vmul.f32 %v2744, %v2751
    %v2760 = vadd.f32 %v2758, %v2759
    %v2761 = vtanh.pop %v2760
    %v2762 = vmul.f32 %v2757, %v2761
    %v2764 = vcombine.high %v2762, %v2762
    %v2766 = vunpack.c.l.s4 1966171168
    %v2767 = vunpack.c.0.s8 %v2766
    %v2768 = vlaneseq
    %v2769 = vshrl.u32 %v2768, 7
    %v2770 = vsub.s32 %v2767, %v2769
    %v2771 = vrot.slane %v2762, %v2770
    %v2773 = vunpack.c.l.s4 1966171168
    %v2774 = vunpack.c.0.s8 %v2773
    %v2775 = vlaneseq
    %v2776 = vshrl.u32 %v2775, 7
    %v2777 = vsub.s32 %v2774, %v2776
    %v2778 = vrot.slane %v2764, %v2777
    %v2779 = vcombine.high %v2771, %v2771
    %v2780 = vcombine.high %v2778, %v2778
    %v2782 = vunpack.c.l.s4 1966171168
    %v2783 = vunpack.c.0.s8 %v2782
    %v2784 = vlaneseq
    %v2785 = vshrl.u32 %v2784, 7
    %v2786 = vsub.s32 %v2783, %v2785
    %v2787 = vrot.slane %v2771, %v2786
    %v2789 = vunpack.c.l.s4 1966171168
    %v2790 = vunpack.c.0.s8 %v2789
    %v2791 = vlaneseq
    %v2792 = vshrl.u32 %v2791, 7
    %v2793 = vsub.s32 %v2790, %v2792
    %v2794 = vrot.slane %v2778, %v2793
    %v2796 = vunpack.c.l.s4 1966171168
    %v2797 = vunpack.c.0.s8 %v2796
    %v2798 = vlaneseq
    %v2799 = vshrl.u32 %v2798, 7
    %v2800 = vsub.s32 %v2797, %v2799
    %v2801 = vrot.slane %v2779, %v2800
    %v2803 = vunpack.c.l.s4 1966171168
    %v2804 = vunpack.c.0.s8 %v2803
    %v2805 = vlaneseq
    %v2806 = vshrl.u32 %v2805, 7
    %v2807 = vsub.s32 %v2804, %v2806
    %v2808 = vrot.slane %v2780, %v2807
    %v2809 = vcombine.high %v2787, %v2787
    %v2810 = vcombine.high %v2794, %v2794
    %v2811 = vcombine.high %v2801, %v2801
    %v2812 = vcombine.high %v2808, %v2808
    %2821 = vst [vmem:[#allocation8 + $0x4] sm:$0x1] %v2787
    %2822 = vst [vmem:[#allocation8 + $0xc] sm:$0x1] %v2801
    %2823 = vst [vmem:[#allocation8 + $0x14] sm:$0x1] %v2809
    %2824 = vst [vmem:[#allocation8 + $0x1c] sm:$0x1] %v2811
    %2825 = vst [vmem:[#allocation8 + $0x24] sm:$0x1] %v2794
    %2826 = vst [vmem:[#allocation8 + $0x2c] sm:$0x1] %v2808
    %2827 = vst [vmem:[#allocation8 + $0x34] sm:$0x1] %v2810
    %2828 = vst [vmem:[#allocation8 + $0x3c] sm:$0x1] %v2812
    %v2829 = vld [vmem:[%s0 + $0x5] sm:$0x1]
    %v2830 = vld [vmem:[%s0 + $0xd] sm:$0x1]
    %v2831 = vld [vmem:[%s0 + $0x15] sm:$0x1]
    %v2832 = vld [vmem:[%s0 + $0x1d] sm:$0x1]
    %v2833 = vld [vmem:[%s0 + $0x25] sm:$0x1]
    %v2834 = vld [vmem:[%s0 + $0x2d] sm:$0x1]
    %v2835 = vld [vmem:[%s0 + $0x35] sm:$0x1]
    %v2836 = vld [vmem:[%s0 + $0x3d] sm:$0x1]
    %v2837 = vpack.c.bf16 %v2829, %v2829
    %v2838 = vpack.c.bf16 %v2830, %v2830
    %v2839 = vpack.c.bf16 %v2831, %v2831
    %v2840 = vpack.c.bf16 %v2832, %v2832
    %v2841 = vpack.c.bf16 %v2833, %v2833
    %v2842 = vpack.c.bf16 %v2834, %v2834
    %v2843 = vpack.c.bf16 %v2835, %v2835
    %v2844 = vpack.c.bf16 %v2836, %v2836
    %v2845 = vld [vmem:[%s1] sm:$0xff]
    %v2846 = vld [vmem:[%s1 + $0x8] sm:$0xff]
    %v2847 = vld [vmem:[%s1 + $0x10] sm:$0xff]
    %v2848 = vld [vmem:[%s1 + $0x18] sm:$0xff]
    %v2849 = vld [vmem:[%s1 + $0x20] sm:$0xff]
    %v2850 = vld [vmem:[%s1 + $0x28] sm:$0xff]
    %v2851 = vld [vmem:[%s1 + $0x30] sm:$0xff]
    %v2852 = vld [vmem:[%s1 + $0x38] sm:$0xff]
    %v2853 = vpack.c.bf16 %v2762, %v2762
    %v2854 = vld [vmem:[#allocation5] sm:$0xff]
    %v2855 = vld [vmem:[#allocation5 + $0x8] sm:$0xff]
    %v2856 = vld [vmem:[#allocation5 + $0x10] sm:$0xff]
    %v2857 = vld [vmem:[#allocation5 + $0x18] sm:$0xff]
    %v2858 = vld [vmem:[#allocation5 + $0x20] sm:$0xff]
    %v2859 = vld [vmem:[#allocation5 + $0x28] sm:$0xff]
    %v2860 = vld [vmem:[#allocation5 + $0x30] sm:$0xff]
    %v2861 = vld [vmem:[#allocation5 + $0x38] sm:$0xff]
    %v2862 = vld [vmem:[#allocation5 + $0x40] sm:$0xff]
    %v2863 = vld [vmem:[#allocation5 + $0x48] sm:$0xff]
    %v2864 = vld [vmem:[#allocation5 + $0x50] sm:$0xff]
    %v2865 = vld [vmem:[#allocation5 + $0x58] sm:$0xff]
    %v2866 = vld [vmem:[#allocation5 + $0x60] sm:$0xff]
    %v2867 = vld [vmem:[#allocation5 + $0x68] sm:$0xff]
    %v2868 = vld [vmem:[#allocation5 + $0x70] sm:$0xff]
    %v2869 = vld [vmem:[#allocation5 + $0x78] sm:$0xff]
    %v2870 = vld [vmem:[#allocation5 + $0x80] sm:$0xff]
    %v2871 = vld [vmem:[#allocation5 + $0x88] sm:$0xff]
    %v2872 = vld [vmem:[#allocation5 + $0x90] sm:$0xff]
    %v2873 = vld [vmem:[#allocation5 + $0x98] sm:$0xff]
    %v2874 = vld [vmem:[#allocation5 + $0xa0] sm:$0xff]
    %v2875 = vld [vmem:[#allocation5 + $0xa8] sm:$0xff]
    %v2876 = vld [vmem:[#allocation5 + $0xb0] sm:$0xff]
    %v2877 = vld [vmem:[#allocation5 + $0xb8] sm:$0xff]
    %v2878 = vld [vmem:[#allocation5 + $0xc0] sm:$0xff]
    %v2879 = vld [vmem:[#allocation5 + $0xc8] sm:$0xff]
    %v2880 = vld [vmem:[#allocation5 + $0xd0] sm:$0xff]
    %v2881 = vld [vmem:[#allocation5 + $0xd8] sm:$0xff]
    %v2882 = vld [vmem:[#allocation5 + $0xe0] sm:$0xff]
    %v2883 = vld [vmem:[#allocation5 + $0xe8] sm:$0xff]
    %v2884 = vld [vmem:[#allocation5 + $0xf0] sm:$0xff]
    %v2885 = vld [vmem:[#allocation5 + $0xf8] sm:$0xff]
    %v2918 = vunpack.c.l.b16 %v2854
    %v2919 = vunpack.c.h.b16 %v2854
    %v2920 = vunpack.c.l.b16 %v2855
    %v2921 = vunpack.c.h.b16 %v2855
    %v2922 = vunpack.c.l.b16 %v2856
    %v2923 = vunpack.c.h.b16 %v2856
    %v2924 = vunpack.c.l.b16 %v2857
    %v2925 = vunpack.c.h.b16 %v2857
    %v2926 = vunpack.c.l.b16 %v2858
    %v2927 = vunpack.c.h.b16 %v2858
    %v2928 = vunpack.c.l.b16 %v2859
    %v2929 = vunpack.c.h.b16 %v2859
    %v2930 = vunpack.c.l.b16 %v2860
    %v2931 = vunpack.c.h.b16 %v2860
    %v2932 = vunpack.c.l.b16 %v2861
    %v2933 = vunpack.c.h.b16 %v2861
    %v2934 = vunpack.c.l.b16 %v2862
    %v2935 = vunpack.c.h.b16 %v2862
    %v2936 = vunpack.c.l.b16 %v2863
    %v2937 = vunpack.c.h.b16 %v2863
    %v2938 = vunpack.c.l.b16 %v2864
    %v2939 = vunpack.c.h.b16 %v2864
    %v2940 = vunpack.c.l.b16 %v2865
    %v2941 = vunpack.c.h.b16 %v2865
    %v2942 = vunpack.c.l.b16 %v2866
    %v2943 = vunpack.c.h.b16 %v2866
    %v2944 = vunpack.c.l.b16 %v2867
    %v2945 = vunpack.c.h.b16 %v2867
    %v2946 = vunpack.c.l.b16 %v2868
    %v2947 = vunpack.c.h.b16 %v2868
    %v2948 = vunpack.c.l.b16 %v2869
    %v2949 = vunpack.c.h.b16 %v2869
    %v2950 = vunpack.c.l.b16 %v2870
    %v2951 = vunpack.c.h.b16 %v2870
    %v2952 = vunpack.c.l.b16 %v2871
    %v2953 = vunpack.c.h.b16 %v2871
    %v2954 = vunpack.c.l.b16 %v2872
    %v2955 = vunpack.c.h.b16 %v2872
    %v2956 = vunpack.c.l.b16 %v2873
    %v2957 = vunpack.c.h.b16 %v2873
    %v2958 = vunpack.c.l.b16 %v2874
    %v2959 = vunpack.c.h.b16 %v2874
    %v2960 = vunpack.c.l.b16 %v2875
    %v2961 = vunpack.c.h.b16 %v2875
    %v2962 = vunpack.c.l.b16 %v2876
    %v2963 = vunpack.c.h.b16 %v2876
    %v2964 = vunpack.c.l.b16 %v2877
    %v2965 = vunpack.c.h.b16 %v2877
    %v2966 = vunpack.c.l.b16 %v2878
    %v2967 = vunpack.c.h.b16 %v2878
    %v2968 = vunpack.c.l.b16 %v2879
    %v2969 = vunpack.c.h.b16 %v2879
    %v2970 = vunpack.c.l.b16 %v2880
    %v2971 = vunpack.c.h.b16 %v2880
    %v2972 = vunpack.c.l.b16 %v2881
    %v2973 = vunpack.c.h.b16 %v2881
    %v2974 = vunpack.c.l.b16 %v2882
    %v2975 = vunpack.c.h.b16 %v2882
    %v2976 = vunpack.c.l.b16 %v2883
    %v2977 = vunpack.c.h.b16 %v2883
    %v2978 = vunpack.c.l.b16 %v2884
    %v2979 = vunpack.c.h.b16 %v2884
    %v2980 = vunpack.c.l.b16 %v2885
    %v2981 = vunpack.c.h.b16 %v2885
    %v2982 = vpack.c.b16 %v2922, %v2918
    %v2983 = vpack.c.b16 %v2923, %v2919
    %v2984 = vpack.c.b16 %v2924, %v2920
    %v2985 = vpack.c.b16 %v2925, %v2921
    %v2986 = vpack.c.b16 %v2930, %v2926
    %v2987 = vpack.c.b16 %v2931, %v2927
    %v2988 = vpack.c.b16 %v2932, %v2928
    %v2989 = vpack.c.b16 %v2933, %v2929
    %v2990 = vpack.c.b16 %v2938, %v2934
    %v2991 = vpack.c.b16 %v2939, %v2935
    %v2992 = vpack.c.b16 %v2940, %v2936
    %v2993 = vpack.c.b16 %v2941, %v2937
    %v2994 = vpack.c.b16 %v2946, %v2942
    %v2995 = vpack.c.b16 %v2947, %v2943
    %v2996 = vpack.c.b16 %v2948, %v2944
    %v2997 = vpack.c.b16 %v2949, %v2945
    %v2998 = vpack.c.b16 %v2954, %v2950
    %v2999 = vpack.c.b16 %v2955, %v2951
    %v3000 = vpack.c.b16 %v2956, %v2952
    %v3001 = vpack.c.b16 %v2957, %v2953
    %v3002 = vpack.c.b16 %v2962, %v2958
    %v3003 = vpack.c.b16 %v2963, %v2959
    %v3004 = vpack.c.b16 %v2964, %v2960
    %v3005 = vpack.c.b16 %v2965, %v2961
    %v3006 = vpack.c.b16 %v2970, %v2966
    %v3007 = vpack.c.b16 %v2971, %v2967
    %v3008 = vpack.c.b16 %v2972, %v2968
    %v3009 = vpack.c.b16 %v2973, %v2969
    %v3010 = vpack.c.b16 %v2978, %v2974
    %v3011 = vpack.c.b16 %v2979, %v2975
    %v3012 = vpack.c.b16 %v2980, %v2976
    %v3013 = vpack.c.b16 %v2981, %v2977
    %3046 = vmatprep.subr.bf16.mxu0 %v2983
    %3047 = vmatpush1.bf16.msra.mxu0 %v2982
    %3048 = vmatprep.subr.bf16.mxu0 %v2987
    %3049 = vmatpush1.bf16.msra.mxu0 %v2986
    %3050 = vmatprep.subr.bf16.mxu0 %v2991
    %3051 = vmatpush1.bf16.msra.mxu0 %v2990
    %3052 = vmatprep.subr.bf16.mxu0 %v2995
    %3053 = vmatpush1.bf16.msra.mxu0 %v2994
    %3054 = vmatprep.subr.bf16.mxu0 %v2999
    %3055 = vmatpush1.bf16.msra.mxu0 %v2998
    %3056 = vmatprep.subr.bf16.mxu0 %v3003
    %3057 = vmatpush1.bf16.msra.mxu0 %v3002
    %3058 = vmatprep.subr.bf16.mxu0 %v3007
    %3059 = vmatpush1.bf16.msra.mxu0 %v3006
    %3060 = vmatprep.subr.bf16.mxu0 %v3011
    %3061 = vmatpush1.bf16.msra.mxu0 %v3010
    %3062 = vmatprep.subr.bf16.mxu0 0
    %3063 = vmatpush1.bf16.msra.mxu0 0
    %3064 = vmatprep.subr.bf16.mxu0 0
    %3065 = vmatpush1.bf16.msra.mxu0 0
    %3066 = vmatprep.subr.bf16.mxu0 0
    %3067 = vmatpush1.bf16.msra.mxu0 0
    %3068 = vmatprep.subr.bf16.mxu0 0
    %3069 = vmatpush1.bf16.msra.mxu0 0
    %3070 = vmatprep.subr.bf16.mxu0 0
    %3071 = vmatpush1.bf16.msra.mxu0 0
    %3072 = vmatprep.subr.bf16.mxu0 0
    %3073 = vmatpush1.bf16.msra.mxu0 0
    %3074 = vmatprep.subr.bf16.mxu0 0
    %3075 = vmatpush1.bf16.msra.mxu0 0
    %3076 = vmatprep.subr.bf16.mxu0 0
    %3077 = vmatpush1.bf16.msra.mxu0 0
    %3078 = vmatprep.mubr.bf16.mxu0 0
    %3079 = vmatmul.mubr.bf16.gmra.mrb[0].mxu0 %v2853
    %v3080 = vpop.f32.mrb[0].mxu0
    %v3081 = vadd.f32 0.0, %v3080
    %v3082 = vpop.f32.mrb[0].mxu0
    %v3083 = vadd.f32 0.0, %v3082
    %v3084 = vpop.f32.mrb[0].mxu0
    %v3085 = vpop.f32.mrb[0].mxu0
    %3086 = vdwg.mxu0
    %3087 = vmatprep.subr.bf16.mxu0 %v2985
    %3088 = vmatpush1.bf16.msra.mxu0 %v2984
    %3089 = vmatprep.subr.bf16.mxu0 %v2989
    %3090 = vmatpush1.bf16.msra.mxu0 %v2988
    %3091 = vmatprep.subr.bf16.mxu0 %v2993
    %3092 = vmatpush1.bf16.msra.mxu0 %v2992
    %3093 = vmatprep.subr.bf16.mxu0 %v2997
    %3094 = vmatpush1.bf16.msra.mxu0 %v2996
    %3095 = vmatprep.subr.bf16.mxu0 %v3001
    %3096 = vmatpush1.bf16.msra.mxu0 %v3000
    %3097 = vmatprep.subr.bf16.mxu0 %v3005
    %3098 = vmatpush1.bf16.msra.mxu0 %v3004
    %3099 = vmatprep.subr.bf16.mxu0 %v3009
    %3100 = vmatpush1.bf16.msra.mxu0 %v3008
    %3101 = vmatprep.subr.bf16.mxu0 %v3013
    %3102 = vmatpush1.bf16.msra.mxu0 %v3012
    %3103 = vmatprep.subr.bf16.mxu0 0
    %3104 = vmatpush1.bf16.msra.mxu0 0
    %3105 = vmatprep.subr.bf16.mxu0 0
    %3106 = vmatpush1.bf16.msra.mxu0 0
    %3107 = vmatprep.subr.bf16.mxu0 0
    %3108 = vmatpush1.bf16.msra.mxu0 0
    %3109 = vmatprep.subr.bf16.mxu0 0
    %3110 = vmatpush1.bf16.msra.mxu0 0
    %3111 = vmatprep.subr.bf16.mxu0 0
    %3112 = vmatpush1.bf16.msra.mxu0 0
    %3113 = vmatprep.subr.bf16.mxu0 0
    %3114 = vmatpush1.bf16.msra.mxu0 0
    %3115 = vmatprep.subr.bf16.mxu0 0
    %3116 = vmatpush1.bf16.msra.mxu0 0
    %3117 = vmatprep.subr.bf16.mxu0 0
    %3118 = vmatpush1.bf16.msra.mxu0 0
    %3119 = vmatprep.mubr.bf16.mxu0 0
    %3120 = vmatmul.mubr.bf16.gmra.mrb[0].mxu0 %v2853
    %v3121 = vpop.f32.mrb[0].mxu0
    %v3122 = vadd.f32 0.0, %v3121
    %v3123 = vpop.f32.mrb[0].mxu0
    %v3124 = vadd.f32 0.0, %v3123
    %v3125 = vpop.f32.mrb[0].mxu0
    %v3126 = vpop.f32.mrb[0].mxu0
    %3127 = vdwg.mxu0
    %v3136 = vunpack.c.l.b16 %v2837
    %v3137 = vunpack.c.l.b16 %v2838
    %v3138 = vunpack.c.l.b16 %v2839
    %v3139 = vunpack.c.l.b16 %v2840
    %v3140 = vunpack.c.l.b16 %v2841
    %v3141 = vunpack.c.l.b16 %v2842
    %v3142 = vunpack.c.l.b16 %v2843
    %v3143 = vunpack.c.l.b16 %v2844
    %v3144 = vrot.slane %v3137, 7
    %v3145 = vsel %vm371, %v3144, %v3136
    %v3146 = vrot.slane %v3138, 6
    %v3147 = vsel %vm374, %v3146, %v3145
    %v3148 = vrot.slane %v3139, 5
    %v3149 = vsel %vm377, %v3148, %v3147
    %v3150 = vrot.slane %v3140, 4
    %v3151 = vsel %vm380, %v3150, %v3149
    %v3152 = vrot.slane %v3141, 3
    %v3153 = vsel %vm383, %v3152, %v3151
    %v3154 = vrot.slane %v3142, 2
    %v3155 = vsel %vm386, %v3154, %v3153
    %v3156 = vrot.slane %v3143, 1
    %v3157 = vsel %vm389, %v3156, %v3155
    %v3158 = vpack.c.b16 %v3157, %v3157
    %v3167 = vunpack.c.l.b16 %v2845
    %v3168 = vunpack.c.h.b16 %v2845
    %v3169 = vunpack.c.l.b16 %v2846
    %v3170 = vunpack.c.h.b16 %v2846
    %v3171 = vunpack.c.l.b16 %v2847
    %v3172 = vunpack.c.h.b16 %v2847
    %v3173 = vunpack.c.l.b16 %v2848
    %v3174 = vunpack.c.h.b16 %v2848
    %v3175 = vunpack.c.l.b16 %v2849
    %v3176 = vunpack.c.h.b16 %v2849
    %v3177 = vunpack.c.l.b16 %v2850
    %v3178 = vunpack.c.h.b16 %v2850
    %v3179 = vunpack.c.l.b16 %v2851
    %v3180 = vunpack.c.h.b16 %v2851
    %v3181 = vunpack.c.l.b16 %v2852
    %v3182 = vunpack.c.h.b16 %v2852
    %v3183 = vpack.c.b16 %v3171, %v3167
    %v3184 = vpack.c.b16 %v3172, %v3168
    %v3185 = vpack.c.b16 %v3173, %v3169
    %v3186 = vpack.c.b16 %v3174, %v3170
    %v3187 = vpack.c.b16 %v3179, %v3175
    %v3188 = vpack.c.b16 %v3180, %v3176
    %v3189 = vpack.c.b16 %v3181, %v3177
    %v3190 = vpack.c.b16 %v3182, %v3178
    %v3200 = vsel %vm432, %v3158, 0
    %3202 = vmatprep.subr.bf16.mxu0 %v3184
    %3203 = vmatpush1.bf16.msra.mxu0 %v3183
    %3204 = vmatprep.subr.bf16.mxu0 %v3188
    %3205 = vmatpush1.bf16.msra.mxu0 %v3187
    %3206 = vmatprep.subr.bf16.mxu0 0
    %3207 = vmatpush1.bf16.msra.mxu0 0
    %3208 = vmatprep.subr.bf16.mxu0 0
    %3209 = vmatpush1.bf16.msra.mxu0 0
    %3210 = vmatprep.subr.bf16.mxu0 0
    %3211 = vmatpush1.bf16.msra.mxu0 0
    %3212 = vmatprep.subr.bf16.mxu0 0
    %3213 = vmatpush1.bf16.msra.mxu0 0
    %3214 = vmatprep.subr.bf16.mxu0 0
    %3215 = vmatpush1.bf16.msra.mxu0 0
    %3216 = vmatprep.subr.bf16.mxu0 0
    %3217 = vmatpush1.bf16.msra.mxu0 0
    %3218 = vmatprep.subr.bf16.mxu0 0
    %3219 = vmatpush1.bf16.msra.mxu0 0
    %3220 = vmatprep.subr.bf16.mxu0 0
    %3221 = vmatpush1.bf16.msra.mxu0 0
    %3222 = vmatprep.subr.bf16.mxu0 0
    %3223 = vmatpush1.bf16.msra.mxu0 0
    %3224 = vmatprep.subr.bf16.mxu0 0
    %3225 = vmatpush1.bf16.msra.mxu0 0
    %3226 = vmatprep.subr.bf16.mxu0 0
    %3227 = vmatpush1.bf16.msra.mxu0 0
    %3228 = vmatprep.subr.bf16.mxu0 0
    %3229 = vmatpush1.bf16.msra.mxu0 0
    %3230 = vmatprep.subr.bf16.mxu0 0
    %3231 = vmatpush1.bf16.msra.mxu0 0
    %3232 = vmatprep.subr.bf16.mxu0 0
    %3233 = vmatpush1.bf16.msra.mxu0 0
    %3234 = vmatprep.mubr.bf16.mxu0 0
    %3235 = vmatmul.mubr.bf16.gmra.mrb[0].mxu0 %v3200
    %v3236 = vpop.f32.mrb[0].mxu0
    %v3237 = vadd.f32 %v3081, %v3236
    %v3238 = vpop.f32.mrb[0].mxu0
    %v3239 = vadd.f32 %v3083, %v3238
    %v3240 = vpop.f32.mrb[0].mxu0
    %v3241 = vpop.f32.mrb[0].mxu0
    %3242 = vdwg.mxu0
    %3243 = vmatprep.subr.bf16.mxu0 %v3186
    %3244 = vmatpush1.bf16.msra.mxu0 %v3185
    %3245 = vmatprep.subr.bf16.mxu0 %v3190
    %3246 = vmatpush1.bf16.msra.mxu0 %v3189
    %3247 = vmatprep.subr.bf16.mxu0 0
    %3248 = vmatpush1.bf16.msra.mxu0 0
    %3249 = vmatprep.subr.bf16.mxu0 0
    %3250 = vmatpush1.bf16.msra.mxu0 0
    %3251 = vmatprep.subr.bf16.mxu0 0
    %3252 = vmatpush1.bf16.msra.mxu0 0
    %3253 = vmatprep.subr.bf16.mxu0 0
    %3254 = vmatpush1.bf16.msra.mxu0 0
    %3255 = vmatprep.subr.bf16.mxu0 0
    %3256 = vmatpush1.bf16.msra.mxu0 0
    %3257 = vmatprep.subr.bf16.mxu0 0
    %3258 = vmatpush1.bf16.msra.mxu0 0
    %3259 = vmatprep.subr.bf16.mxu0 0
    %3260 = vmatpush1.bf16.msra.mxu0 0
    %3261 = vmatprep.subr.bf16.mxu0 0
    %3262 = vmatpush1.bf16.msra.mxu0 0
    %3263 = vmatprep.subr.bf16.mxu0 0
    %3264 = vmatpush1.bf16.msra.mxu0 0
    %3265 = vmatprep.subr.bf16.mxu0 0
    %3266 = vmatpush1.bf16.msra.mxu0 0
    %3267 = vmatprep.subr.bf16.mxu0 0
    %3268 = vmatpush1.bf16.msra.mxu0 0
    %3269 = vmatprep.subr.bf16.mxu0 0
    %3270 = vmatpush1.bf16.msra.mxu0 0
    %3271 = vmatprep.subr.bf16.mxu0 0
    %3272 = vmatpush1.bf16.msra.mxu0 0
    %3273 = vmatprep.subr.bf16.mxu0 0
    %3274 = vmatpush1.bf16.msra.mxu0 0
    %3275 = vmatprep.mubr.bf16.mxu0 0
    %3276 = vmatmul.mubr.bf16.gmra.mrb[0].mxu0 %v3200
    %v3277 = vpop.f32.mrb[0].mxu0
    %v3278 = vadd.f32 %v3122, %v3277
    %v3279 = vpop.f32.mrb[0].mxu0
    %v3280 = vadd.f32 %v3124, %v3279
    %v3281 = vpop.f32.mrb[0].mxu0
    %v3282 = vpop.f32.mrb[0].mxu0
    %3283 = vdwg.mxu0
    %v3284 = vadd.f32 %v3237, %v522
    %v3285 = vadd.f32 %v3239, %v526
    %v3286 = vadd.f32 %v3278, %v530
    %v3287 = vadd.f32 %v3280, %v534
    %v3288 = vxor.u32 %v3284, 2147483648
    %v3289 = vmul.f32 %v3288, 1.442695
    %v3290 = vpow.pop %v3289
    %v3291 = vadd.f32 %v3290, 1.0
    %v3292 = vrcp.pop %v3291
    %v3293 = vmul.f32 1.0, %v3292
    %v3294 = vxor.u32 %v3285, 2147483648
    %v3295 = vmul.f32 %v3294, 1.442695
    %v3296 = vpow.pop %v3295
    %v3297 = vadd.f32 %v3296, 1.0
    %v3298 = vrcp.pop %v3297
    %v3299 = vmul.f32 1.0, %v3298
    %v3300 = vtanh.pop %v3286
    %v3301 = vxor.u32 %v3287, 2147483648
    %v3302 = vmul.f32 %v3301, 1.442695
    %v3303 = vpow.pop %v3302
    %v3304 = vadd.f32 %v3303, 1.0
    %v3305 = vrcp.pop %v3304
    %v3306 = vmul.f32 1.0, %v3305
    %v3307 = vmul.f32 %v3299, %v2760
    %v3308 = vmul.f32 %v3293, %v3300
    %v3309 = vadd.f32 %v3307, %v3308
    %v3310 = vtanh.pop %v3309
    %v3311 = vmul.f32 %v3306, %v3310
    %v3313 = vcombine.high %v3311, %v3311
    %v3315 = vunpack.c.l.s4 1966171168
    %v3316 = vunpack.c.0.s8 %v3315
    %v3317 = vlaneseq
    %v3318 = vshrl.u32 %v3317, 7
    %v3319 = vsub.s32 %v3316, %v3318
    %v3320 = vrot.slane %v3311, %v3319
    %v3322 = vunpack.c.l.s4 1966171168
    %v3323 = vunpack.c.0.s8 %v3322
    %v3324 = vlaneseq
    %v3325 = vshrl.u32 %v3324, 7
    %v3326 = vsub.s32 %v3323, %v3325
    %v3327 = vrot.slane %v3313, %v3326
    %v3328 = vcombine.high %v3320, %v3320
    %v3329 = vcombine.high %v3327, %v3327
    %v3331 = vunpack.c.l.s4 1966171168
    %v3332 = vunpack.c.0.s8 %v3331
    %v3333 = vlaneseq
    %v3334 = vshrl.u32 %v3333, 7
    %v3335 = vsub.s32 %v3332, %v3334
    %v3336 = vrot.slane %v3320, %v3335
    %v3338 = vunpack.c.l.s4 1966171168
    %v3339 = vunpack.c.0.s8 %v3338
    %v3340 = vlaneseq
    %v3341 = vshrl.u32 %v3340, 7
    %v3342 = vsub.s32 %v3339, %v3341
    %v3343 = vrot.slane %v3327, %v3342
    %v3345 = vunpack.c.l.s4 1966171168
    %v3346 = vunpack.c.0.s8 %v3345
    %v3347 = vlaneseq
    %v3348 = vshrl.u32 %v3347, 7
    %v3349 = vsub.s32 %v3346, %v3348
    %v3350 = vrot.slane %v3328, %v3349
    %v3352 = vunpack.c.l.s4 1966171168
    %v3353 = vunpack.c.0.s8 %v3352
    %v3354 = vlaneseq
    %v3355 = vshrl.u32 %v3354, 7
    %v3356 = vsub.s32 %v3353, %v3355
    %v3357 = vrot.slane %v3329, %v3356
    %v3358 = vcombine.high %v3336, %v3336
    %v3359 = vcombine.high %v3343, %v3343
    %v3360 = vcombine.high %v3350, %v3350
    %v3361 = vcombine.high %v3357, %v3357
    %3370 = vst [vmem:[#allocation8 + $0x5] sm:$0x1] %v3336
    %3371 = vst [vmem:[#allocation8 + $0xd] sm:$0x1] %v3350
    %3372 = vst [vmem:[#allocation8 + $0x15] sm:$0x1] %v3358
    %3373 = vst [vmem:[#allocation8 + $0x1d] sm:$0x1] %v3360
    %3374 = vst [vmem:[#allocation8 + $0x25] sm:$0x1] %v3343
    %3375 = vst [vmem:[#allocation8 + $0x2d] sm:$0x1] %v3357
    %3376 = vst [vmem:[#allocation8 + $0x35] sm:$0x1] %v3359
    %3377 = vst [vmem:[#allocation8 + $0x3d] sm:$0x1] %v3361
    %v3378 = vld [vmem:[%s0 + $0x6] sm:$0x1]
    %v3379 = vld [vmem:[%s0 + $0xe] sm:$0x1]
    %v3380 = vld [vmem:[%s0 + $0x16] sm:$0x1]
    %v3381 = vld [vmem:[%s0 + $0x1e] sm:$0x1]
    %v3382 = vld [vmem:[%s0 + $0x26] sm:$0x1]
    %v3383 = vld [vmem:[%s0 + $0x2e] sm:$0x1]
    %v3384 = vld [vmem:[%s0 + $0x36] sm:$0x1]
    %v3385 = vld [vmem:[%s0 + $0x3e] sm:$0x1]
    %v3386 = vpack.c.bf16 %v3378, %v3378
    %v3387 = vpack.c.bf16 %v3379, %v3379
    %v3388 = vpack.c.bf16 %v3380, %v3380
    %v3389 = vpack.c.bf16 %v3381, %v3381
    %v3390 = vpack.c.bf16 %v3382, %v3382
    %v3391 = vpack.c.bf16 %v3383, %v3383
    %v3392 = vpack.c.bf16 %v3384, %v3384
    %v3393 = vpack.c.bf16 %v3385, %v3385
    %v3394 = vld [vmem:[%s1] sm:$0xff]
    %v3395 = vld [vmem:[%s1 + $0x8] sm:$0xff]
    %v3396 = vld [vmem:[%s1 + $0x10] sm:$0xff]
    %v3397 = vld [vmem:[%s1 + $0x18] sm:$0xff]
    %v3398 = vld [vmem:[%s1 + $0x20] sm:$0xff]
    %v3399 = vld [vmem:[%s1 + $0x28] sm:$0xff]
    %v3400 = vld [vmem:[%s1 + $0x30] sm:$0xff]
    %v3401 = vld [vmem:[%s1 + $0x38] sm:$0xff]
    %v3402 = vpack.c.bf16 %v3311, %v3311
    %v3403 = vld [vmem:[#allocation5] sm:$0xff]
    %v3404 = vld [vmem:[#allocation5 + $0x8] sm:$0xff]
    %v3405 = vld [vmem:[#allocation5 + $0x10] sm:$0xff]
    %v3406 = vld [vmem:[#allocation5 + $0x18] sm:$0xff]
    %v3407 = vld [vmem:[#allocation5 + $0x20] sm:$0xff]
    %v3408 = vld [vmem:[#allocation5 + $0x28] sm:$0xff]
    %v3409 = vld [vmem:[#allocation5 + $0x30] sm:$0xff]
    %v3410 = vld [vmem:[#allocation5 + $0x38] sm:$0xff]
    %v3411 = vld [vmem:[#allocation5 + $0x40] sm:$0xff]
    %v3412 = vld [vmem:[#allocation5 + $0x48] sm:$0xff]
    %v3413 = vld [vmem:[#allocation5 + $0x50] sm:$0xff]
    %v3414 = vld [vmem:[#allocation5 + $0x58] sm:$0xff]
    %v3415 = vld [vmem:[#allocation5 + $0x60] sm:$0xff]
    %v3416 = vld [vmem:[#allocation5 + $0x68] sm:$0xff]
    %v3417 = vld [vmem:[#allocation5 + $0x70] sm:$0xff]
    %v3418 = vld [vmem:[#allocation5 + $0x78] sm:$0xff]
    %v3419 = vld [vmem:[#allocation5 + $0x80] sm:$0xff]
    %v3420 = vld [vmem:[#allocation5 + $0x88] sm:$0xff]
    %v3421 = vld [vmem:[#allocation5 + $0x90] sm:$0xff]
    %v3422 = vld [vmem:[#allocation5 + $0x98] sm:$0xff]
    %v3423 = vld [vmem:[#allocation5 + $0xa0] sm:$0xff]
    %v3424 = vld [vmem:[#allocation5 + $0xa8] sm:$0xff]
    %v3425 = vld [vmem:[#allocation5 + $0xb0] sm:$0xff]
    %v3426 = vld [vmem:[#allocation5 + $0xb8] sm:$0xff]
    %v3427 = vld [vmem:[#allocation5 + $0xc0] sm:$0xff]
    %v3428 = vld [vmem:[#allocation5 + $0xc8] sm:$0xff]
    %v3429 = vld [vmem:[#allocation5 + $0xd0] sm:$0xff]
    %v3430 = vld [vmem:[#allocation5 + $0xd8] sm:$0xff]
    %v3431 = vld [vmem:[#allocation5 + $0xe0] sm:$0xff]
    %v3432 = vld [vmem:[#allocation5 + $0xe8] sm:$0xff]
    %v3433 = vld [vmem:[#allocation5 + $0xf0] sm:$0xff]
    %v3434 = vld [vmem:[#allocation5 + $0xf8] sm:$0xff]
    %v3467 = vunpack.c.l.b16 %v3403
    %v3468 = vunpack.c.h.b16 %v3403
    %v3469 = vunpack.c.l.b16 %v3404
    %v3470 = vunpack.c.h.b16 %v3404
    %v3471 = vunpack.c.l.b16 %v3405
    %v3472 = vunpack.c.h.b16 %v3405
    %v3473 = vunpack.c.l.b16 %v3406
    %v3474 = vunpack.c.h.b16 %v3406
    %v3475 = vunpack.c.l.b16 %v3407
    %v3476 = vunpack.c.h.b16 %v3407
    %v3477 = vunpack.c.l.b16 %v3408
    %v3478 = vunpack.c.h.b16 %v3408
    %v3479 = vunpack.c.l.b16 %v3409
    %v3480 = vunpack.c.h.b16 %v3409
    %v3481 = vunpack.c.l.b16 %v3410
    %v3482 = vunpack.c.h.b16 %v3410
    %v3483 = vunpack.c.l.b16 %v3411
    %v3484 = vunpack.c.h.b16 %v3411
    %v3485 = vunpack.c.l.b16 %v3412
    %v3486 = vunpack.c.h.b16 %v3412
    %v3487 = vunpack.c.l.b16 %v3413
    %v3488 = vunpack.c.h.b16 %v3413
    %v3489 = vunpack.c.l.b16 %v3414
    %v3490 = vunpack.c.h.b16 %v3414
    %v3491 = vunpack.c.l.b16 %v3415
    %v3492 = vunpack.c.h.b16 %v3415
    %v3493 = vunpack.c.l.b16 %v3416
    %v3494 = vunpack.c.h.b16 %v3416
    %v3495 = vunpack.c.l.b16 %v3417
    %v3496 = vunpack.c.h.b16 %v3417
    %v3497 = vunpack.c.l.b16 %v3418
    %v3498 = vunpack.c.h.b16 %v3418
    %v3499 = vunpack.c.l.b16 %v3419
    %v3500 = vunpack.c.h.b16 %v3419
    %v3501 = vunpack.c.l.b16 %v3420
    %v3502 = vunpack.c.h.b16 %v3420
    %v3503 = vunpack.c.l.b16 %v3421
    %v3504 = vunpack.c.h.b16 %v3421
    %v3505 = vunpack.c.l.b16 %v3422
    %v3506 = vunpack.c.h.b16 %v3422
    %v3507 = vunpack.c.l.b16 %v3423
    %v3508 = vunpack.c.h.b16 %v3423
    %v3509 = vunpack.c.l.b16 %v3424
    %v3510 = vunpack.c.h.b16 %v3424
    %v3511 = vunpack.c.l.b16 %v3425
    %v3512 = vunpack.c.h.b16 %v3425
    %v3513 = vunpack.c.l.b16 %v3426
    %v3514 = vunpack.c.h.b16 %v3426
    %v3515 = vunpack.c.l.b16 %v3427
    %v3516 = vunpack.c.h.b16 %v3427
    %v3517 = vunpack.c.l.b16 %v3428
    %v3518 = vunpack.c.h.b16 %v3428
    %v3519 = vunpack.c.l.b16 %v3429
    %v3520 = vunpack.c.h.b16 %v3429
    %v3521 = vunpack.c.l.b16 %v3430
    %v3522 = vunpack.c.h.b16 %v3430
    %v3523 = vunpack.c.l.b16 %v3431
    %v3524 = vunpack.c.h.b16 %v3431
    %v3525 = vunpack.c.l.b16 %v3432
    %v3526 = vunpack.c.h.b16 %v3432
    %v3527 = vunpack.c.l.b16 %v3433
    %v3528 = vunpack.c.h.b16 %v3433
    %v3529 = vunpack.c.l.b16 %v3434
    %v3530 = vunpack.c.h.b16 %v3434
    %v3531 = vpack.c.b16 %v3471, %v3467
    %v3532 = vpack.c.b16 %v3472, %v3468
    %v3533 = vpack.c.b16 %v3473, %v3469
    %v3534 = vpack.c.b16 %v3474, %v3470
    %v3535 = vpack.c.b16 %v3479, %v3475
    %v3536 = vpack.c.b16 %v3480, %v3476
    %v3537 = vpack.c.b16 %v3481, %v3477
    %v3538 = vpack.c.b16 %v3482, %v3478
    %v3539 = vpack.c.b16 %v3487, %v3483
    %v3540 = vpack.c.b16 %v3488, %v3484
    %v3541 = vpack.c.b16 %v3489, %v3485
    %v3542 = vpack.c.b16 %v3490, %v3486
    %v3543 = vpack.c.b16 %v3495, %v3491
    %v3544 = vpack.c.b16 %v3496, %v3492
    %v3545 = vpack.c.b16 %v3497, %v3493
    %v3546 = vpack.c.b16 %v3498, %v3494
    %v3547 = vpack.c.b16 %v3503, %v3499
    %v3548 = vpack.c.b16 %v3504, %v3500
    %v3549 = vpack.c.b16 %v3505, %v3501
    %v3550 = vpack.c.b16 %v3506, %v3502
    %v3551 = vpack.c.b16 %v3511, %v3507
    %v3552 = vpack.c.b16 %v3512, %v3508
    %v3553 = vpack.c.b16 %v3513, %v3509
    %v3554 = vpack.c.b16 %v3514, %v3510
    %v3555 = vpack.c.b16 %v3519, %v3515
    %v3556 = vpack.c.b16 %v3520, %v3516
    %v3557 = vpack.c.b16 %v3521, %v3517
    %v3558 = vpack.c.b16 %v3522, %v3518
    %v3559 = vpack.c.b16 %v3527, %v3523
    %v3560 = vpack.c.b16 %v3528, %v3524
    %v3561 = vpack.c.b16 %v3529, %v3525
    %v3562 = vpack.c.b16 %v3530, %v3526
    %3595 = vmatprep.subr.bf16.mxu0 %v3532
    %3596 = vmatpush1.bf16.msra.mxu0 %v3531
    %3597 = vmatprep.subr.bf16.mxu0 %v3536
    %3598 = vmatpush1.bf16.msra.mxu0 %v3535
    %3599 = vmatprep.subr.bf16.mxu0 %v3540
    %3600 = vmatpush1.bf16.msra.mxu0 %v3539
    %3601 = vmatprep.subr.bf16.mxu0 %v3544
    %3602 = vmatpush1.bf16.msra.mxu0 %v3543
    %3603 = vmatprep.subr.bf16.mxu0 %v3548
    %3604 = vmatpush1.bf16.msra.mxu0 %v3547
    %3605 = vmatprep.subr.bf16.mxu0 %v3552
    %3606 = vmatpush1.bf16.msra.mxu0 %v3551
    %3607 = vmatprep.subr.bf16.mxu0 %v3556
    %3608 = vmatpush1.bf16.msra.mxu0 %v3555
    %3609 = vmatprep.subr.bf16.mxu0 %v3560
    %3610 = vmatpush1.bf16.msra.mxu0 %v3559
    %3611 = vmatprep.subr.bf16.mxu0 0
    %3612 = vmatpush1.bf16.msra.mxu0 0
    %3613 = vmatprep.subr.bf16.mxu0 0
    %3614 = vmatpush1.bf16.msra.mxu0 0
    %3615 = vmatprep.subr.bf16.mxu0 0
    %3616 = vmatpush1.bf16.msra.mxu0 0
    %3617 = vmatprep.subr.bf16.mxu0 0
    %3618 = vmatpush1.bf16.msra.mxu0 0
    %3619 = vmatprep.subr.bf16.mxu0 0
    %3620 = vmatpush1.bf16.msra.mxu0 0
    %3621 = vmatprep.subr.bf16.mxu0 0
    %3622 = vmatpush1.bf16.msra.mxu0 0
    %3623 = vmatprep.subr.bf16.mxu0 0
    %3624 = vmatpush1.bf16.msra.mxu0 0
    %3625 = vmatprep.subr.bf16.mxu0 0
    %3626 = vmatpush1.bf16.msra.mxu0 0
    %3627 = vmatprep.mubr.bf16.mxu0 0
    %3628 = vmatmul.mubr.bf16.gmra.mrb[0].mxu0 %v3402
    %v3629 = vpop.f32.mrb[0].mxu0
    %v3630 = vadd.f32 0.0, %v3629
    %v3631 = vpop.f32.mrb[0].mxu0
    %v3632 = vadd.f32 0.0, %v3631
    %v3633 = vpop.f32.mrb[0].mxu0
    %v3634 = vpop.f32.mrb[0].mxu0
    %3635 = vdwg.mxu0
    %3636 = vmatprep.subr.bf16.mxu0 %v3534
    %3637 = vmatpush1.bf16.msra.mxu0 %v3533
    %3638 = vmatprep.subr.bf16.mxu0 %v3538
    %3639 = vmatpush1.bf16.msra.mxu0 %v3537
    %3640 = vmatprep.subr.bf16.mxu0 %v3542
    %3641 = vmatpush1.bf16.msra.mxu0 %v3541
    %3642 = vmatprep.subr.bf16.mxu0 %v3546
    %3643 = vmatpush1.bf16.msra.mxu0 %v3545
    %3644 = vmatprep.subr.bf16.mxu0 %v3550
    %3645 = vmatpush1.bf16.msra.mxu0 %v3549
    %3646 = vmatprep.subr.bf16.mxu0 %v3554
    %3647 = vmatpush1.bf16.msra.mxu0 %v3553
    %3648 = vmatprep.subr.bf16.mxu0 %v3558
    %3649 = vmatpush1.bf16.msra.mxu0 %v3557
    %3650 = vmatprep.subr.bf16.mxu0 %v3562
    %3651 = vmatpush1.bf16.msra.mxu0 %v3561
    %3652 = vmatprep.subr.bf16.mxu0 0
    %3653 = vmatpush1.bf16.msra.mxu0 0
    %3654 = vmatprep.subr.bf16.mxu0 0
    %3655 = vmatpush1.bf16.msra.mxu0 0
    %3656 = vmatprep.subr.bf16.mxu0 0
    %3657 = vmatpush1.bf16.msra.mxu0 0
    %3658 = vmatprep.subr.bf16.mxu0 0
    %3659 = vmatpush1.bf16.msra.mxu0 0
    %3660 = vmatprep.subr.bf16.mxu0 0
    %3661 = vmatpush1.bf16.msra.mxu0 0
    %3662 = vmatprep.subr.bf16.mxu0 0
    %3663 = vmatpush1.bf16.msra.mxu0 0
    %3664 = vmatprep.subr.bf16.mxu0 0
    %3665 = vmatpush1.bf16.msra.mxu0 0
    %3666 = vmatprep.subr.bf16.mxu0 0
    %3667 = vmatpush1.bf16.msra.mxu0 0
    %3668 = vmatprep.mubr.bf16.mxu0 0
    %3669 = vmatmul.mubr.bf16.gmra.mrb[0].mxu0 %v3402
    %v3670 = vpop.f32.mrb[0].mxu0
    %v3671 = vadd.f32 0.0, %v3670
    %v3672 = vpop.f32.mrb[0].mxu0
    %v3673 = vadd.f32 0.0, %v3672
    %v3674 = vpop.f32.mrb[0].mxu0
    %v3675 = vpop.f32.mrb[0].mxu0
    %3676 = vdwg.mxu0
    %v3685 = vunpack.c.l.b16 %v3386
    %v3686 = vunpack.c.l.b16 %v3387
    %v3687 = vunpack.c.l.b16 %v3388
    %v3688 = vunpack.c.l.b16 %v3389
    %v3689 = vunpack.c.l.b16 %v3390
    %v3690 = vunpack.c.l.b16 %v3391
    %v3691 = vunpack.c.l.b16 %v3392
    %v3692 = vunpack.c.l.b16 %v3393
    %v3693 = vrot.slane %v3686, 7
    %v3694 = vsel %vm371, %v3693, %v3685
    %v3695 = vrot.slane %v3687, 6
    %v3696 = vsel %vm374, %v3695, %v3694
    %v3697 = vrot.slane %v3688, 5
    %v3698 = vsel %vm377, %v3697, %v3696
    %v3699 = vrot.slane %v3689, 4
    %v3700 = vsel %vm380, %v3699, %v3698
    %v3701 = vrot.slane %v3690, 3
    %v3702 = vsel %vm383, %v3701, %v3700
    %v3703 = vrot.slane %v3691, 2
    %v3704 = vsel %vm386, %v3703, %v3702
    %v3705 = vrot.slane %v3692, 1
    %v3706 = vsel %vm389, %v3705, %v3704
    %v3707 = vpack.c.b16 %v3706, %v3706
    %v3716 = vunpack.c.l.b16 %v3394
    %v3717 = vunpack.c.h.b16 %v3394
    %v3718 = vunpack.c.l.b16 %v3395
    %v3719 = vunpack.c.h.b16 %v3395
    %v3720 = vunpack.c.l.b16 %v3396
    %v3721 = vunpack.c.h.b16 %v3396
    %v3722 = vunpack.c.l.b16 %v3397
    %v3723 = vunpack.c.h.b16 %v3397
    %v3724 = vunpack.c.l.b16 %v3398
    %v3725 = vunpack.c.h.b16 %v3398
    %v3726 = vunpack.c.l.b16 %v3399
    %v3727 = vunpack.c.h.b16 %v3399
    %v3728 = vunpack.c.l.b16 %v3400
    %v3729 = vunpack.c.h.b16 %v3400
    %v3730 = vunpack.c.l.b16 %v3401
    %v3731 = vunpack.c.h.b16 %v3401
    %v3732 = vpack.c.b16 %v3720, %v3716
    %v3733 = vpack.c.b16 %v3721, %v3717
    %v3734 = vpack.c.b16 %v3722, %v3718
    %v3735 = vpack.c.b16 %v3723, %v3719
    %v3736 = vpack.c.b16 %v3728, %v3724
    %v3737 = vpack.c.b16 %v3729, %v3725
    %v3738 = vpack.c.b16 %v3730, %v3726
    %v3739 = vpack.c.b16 %v3731, %v3727
    %v3749 = vsel %vm432, %v3707, 0
    %3751 = vmatprep.subr.bf16.mxu0 %v3733
    %3752 = vmatpush1.bf16.msra.mxu0 %v3732
    %3753 = vmatprep.subr.bf16.mxu0 %v3737
    %3754 = vmatpush1.bf16.msra.mxu0 %v3736
    %3755 = vmatprep.subr.bf16.mxu0 0
    %3756 = vmatpush1.bf16.msra.mxu0 0
    %3757 = vmatprep.subr.bf16.mxu0 0
    %3758 = vmatpush1.bf16.msra.mxu0 0
    %3759 = vmatprep.subr.bf16.mxu0 0
    %3760 = vmatpush1.bf16.msra.mxu0 0
    %3761 = vmatprep.subr.bf16.mxu0 0
    %3762 = vmatpush1.bf16.msra.mxu0 0
    %3763 = vmatprep.subr.bf16.mxu0 0
    %3764 = vmatpush1.bf16.msra.mxu0 0
    %3765 = vmatprep.subr.bf16.mxu0 0
    %3766 = vmatpush1.bf16.msra.mxu0 0
    %3767 = vmatprep.subr.bf16.mxu0 0
    %3768 = vmatpush1.bf16.msra.mxu0 0
    %3769 = vmatprep.subr.bf16.mxu0 0
    %3770 = vmatpush1.bf16.msra.mxu0 0
    %3771 = vmatprep.subr.bf16.mxu0 0
    %3772 = vmatpush1.bf16.msra.mxu0 0
    %3773 = vmatprep.subr.bf16.mxu0 0
    %3774 = vmatpush1.bf16.msra.mxu0 0
    %3775 = vmatprep.subr.bf16.mxu0 0
    %3776 = vmatpush1.bf16.msra.mxu0 0
    %3777 = vmatprep.subr.bf16.mxu0 0
    %3778 = vmatpush1.bf16.msra.mxu0 0
    %3779 = vmatprep.subr.bf16.mxu0 0
    %3780 = vmatpush1.bf16.msra.mxu0 0
    %3781 = vmatprep.subr.bf16.mxu0 0
    %3782 = vmatpush1.bf16.msra.mxu0 0
    %3783 = vmatprep.mubr.bf16.mxu0 0
    %3784 = vmatmul.mubr.bf16.gmra.mrb[0].mxu0 %v3749
    %v3785 = vpop.f32.mrb[0].mxu0
    %v3786 = vadd.f32 %v3630, %v3785
    %v3787 = vpop.f32.mrb[0].mxu0
    %v3788 = vadd.f32 %v3632, %v3787
    %v3789 = vpop.f32.mrb[0].mxu0
    %v3790 = vpop.f32.mrb[0].mxu0
    %3791 = vdwg.mxu0
    %3792 = vmatprep.subr.bf16.mxu0 %v3735
    %3793 = vmatpush1.bf16.msra.mxu0 %v3734
    %3794 = vmatprep.subr.bf16.mxu0 %v3739
    %3795 = vmatpush1.bf16.msra.mxu0 %v3738
    %3796 = vmatprep.subr.bf16.mxu0 0
    %3797 = vmatpush1.bf16.msra.mxu0 0
    %3798 = vmatprep.subr.bf16.mxu0 0
    %3799 = vmatpush1.bf16.msra.mxu0 0
    %3800 = vmatprep.subr.bf16.mxu0 0
    %3801 = vmatpush1.bf16.msra.mxu0 0
    %3802 = vmatprep.subr.bf16.mxu0 0
    %3803 = vmatpush1.bf16.msra.mxu0 0
    %3804 = vmatprep.subr.bf16.mxu0 0
    %3805 = vmatpush1.bf16.msra.mxu0 0
    %3806 = vmatprep.subr.bf16.mxu0 0
    %3807 = vmatpush1.bf16.msra.mxu0 0
    %3808 = vmatprep.subr.bf16.mxu0 0
    %3809 = vmatpush1.bf16.msra.mxu0 0
    %3810 = vmatprep.subr.bf16.mxu0 0
    %3811 = vmatpush1.bf16.msra.mxu0 0
    %3812 = vmatprep.subr.bf16.mxu0 0
    %3813 = vmatpush1.bf16.msra.mxu0 0
    %3814 = vmatprep.subr.bf16.mxu0 0
    %3815 = vmatpush1.bf16.msra.mxu0 0
    %3816 = vmatprep.subr.bf16.mxu0 0
    %3817 = vmatpush1.bf16.msra.mxu0 0
    %3818 = vmatprep.subr.bf16.mxu0 0
    %3819 = vmatpush1.bf16.msra.mxu0 0
    %3820 = vmatprep.subr.bf16.mxu0 0
    %3821 = vmatpush1.bf16.msra.mxu0 0
    %3822 = vmatprep.subr.bf16.mxu0 0
    %3823 = vmatpush1.bf16.msra.mxu0 0
    %3824 = vmatprep.mubr.bf16.mxu0 0
    %3825 = vmatmul.mubr.bf16.gmra.mrb[0].mxu0 %v3749
    %v3826 = vpop.f32.mrb[0].mxu0
    %v3827 = vadd.f32 %v3671, %v3826
    %v3828 = vpop.f32.mrb[0].mxu0
    %v3829 = vadd.f32 %v3673, %v3828
    %v3830 = vpop.f32.mrb[0].mxu0
    %v3831 = vpop.f32.mrb[0].mxu0
    %3832 = vdwg.mxu0
    %v3833 = vadd.f32 %v3786, %v522
    %v3834 = vadd.f32 %v3788, %v526
    %v3835 = vadd.f32 %v3827, %v530
    %v3836 = vadd.f32 %v3829, %v534
    %v3837 = vxor.u32 %v3833, 2147483648
    %v3838 = vmul.f32 %v3837, 1.442695
    %v3839 = vpow.pop %v3838
    %v3840 = vadd.f32 %v3839, 1.0
    %v3841 = vrcp.pop %v3840
    %v3842 = vmul.f32 1.0, %v3841
    %v3843 = vxor.u32 %v3834, 2147483648
    %v3844 = vmul.f32 %v3843, 1.442695
    %v3845 = vpow.pop %v3844
    %v3846 = vadd.f32 %v3845, 1.0
    %v3847 = vrcp.pop %v3846
    %v3848 = vmul.f32 1.0, %v3847
    %v3849 = vtanh.pop %v3835
    %v3850 = vxor.u32 %v3836, 2147483648
    %v3851 = vmul.f32 %v3850, 1.442695
    %v3852 = vpow.pop %v3851
    %v3853 = vadd.f32 %v3852, 1.0
    %v3854 = vrcp.pop %v3853
    %v3855 = vmul.f32 1.0, %v3854
    %v3856 = vmul.f32 %v3848, %v3309
    %v3857 = vmul.f32 %v3842, %v3849
    %v3858 = vadd.f32 %v3856, %v3857
    %v3859 = vtanh.pop %v3858
    %v3860 = vmul.f32 %v3855, %v3859
    %v3862 = vcombine.high %v3860, %v3860
    %v3864 = vunpack.c.l.s4 1966171168
    %v3865 = vunpack.c.0.s8 %v3864
    %v3866 = vlaneseq
    %v3867 = vshrl.u32 %v3866, 7
    %v3868 = vsub.s32 %v3865, %v3867
    %v3869 = vrot.slane %v3860, %v3868
    %v3871 = vunpack.c.l.s4 1966171168
    %v3872 = vunpack.c.0.s8 %v3871
    %v3873 = vlaneseq
    %v3874 = vshrl.u32 %v3873, 7
    %v3875 = vsub.s32 %v3872, %v3874
    %v3876 = vrot.slane %v3862, %v3875
    %v3877 = vcombine.high %v3869, %v3869
    %v3878 = vcombine.high %v3876, %v3876
    %v3880 = vunpack.c.l.s4 1966171168
    %v3881 = vunpack.c.0.s8 %v3880
    %v3882 = vlaneseq
    %v3883 = vshrl.u32 %v3882, 7
    %v3884 = vsub.s32 %v3881, %v3883
    %v3885 = vrot.slane %v3869, %v3884
    %v3887 = vunpack.c.l.s4 1966171168
    %v3888 = vunpack.c.0.s8 %v3887
    %v3889 = vlaneseq
    %v3890 = vshrl.u32 %v3889, 7
    %v3891 = vsub.s32 %v3888, %v3890
    %v3892 = vrot.slane %v3876, %v3891
    %v3894 = vunpack.c.l.s4 1966171168
    %v3895 = vunpack.c.0.s8 %v3894
    %v3896 = vlaneseq
    %v3897 = vshrl.u32 %v3896, 7
    %v3898 = vsub.s32 %v3895, %v3897
    %v3899 = vrot.slane %v3877, %v3898
    %v3901 = vunpack.c.l.s4 1966171168
    %v3902 = vunpack.c.0.s8 %v3901
    %v3903 = vlaneseq
    %v3904 = vshrl.u32 %v3903, 7
    %v3905 = vsub.s32 %v3902, %v3904
    %v3906 = vrot.slane %v3878, %v3905
    %v3907 = vcombine.high %v3885, %v3885
    %v3908 = vcombine.high %v3892, %v3892
    %v3909 = vcombine.high %v3899, %v3899
    %v3910 = vcombine.high %v3906, %v3906
    %3919 = vst [vmem:[#allocation8 + $0x6] sm:$0x1] %v3885
    %3920 = vst [vmem:[#allocation8 + $0xe] sm:$0x1] %v3899
    %3921 = vst [vmem:[#allocation8 + $0x16] sm:$0x1] %v3907
    %3922 = vst [vmem:[#allocation8 + $0x1e] sm:$0x1] %v3909
    %3923 = vst [vmem:[#allocation8 + $0x26] sm:$0x1] %v3892
    %3924 = vst [vmem:[#allocation8 + $0x2e] sm:$0x1] %v3906
    %3925 = vst [vmem:[#allocation8 + $0x36] sm:$0x1] %v3908
    %3926 = vst [vmem:[#allocation8 + $0x3e] sm:$0x1] %v3910
    %v3927 = vld [vmem:[%s0 + $0x7] sm:$0x1]
    %v3928 = vld [vmem:[%s0 + $0xf] sm:$0x1]
    %v3929 = vld [vmem:[%s0 + $0x17] sm:$0x1]
    %v3930 = vld [vmem:[%s0 + $0x1f] sm:$0x1]
    %v3931 = vld [vmem:[%s0 + $0x27] sm:$0x1]
    %v3932 = vld [vmem:[%s0 + $0x2f] sm:$0x1]
    %v3933 = vld [vmem:[%s0 + $0x37] sm:$0x1]
    %v3934 = vld [vmem:[%s0 + $0x3f] sm:$0x1]
    %v3935 = vpack.c.bf16 %v3927, %v3927
    %v3936 = vpack.c.bf16 %v3928, %v3928
    %v3937 = vpack.c.bf16 %v3929, %v3929
    %v3938 = vpack.c.bf16 %v3930, %v3930
    %v3939 = vpack.c.bf16 %v3931, %v3931
    %v3940 = vpack.c.bf16 %v3932, %v3932
    %v3941 = vpack.c.bf16 %v3933, %v3933
    %v3942 = vpack.c.bf16 %v3934, %v3934
    %v3943 = vld [vmem:[%s1] sm:$0xff]
    %v3944 = vld [vmem:[%s1 + $0x8] sm:$0xff]
    %v3945 = vld [vmem:[%s1 + $0x10] sm:$0xff]
    %v3946 = vld [vmem:[%s1 + $0x18] sm:$0xff]
    %v3947 = vld [vmem:[%s1 + $0x20] sm:$0xff]
    %v3948 = vld [vmem:[%s1 + $0x28] sm:$0xff]
    %v3949 = vld [vmem:[%s1 + $0x30] sm:$0xff]
    %v3950 = vld [vmem:[%s1 + $0x38] sm:$0xff]
    %v3951 = vpack.c.bf16 %v3860, %v3860
    %v3952 = vld [vmem:[#allocation5] sm:$0xff]
    %v3953 = vld [vmem:[#allocation5 + $0x8] sm:$0xff]
    %v3954 = vld [vmem:[#allocation5 + $0x10] sm:$0xff]
    %v3955 = vld [vmem:[#allocation5 + $0x18] sm:$0xff]
    %v3956 = vld [vmem:[#allocation5 + $0x20] sm:$0xff]
    %v3957 = vld [vmem:[#allocation5 + $0x28] sm:$0xff]
    %v3958 = vld [vmem:[#allocation5 + $0x30] sm:$0xff]
    %v3959 = vld [vmem:[#allocation5 + $0x38] sm:$0xff]
    %v3960 = vld [vmem:[#allocation5 + $0x40] sm:$0xff]
    %v3961 = vld [vmem:[#allocation5 + $0x48] sm:$0xff]
    %v3962 = vld [vmem:[#allocation5 + $0x50] sm:$0xff]
    %v3963 = vld [vmem:[#allocation5 + $0x58] sm:$0xff]
    %v3964 = vld [vmem:[#allocation5 + $0x60] sm:$0xff]
    %v3965 = vld [vmem:[#allocation5 + $0x68] sm:$0xff]
    %v3966 = vld [vmem:[#allocation5 + $0x70] sm:$0xff]
    %v3967 = vld [vmem:[#allocation5 + $0x78] sm:$0xff]
    %v3968 = vld [vmem:[#allocation5 + $0x80] sm:$0xff]
    %v3969 = vld [vmem:[#allocation5 + $0x88] sm:$0xff]
    %v3970 = vld [vmem:[#allocation5 + $0x90] sm:$0xff]
    %v3971 = vld [vmem:[#allocation5 + $0x98] sm:$0xff]
    %v3972 = vld [vmem:[#allocation5 + $0xa0] sm:$0xff]
    %v3973 = vld [vmem:[#allocation5 + $0xa8] sm:$0xff]
    %v3974 = vld [vmem:[#allocation5 + $0xb0] sm:$0xff]
    %v3975 = vld [vmem:[#allocation5 + $0xb8] sm:$0xff]
    %v3976 = vld [vmem:[#allocation5 + $0xc0] sm:$0xff]
    %v3977 = vld [vmem:[#allocation5 + $0xc8] sm:$0xff]
    %v3978 = vld [vmem:[#allocation5 + $0xd0] sm:$0xff]
    %v3979 = vld [vmem:[#allocation5 + $0xd8] sm:$0xff]
    %v3980 = vld [vmem:[#allocation5 + $0xe0] sm:$0xff]
    %v3981 = vld [vmem:[#allocation5 + $0xe8] sm:$0xff]
    %v3982 = vld [vmem:[#allocation5 + $0xf0] sm:$0xff]
    %v3983 = vld [vmem:[#allocation5 + $0xf8] sm:$0xff]
    %v4016 = vunpack.c.l.b16 %v3952
    %v4017 = vunpack.c.h.b16 %v3952
    %v4018 = vunpack.c.l.b16 %v3953
    %v4019 = vunpack.c.h.b16 %v3953
    %v4020 = vunpack.c.l.b16 %v3954
    %v4021 = vunpack.c.h.b16 %v3954
    %v4022 = vunpack.c.l.b16 %v3955
    %v4023 = vunpack.c.h.b16 %v3955
    %v4024 = vunpack.c.l.b16 %v3956
    %v4025 = vunpack.c.h.b16 %v3956
    %v4026 = vunpack.c.l.b16 %v3957
    %v4027 = vunpack.c.h.b16 %v3957
    %v4028 = vunpack.c.l.b16 %v3958
    %v4029 = vunpack.c.h.b16 %v3958
    %v4030 = vunpack.c.l.b16 %v3959
    %v4031 = vunpack.c.h.b16 %v3959
    %v4032 = vunpack.c.l.b16 %v3960
    %v4033 = vunpack.c.h.b16 %v3960
    %v4034 = vunpack.c.l.b16 %v3961
    %v4035 = vunpack.c.h.b16 %v3961
    %v4036 = vunpack.c.l.b16 %v3962
    %v4037 = vunpack.c.h.b16 %v3962
    %v4038 = vunpack.c.l.b16 %v3963
    %v4039 = vunpack.c.h.b16 %v3963
    %v4040 = vunpack.c.l.b16 %v3964
    %v4041 = vunpack.c.h.b16 %v3964
    %v4042 = vunpack.c.l.b16 %v3965
    %v4043 = vunpack.c.h.b16 %v3965
    %v4044 = vunpack.c.l.b16 %v3966
    %v4045 = vunpack.c.h.b16 %v3966
    %v4046 = vunpack.c.l.b16 %v3967
    %v4047 = vunpack.c.h.b16 %v3967
    %v4048 = vunpack.c.l.b16 %v3968
    %v4049 = vunpack.c.h.b16 %v3968
    %v4050 = vunpack.c.l.b16 %v3969
    %v4051 = vunpack.c.h.b16 %v3969
    %v4052 = vunpack.c.l.b16 %v3970
    %v4053 = vunpack.c.h.b16 %v3970
    %v4054 = vunpack.c.l.b16 %v3971
    %v4055 = vunpack.c.h.b16 %v3971
    %v4056 = vunpack.c.l.b16 %v3972
    %v4057 = vunpack.c.h.b16 %v3972
    %v4058 = vunpack.c.l.b16 %v3973
    %v4059 = vunpack.c.h.b16 %v3973
    %v4060 = vunpack.c.l.b16 %v3974
    %v4061 = vunpack.c.h.b16 %v3974
    %v4062 = vunpack.c.l.b16 %v3975
    %v4063 = vunpack.c.h.b16 %v3975
    %v4064 = vunpack.c.l.b16 %v3976
    %v4065 = vunpack.c.h.b16 %v3976
    %v4066 = vunpack.c.l.b16 %v3977
    %v4067 = vunpack.c.h.b16 %v3977
    %v4068 = vunpack.c.l.b16 %v3978
    %v4069 = vunpack.c.h.b16 %v3978
    %v4070 = vunpack.c.l.b16 %v3979
    %v4071 = vunpack.c.h.b16 %v3979
    %v4072 = vunpack.c.l.b16 %v3980
    %v4073 = vunpack.c.h.b16 %v3980
    %v4074 = vunpack.c.l.b16 %v3981
    %v4075 = vunpack.c.h.b16 %v3981
    %v4076 = vunpack.c.l.b16 %v3982
    %v4077 = vunpack.c.h.b16 %v3982
    %v4078 = vunpack.c.l.b16 %v3983
    %v4079 = vunpack.c.h.b16 %v3983
    %v4080 = vpack.c.b16 %v4020, %v4016
    %v4081 = vpack.c.b16 %v4021, %v4017
    %v4082 = vpack.c.b16 %v4022, %v4018
    %v4083 = vpack.c.b16 %v4023, %v4019
    %v4084 = vpack.c.b16 %v4028, %v4024
    %v4085 = vpack.c.b16 %v4029, %v4025
    %v4086 = vpack.c.b16 %v4030, %v4026
    %v4087 = vpack.c.b16 %v4031, %v4027
    %v4088 = vpack.c.b16 %v4036, %v4032
    %v4089 = vpack.c.b16 %v4037, %v4033
    %v4090 = vpack.c.b16 %v4038, %v4034
    %v4091 = vpack.c.b16 %v4039, %v4035
    %v4092 = vpack.c.b16 %v4044, %v4040
    %v4093 = vpack.c.b16 %v4045, %v4041
    %v4094 = vpack.c.b16 %v4046, %v4042
    %v4095 = vpack.c.b16 %v4047, %v4043
    %v4096 = vpack.c.b16 %v4052, %v4048
    %v4097 = vpack.c.b16 %v4053, %v4049
    %v4098 = vpack.c.b16 %v4054, %v4050
    %v4099 = vpack.c.b16 %v4055, %v4051
    %v4100 = vpack.c.b16 %v4060, %v4056
    %v4101 = vpack.c.b16 %v4061, %v4057
    %v4102 = vpack.c.b16 %v4062, %v4058
    %v4103 = vpack.c.b16 %v4063, %v4059
    %v4104 = vpack.c.b16 %v4068, %v4064
    %v4105 = vpack.c.b16 %v4069, %v4065
    %v4106 = vpack.c.b16 %v4070, %v4066
    %v4107 = vpack.c.b16 %v4071, %v4067
    %v4108 = vpack.c.b16 %v4076, %v4072
    %v4109 = vpack.c.b16 %v4077, %v4073
    %v4110 = vpack.c.b16 %v4078, %v4074
    %v4111 = vpack.c.b16 %v4079, %v4075
    %4144 = vmatprep.subr.bf16.mxu0 %v4081
    %4145 = vmatpush1.bf16.msra.mxu0 %v4080
    %4146 = vmatprep.subr.bf16.mxu0 %v4085
    %4147 = vmatpush1.bf16.msra.mxu0 %v4084
    %4148 = vmatprep.subr.bf16.mxu0 %v4089
    %4149 = vmatpush1.bf16.msra.mxu0 %v4088
    %4150 = vmatprep.subr.bf16.mxu0 %v4093
    %4151 = vmatpush1.bf16.msra.mxu0 %v4092
    %4152 = vmatprep.subr.bf16.mxu0 %v4097
    %4153 = vmatpush1.bf16.msra.mxu0 %v4096
    %4154 = vmatprep.subr.bf16.mxu0 %v4101
    %4155 = vmatpush1.bf16.msra.mxu0 %v4100
    %4156 = vmatprep.subr.bf16.mxu0 %v4105
    %4157 = vmatpush1.bf16.msra.mxu0 %v4104
    %4158 = vmatprep.subr.bf16.mxu0 %v4109
    %4159 = vmatpush1.bf16.msra.mxu0 %v4108
    %4160 = vmatprep.subr.bf16.mxu0 0
    %4161 = vmatpush1.bf16.msra.mxu0 0
    %4162 = vmatprep.subr.bf16.mxu0 0
    %4163 = vmatpush1.bf16.msra.mxu0 0
    %4164 = vmatprep.subr.bf16.mxu0 0
    %4165 = vmatpush1.bf16.msra.mxu0 0
    %4166 = vmatprep.subr.bf16.mxu0 0
    %4167 = vmatpush1.bf16.msra.mxu0 0
    %4168 = vmatprep.subr.bf16.mxu0 0
    %4169 = vmatpush1.bf16.msra.mxu0 0
    %4170 = vmatprep.subr.bf16.mxu0 0
    %4171 = vmatpush1.bf16.msra.mxu0 0
    %4172 = vmatprep.subr.bf16.mxu0 0
    %4173 = vmatpush1.bf16.msra.mxu0 0
    %4174 = vmatprep.subr.bf16.mxu0 0
    %4175 = vmatpush1.bf16.msra.mxu0 0
    %4176 = vmatprep.mubr.bf16.mxu0 0
    %4177 = vmatmul.mubr.bf16.gmra.mrb[0].mxu0 %v3951
    %v4178 = vpop.f32.mrb[0].mxu0
    %v4179 = vadd.f32 0.0, %v4178
    %v4180 = vpop.f32.mrb[0].mxu0
    %v4181 = vadd.f32 0.0, %v4180
    %v4182 = vpop.f32.mrb[0].mxu0
    %v4183 = vpop.f32.mrb[0].mxu0
    %4184 = vdwg.mxu0
    %4185 = vmatprep.subr.bf16.mxu0 %v4083
    %4186 = vmatpush1.bf16.msra.mxu0 %v4082
    %4187 = vmatprep.subr.bf16.mxu0 %v4087
    %4188 = vmatpush1.bf16.msra.mxu0 %v4086
    %4189 = vmatprep.subr.bf16.mxu0 %v4091
    %4190 = vmatpush1.bf16.msra.mxu0 %v4090
    %4191 = vmatprep.subr.bf16.mxu0 %v4095
    %4192 = vmatpush1.bf16.msra.mxu0 %v4094
    %4193 = vmatprep.subr.bf16.mxu0 %v4099
    %4194 = vmatpush1.bf16.msra.mxu0 %v4098
    %4195 = vmatprep.subr.bf16.mxu0 %v4103
    %4196 = vmatpush1.bf16.msra.mxu0 %v4102
    %4197 = vmatprep.subr.bf16.mxu0 %v4107
    %4198 = vmatpush1.bf16.msra.mxu0 %v4106
    %4199 = vmatprep.subr.bf16.mxu0 %v4111
    %4200 = vmatpush1.bf16.msra.mxu0 %v4110
    %4201 = vmatprep.subr.bf16.mxu0 0
    %4202 = vmatpush1.bf16.msra.mxu0 0
    %4203 = vmatprep.subr.bf16.mxu0 0
    %4204 = vmatpush1.bf16.msra.mxu0 0
    %4205 = vmatprep.subr.bf16.mxu0 0
    %4206 = vmatpush1.bf16.msra.mxu0 0
    %4207 = vmatprep.subr.bf16.mxu0 0
    %4208 = vmatpush1.bf16.msra.mxu0 0
    %4209 = vmatprep.subr.bf16.mxu0 0
    %4210 = vmatpush1.bf16.msra.mxu0 0
    %4211 = vmatprep.subr.bf16.mxu0 0
    %4212 = vmatpush1.bf16.msra.mxu0 0
    %4213 = vmatprep.subr.bf16.mxu0 0
    %4214 = vmatpush1.bf16.msra.mxu0 0
    %4215 = vmatprep.subr.bf16.mxu0 0
    %4216 = vmatpush1.bf16.msra.mxu0 0
    %4217 = vmatprep.mubr.bf16.mxu0 0
    %4218 = vmatmul.mubr.bf16.gmra.mrb[0].mxu0 %v3951
    %v4219 = vpop.f32.mrb[0].mxu0
    %v4220 = vadd.f32 0.0, %v4219
    %v4221 = vpop.f32.mrb[0].mxu0
    %v4222 = vadd.f32 0.0, %v4221
    %v4223 = vpop.f32.mrb[0].mxu0
    %v4224 = vpop.f32.mrb[0].mxu0
    %4225 = vdwg.mxu0
    %v4234 = vunpack.c.l.b16 %v3935
    %v4235 = vunpack.c.l.b16 %v3936
    %v4236 = vunpack.c.l.b16 %v3937
    %v4237 = vunpack.c.l.b16 %v3938
    %v4238 = vunpack.c.l.b16 %v3939
    %v4239 = vunpack.c.l.b16 %v3940
    %v4240 = vunpack.c.l.b16 %v3941
    %v4241 = vunpack.c.l.b16 %v3942
    %v4242 = vrot.slane %v4235, 7
    %v4243 = vsel %vm371, %v4242, %v4234
    %v4244 = vrot.slane %v4236, 6
    %v4245 = vsel %vm374, %v4244, %v4243
    %v4246 = vrot.slane %v4237, 5
    %v4247 = vsel %vm377, %v4246, %v4245
    %v4248 = vrot.slane %v4238, 4
    %v4249 = vsel %vm380, %v4248, %v4247
    %v4250 = vrot.slane %v4239, 3
    %v4251 = vsel %vm383, %v4250, %v4249
    %v4252 = vrot.slane %v4240, 2
    %v4253 = vsel %vm386, %v4252, %v4251
    %v4254 = vrot.slane %v4241, 1
    %v4255 = vsel %vm389, %v4254, %v4253
    %v4256 = vpack.c.b16 %v4255, %v4255
    %v4265 = vunpack.c.l.b16 %v3943
    %v4266 = vunpack.c.h.b16 %v3943
    %v4267 = vunpack.c.l.b16 %v3944
    %v4268 = vunpack.c.h.b16 %v3944
    %v4269 = vunpack.c.l.b16 %v3945
    %v4270 = vunpack.c.h.b16 %v3945
    %v4271 = vunpack.c.l.b16 %v3946
    %v4272 = vunpack.c.h.b16 %v3946
    %v4273 = vunpack.c.l.b16 %v3947
    %v4274 = vunpack.c.h.b16 %v3947
    %v4275 = vunpack.c.l.b16 %v3948
    %v4276 = vunpack.c.h.b16 %v3948
    %v4277 = vunpack.c.l.b16 %v3949
    %v4278 = vunpack.c.h.b16 %v3949
    %v4279 = vunpack.c.l.b16 %v3950
    %v4280 = vunpack.c.h.b16 %v3950
    %v4281 = vpack.c.b16 %v4269, %v4265
    %v4282 = vpack.c.b16 %v4270, %v4266
    %v4283 = vpack.c.b16 %v4271, %v4267
    %v4284 = vpack.c.b16 %v4272, %v4268
    %v4285 = vpack.c.b16 %v4277, %v4273
    %v4286 = vpack.c.b16 %v4278, %v4274
    %v4287 = vpack.c.b16 %v4279, %v4275
    %v4288 = vpack.c.b16 %v4280, %v4276
    %v4298 = vsel %vm432, %v4256, 0
    %4300 = vmatprep.subr.bf16.mxu0 %v4282
    %4301 = vmatpush1.bf16.msra.mxu0 %v4281
    %4302 = vmatprep.subr.bf16.mxu0 %v4286
    %4303 = vmatpush1.bf16.msra.mxu0 %v4285
    %4304 = vmatprep.subr.bf16.mxu0 0
    %4305 = vmatpush1.bf16.msra.mxu0 0
    %4306 = vmatprep.subr.bf16.mxu0 0
    %4307 = vmatpush1.bf16.msra.mxu0 0
    %4308 = vmatprep.subr.bf16.mxu0 0
    %4309 = vmatpush1.bf16.msra.mxu0 0
    %4310 = vmatprep.subr.bf16.mxu0 0
    %4311 = vmatpush1.bf16.msra.mxu0 0
    %4312 = vmatprep.subr.bf16.mxu0 0
    %4313 = vmatpush1.bf16.msra.mxu0 0
    %4314 = vmatprep.subr.bf16.mxu0 0
    %4315 = vmatpush1.bf16.msra.mxu0 0
    %4316 = vmatprep.subr.bf16.mxu0 0
    %4317 = vmatpush1.bf16.msra.mxu0 0
    %4318 = vmatprep.subr.bf16.mxu0 0
    %4319 = vmatpush1.bf16.msra.mxu0 0
    %4320 = vmatprep.subr.bf16.mxu0 0
    %4321 = vmatpush1.bf16.msra.mxu0 0
    %4322 = vmatprep.subr.bf16.mxu0 0
    %4323 = vmatpush1.bf16.msra.mxu0 0
    %4324 = vmatprep.subr.bf16.mxu0 0
    %4325 = vmatpush1.bf16.msra.mxu0 0
    %4326 = vmatprep.subr.bf16.mxu0 0
    %4327 = vmatpush1.bf16.msra.mxu0 0
    %4328 = vmatprep.subr.bf16.mxu0 0
    %4329 = vmatpush1.bf16.msra.mxu0 0
    %4330 = vmatprep.subr.bf16.mxu0 0
    %4331 = vmatpush1.bf16.msra.mxu0 0
    %4332 = vmatprep.mubr.bf16.mxu0 0
    %4333 = vmatmul.mubr.bf16.gmra.mrb[0].mxu0 %v4298
    %v4334 = vpop.f32.mrb[0].mxu0
    %v4335 = vadd.f32 %v4179, %v4334
    %v4336 = vpop.f32.mrb[0].mxu0
    %v4337 = vadd.f32 %v4181, %v4336
    %v4338 = vpop.f32.mrb[0].mxu0
    %v4339 = vpop.f32.mrb[0].mxu0
    %4340 = vdwg.mxu0
    %4341 = vmatprep.subr.bf16.mxu0 %v4284
    %4342 = vmatpush1.bf16.msra.mxu0 %v4283
    %4343 = vmatprep.subr.bf16.mxu0 %v4288
    %4344 = vmatpush1.bf16.msra.mxu0 %v4287
    %4345 = vmatprep.subr.bf16.mxu0 0
    %4346 = vmatpush1.bf16.msra.mxu0 0
    %4347 = vmatprep.subr.bf16.mxu0 0
    %4348 = vmatpush1.bf16.msra.mxu0 0
    %4349 = vmatprep.subr.bf16.mxu0 0
    %4350 = vmatpush1.bf16.msra.mxu0 0
    %4351 = vmatprep.subr.bf16.mxu0 0
    %4352 = vmatpush1.bf16.msra.mxu0 0
    %4353 = vmatprep.subr.bf16.mxu0 0
    %4354 = vmatpush1.bf16.msra.mxu0 0
    %4355 = vmatprep.subr.bf16.mxu0 0
    %4356 = vmatpush1.bf16.msra.mxu0 0
    %4357 = vmatprep.subr.bf16.mxu0 0
    %4358 = vmatpush1.bf16.msra.mxu0 0
    %4359 = vmatprep.subr.bf16.mxu0 0
    %4360 = vmatpush1.bf16.msra.mxu0 0
    %4361 = vmatprep.subr.bf16.mxu0 0
    %4362 = vmatpush1.bf16.msra.mxu0 0
    %4363 = vmatprep.subr.bf16.mxu0 0
    %4364 = vmatpush1.bf16.msra.mxu0 0
    %4365 = vmatprep.subr.bf16.mxu0 0
    %4366 = vmatpush1.bf16.msra.mxu0 0
    %4367 = vmatprep.subr.bf16.mxu0 0
    %4368 = vmatpush1.bf16.msra.mxu0 0
    %4369 = vmatprep.subr.bf16.mxu0 0
    %4370 = vmatpush1.bf16.msra.mxu0 0
    %4371 = vmatprep.subr.bf16.mxu0 0
    %4372 = vmatpush1.bf16.msra.mxu0 0
    %4373 = vmatprep.mubr.bf16.mxu0 0
    %4374 = vmatmul.mubr.bf16.gmra.mrb[0].mxu0 %v4298
    %v4375 = vpop.f32.mrb[0].mxu0
    %v4376 = vadd.f32 %v4220, %v4375
    %v4377 = vpop.f32.mrb[0].mxu0
    %v4378 = vadd.f32 %v4222, %v4377
    %v4379 = vpop.f32.mrb[0].mxu0
    %v4380 = vpop.f32.mrb[0].mxu0
    %4381 = vdwg.mxu0
    %v4382 = vadd.f32 %v4335, %v522
    %v4383 = vadd.f32 %v4337, %v526
    %v4384 = vadd.f32 %v4376, %v530
    %v4385 = vadd.f32 %v4378, %v534
    %v4386 = vxor.u32 %v4382, 2147483648
    %v4387 = vmul.f32 %v4386, 1.442695
    %v4388 = vpow.pop %v4387
    %v4389 = vadd.f32 %v4388, 1.0
    %v4390 = vrcp.pop %v4389
    %v4391 = vmul.f32 1.0, %v4390
    %v4392 = vxor.u32 %v4383, 2147483648
    %v4393 = vmul.f32 %v4392, 1.442695
    %v4394 = vpow.pop %v4393
    %v4395 = vadd.f32 %v4394, 1.0
    %v4396 = vrcp.pop %v4395
    %v4397 = vmul.f32 1.0, %v4396
    %v4398 = vtanh.pop %v4384
    %v4399 = vxor.u32 %v4385, 2147483648
    %v4400 = vmul.f32 %v4399, 1.442695
    %v4401 = vpow.pop %v4400
    %v4402 = vadd.f32 %v4401, 1.0
    %v4403 = vrcp.pop %v4402
    %v4404 = vmul.f32 1.0, %v4403
    %v4405 = vmul.f32 %v4397, %v3858
    %v4406 = vmul.f32 %v4391, %v4398
    %v4407 = vadd.f32 %v4405, %v4406
    %v4408 = vtanh.pop %v4407
    %v4409 = vmul.f32 %v4404, %v4408
    %v4411 = vcombine.high %v4409, %v4409
    %v4413 = vunpack.c.l.s4 1966171168
    %v4414 = vunpack.c.0.s8 %v4413
    %v4415 = vlaneseq
    %v4416 = vshrl.u32 %v4415, 7
    %v4417 = vsub.s32 %v4414, %v4416
    %v4418 = vrot.slane %v4409, %v4417
    %v4420 = vunpack.c.l.s4 1966171168
    %v4421 = vunpack.c.0.s8 %v4420
    %v4422 = vlaneseq
    %v4423 = vshrl.u32 %v4422, 7
    %v4424 = vsub.s32 %v4421, %v4423
    %v4425 = vrot.slane %v4411, %v4424
    %v4426 = vcombine.high %v4418, %v4418
    %v4427 = vcombine.high %v4425, %v4425
    %v4429 = vunpack.c.l.s4 1966171168
    %v4430 = vunpack.c.0.s8 %v4429
    %v4431 = vlaneseq
    %v4432 = vshrl.u32 %v4431, 7
    %v4433 = vsub.s32 %v4430, %v4432
    %v4434 = vrot.slane %v4418, %v4433
    %v4436 = vunpack.c.l.s4 1966171168
    %v4437 = vunpack.c.0.s8 %v4436
    %v4438 = vlaneseq
    %v4439 = vshrl.u32 %v4438, 7
    %v4440 = vsub.s32 %v4437, %v4439
    %v4441 = vrot.slane %v4425, %v4440
    %v4443 = vunpack.c.l.s4 1966171168
    %v4444 = vunpack.c.0.s8 %v4443
    %v4445 = vlaneseq
    %v4446 = vshrl.u32 %v4445, 7
    %v4447 = vsub.s32 %v4444, %v4446
    %v4448 = vrot.slane %v4426, %v4447
    %v4450 = vunpack.c.l.s4 1966171168
    %v4451 = vunpack.c.0.s8 %v4450
    %v4452 = vlaneseq
    %v4453 = vshrl.u32 %v4452, 7
    %v4454 = vsub.s32 %v4451, %v4453
    %v4455 = vrot.slane %v4427, %v4454
    %v4456 = vcombine.high %v4434, %v4434
    %v4457 = vcombine.high %v4441, %v4441
    %v4458 = vcombine.high %v4448, %v4448
    %v4459 = vcombine.high %v4455, %v4455
    %4468 = vst [vmem:[#allocation8 + $0x7] sm:$0x1] %v4434
    %4469 = vst [vmem:[#allocation8 + $0xf] sm:$0x1] %v4448
    %4470 = vst [vmem:[#allocation8 + $0x17] sm:$0x1] %v4456
    %4471 = vst [vmem:[#allocation8 + $0x1f] sm:$0x1] %v4458
    %4472 = vst [vmem:[#allocation8 + $0x27] sm:$0x1] %v4441
    %4473 = vst [vmem:[#allocation8 + $0x2f] sm:$0x1] %v4455
    %4474 = vst [vmem:[#allocation8 + $0x37] sm:$0x1] %v4457
    %4475 = vst [vmem:[#allocation8 + $0x3f] sm:$0x1] %v4459
    %4476 = vst [vmem:[#allocation2] sm:$0xff] %v4409
    %4477 = vst [vmem:[#allocation3] sm:$0xff] %v4407
    // Predicated region
    $region34: #{tpu_custom_call.1} parent=1 // pred_check
      %p4478 = pneg %p46
    $region35: #{tpu_custom_call.1} parent=1 // pred_check_branch
      %4480 = sbr.rel (%p4478) target = $region37
    $region36: #{tpu_custom_call.1} parent=1 // pred_region
      %4481 = vst [vmem:[#allocation9] sm:$0xff] %v4409
      %4482 = vst [vmem:[#allocation11] sm:$0xff] %v4407
      %v4483 = vld [vmem:[%s4] sm:$0xff]
      %v4484 = vld [vmem:[%s4 + $0x8] sm:$0xff]
      %v4485 = vld [vmem:[%s4 + $0x10] sm:$0xff]
      %v4486 = vld [vmem:[%s4 + $0x18] sm:$0xff]
      %v4487 = vld [vmem:[%s4 + $0x20] sm:$0xff]
      %v4488 = vld [vmem:[%s4 + $0x28] sm:$0xff]
      %v4489 = vld [vmem:[%s4 + $0x30] sm:$0xff]
      %v4490 = vld [vmem:[%s4 + $0x38] sm:$0xff]
      %v4491 = vld [vmem:[%s4 + $0x40] sm:$0xff]
      %v4492 = vld [vmem:[%s4 + $0x48] sm:$0xff]
      %v4493 = vld [vmem:[%s4 + $0x50] sm:$0xff]
      %v4494 = vld [vmem:[%s4 + $0x58] sm:$0xff]
      %v4495 = vld [vmem:[%s4 + $0x60] sm:$0xff]
      %v4496 = vld [vmem:[%s4 + $0x68] sm:$0xff]
      %v4497 = vld [vmem:[%s4 + $0x70] sm:$0xff]
      %v4498 = vld [vmem:[%s4 + $0x78] sm:$0xff]
      %v4499 = vld [vmem:[#allocation4] sm:$0x1]
      %v4501 = vlaneseq
      %v4502 = vshrl.u32 %v4501, 7
      %v4503 = vsub.s32 0, %v4502
      %v4504 = vrot.slane %v4499, %v4503
      %4506 = vmatprep.subr.mxu0 0.0
      %4507 = vmatpush1.msra.mxu0 %v4483
      %4508 = vmatprep.subr.mxu0 0.0
      %4509 = vmatpush1.msra.mxu0 %v4484
      %4510 = vmatprep.subr.mxu0 0.0
      %4511 = vmatpush1.msra.mxu0 %v4485
      %4512 = vmatprep.subr.mxu0 0.0
      %4513 = vmatpush1.msra.mxu0 %v4486
      %4514 = vmatprep.subr.mxu0 0.0
      %4515 = vmatpush1.msra.mxu0 %v4487
      %4516 = vmatprep.subr.mxu0 0.0
      %4517 = vmatpush1.msra.mxu0 %v4488
      %4518 = vmatprep.subr.mxu0 0.0
      %4519 = vmatpush1.msra.mxu0 %v4489
      %4520 = vmatprep.subr.mxu0 0.0
      %4521 = vmatpush1.msra.mxu0 %v4490
      %4522 = vmatprep.subr.mxu0 0.0
      %4523 = vmatpush1.msra.mxu0 %v4491
      %4524 = vmatprep.subr.mxu0 0.0
      %4525 = vmatpush1.msra.mxu0 %v4492
      %4526 = vmatprep.subr.mxu0 0.0
      %4527 = vmatpush1.msra.mxu0 %v4493
      %4528 = vmatprep.subr.mxu0 0.0
      %4529 = vmatpush1.msra.mxu0 %v4494
      %4530 = vmatprep.subr.mxu0 0.0
      %4531 = vmatpush1.msra.mxu0 %v4495
      %4532 = vmatprep.subr.mxu0 0.0
      %4533 = vmatpush1.msra.mxu0 %v4496
      %4534 = vmatprep.subr.mxu0 0.0
      %4535 = vmatpush1.msra.mxu0 %v4497
      %4536 = vmatprep.subr.mxu0 0.0
      %4537 = vmatpush1.msra.mxu0 %v4498
      %4538 = vmatprep.subr.mxu0 0.0
      %4539 = vmatpush1.msra.mxu0 0.0
      %4540 = vmatprep.subr.mxu0 0.0
      %4541 = vmatpush1.msra.mxu0 0.0
      %4542 = vmatprep.subr.mxu0 0.0
      %4543 = vmatpush1.msra.mxu0 0.0
      %4544 = vmatprep.subr.mxu0 0.0
      %4545 = vmatpush1.msra.mxu0 0.0
      %4546 = vmatprep.subr.mxu0 0.0
      %4547 = vmatpush1.msra.mxu0 0.0
      %4548 = vmatprep.subr.mxu0 0.0
      %4549 = vmatpush1.msra.mxu0 0.0
      %4550 = vmatprep.subr.mxu0 0.0
      %4551 = vmatpush1.msra.mxu0 0.0
      %4552 = vmatprep.subr.mxu0 0.0
      %4553 = vmatpush1.msra.mxu0 0.0
      %4554 = vmatprep.subr.mxu0 0.0
      %4555 = vmatpush1.msra.mxu0 0.0
      %4556 = vmatprep.subr.mxu0 0.0
      %4557 = vmatpush1.msra.mxu0 0.0
      %4558 = vmatprep.subr.mxu0 0.0
      %4559 = vmatpush1.msra.mxu0 0.0
      %4560 = vmatprep.subr.mxu0 0.0
      %4561 = vmatpush1.msra.mxu0 0.0
      %4562 = vmatprep.subr.mxu0 0.0
      %4563 = vmatpush1.msra.mxu0 0.0
      %4564 = vmatprep.subr.mxu0 0.0
      %4565 = vmatpush1.msra.mxu0 0.0
      %4566 = vmatprep.subr.mxu0 0.0
      %4567 = vmatpush1.msra.mxu0 0.0
      %4568 = vmatprep.subr.mxu0 0.0
      %4569 = vmatpush1.msra.mxu0 0.0
      %4570 = vmatprep.mubr.f32.mxu0 0.0
      %4571 = vmatmul.mubr.f32.gmra.mrb[0].mxu0 %v4409
      %v4572 = vpop.f32.mrb[0].mxu0
      %v4573 = vadd.f32 %v4504, %v4572
      %v4574 = vpop.f32.mrb[0].mxu0
      %4575 = vdwg.mxu0
      %v4576 = vxor.u32 %v4573, 2147483648
      %v4577 = vmul.f32 %v4576, 1.442695
      %v4578 = vpow.pop %v4577
      %v4579 = vadd.f32 %v4578, 1.0
      %v4580 = vrcp.pop %v4579
      %v4581 = vmul.f32 1.0, %v4580
      %vm4582 = vcmask 7168
      %4583 = vst.msk [vmem:[%s9] sm:$0xff] %vm4582, %v4581
    $region37: #{tpu_custom_call.1} parent=1 // pred_fallthru
      _
    // Predicated region
    $region38: #{tpu_custom_call.1} parent=1 // pred_check
      _
    $region39: #{tpu_custom_call.1} parent=1 // pred_check_branch
      %4585 = sbr.rel (0) target = $region41
    $region40: #{tpu_custom_call.1} parent=1 // pred_region
      %s4587 = ssub.s32 1024, 1024
      %4588 = vsyncadd [#allocation7], %s4587
      %s4589 = sshll.u32 [#allocation8], 4
      %s4590 = int_to_ptr.vmem [resolvable:$true] %s4589
      %4595 = dma.vmem_to_hbm [thread:$0]  %s4590, 1024, %s6, [#allocation7], 128, 128, 8
    $region41: #{tpu_custom_call.1} parent=1 // pred_fallthru
      _
    // Predicated region
    $region42: #{tpu_custom_call.1} parent=1 // pred_check
      _
    $region43: #{tpu_custom_call.1} parent=1 // pred_check_branch
      %4597 = sbr.rel (0) target = $region45
    $region44: #{tpu_custom_call.1} parent=1 // pred_region
      %s4599 = ssub.s32 128, 128
      %4600 = vsyncadd [#allocation10], %s4599
      %s4602 = sshll.u32 [#allocation9], 4
      %s4603 = int_to_ptr.vmem [resolvable:$true] %s4602
      %4605 = dma.vmem_to_hbm [thread:$0]  %s4603, 128, %s7, [#allocation10]
    $region45: #{tpu_custom_call.1} parent=1 // pred_fallthru
      _
    // Predicated region
    $region46: #{tpu_custom_call.1} parent=1 // pred_check
      _
    $region47: #{tpu_custom_call.1} parent=1 // pred_check_branch
      %4607 = sbr.rel (0) target = $region49
    $region48: #{tpu_custom_call.1} parent=1 // pred_region
      %s4609 = ssub.s32 128, 128
      %4610 = vsyncadd [#allocation10], %s4609
      %s4612 = sshll.u32 [#allocation11], 4
      %s4613 = int_to_ptr.vmem [resolvable:$true] %s4612
      %4615 = dma.vmem_to_hbm [thread:$0]  %s4613, 128, %s8, [#allocation10]
    $region49: #{tpu_custom_call.1} parent=1 // pred_fallthru
      _
    // Predicated region
    $region50: #{tpu_custom_call.1} parent=1 // pred_check
      _
    $region51: #{tpu_custom_call.1} parent=1 // pred_check_branch
      %4617 = sbr.rel (0) target = $region53
    $region52: #{tpu_custom_call.1} parent=1 // pred_region
      _
    $region53: #{tpu_custom_call.1} parent=1 // pred_fallthru
      _
    // Predicated region
    $region54: #{tpu_custom_call.1} parent=1 // pred_check
      _
    $region55: #{tpu_custom_call.1} parent=1 // pred_check_branch
      %4619 = sbr.rel (0) target = $region57
    $region56: #{tpu_custom_call.1} parent=1 // pred_region
      %4620 = dma.done [#allocation7], 1024
    $region57: #{tpu_custom_call.1} parent=1 // pred_fallthru
      _
    // Predicated region
    $region58: #{tpu_custom_call.1} parent=1 // pred_check
      _
    $region59: #{tpu_custom_call.1} parent=1 // pred_check_branch
      %4622 = sbr.rel (0) target = $region61
    $region60: #{tpu_custom_call.1} parent=1 // pred_region
      %4623 = dma.done [#allocation10], 128
    $region61: #{tpu_custom_call.1} parent=1 // pred_fallthru
      _
    // Predicated region
    $region62: #{tpu_custom_call.1} parent=1 // pred_check
      _
    $region63: #{tpu_custom_call.1} parent=1 // pred_check_branch
      %4625 = sbr.rel (0) target = $region65
    $region64: #{tpu_custom_call.1} parent=1 // pred_region
      %4626 = dma.done [#allocation10], 128
    $region65: #{tpu_custom_call.1} parent=1 // pred_fallthru
      _
    // Predicated region
    $region66: #{tpu_custom_call.1} parent=1 // pred_check
      _
    $region67: #{tpu_custom_call.1} parent=1 // pred_check_branch
      %4628 = sbr.rel (0) target = $region69
    $region68: #{tpu_custom_call.1} parent=1 // pred_region
      _
    $region69: #{tpu_custom_call.1} parent=1 // pred_fallthru
      _
    %4629 = vsyncpa [#allocation6], 1
    %4630 = vsyncpa [#allocation7], 1
    %4631 = vsyncpa [#allocation10], 1

</llo_original>
